<compile_context>
chip_gen: v7x
topology: tpu7x:2x2x1
jax: 0.10.0
libtpu: 0.0.40
codegen_flags: <defaults>
</compile_context>

<pallas_src>
import functools
import numpy as np

import jax
import jax.numpy as jnp
from jax import lax
from jax.experimental import pallas as pl
from jax.experimental.pallas import tpu as pltpu


# ----------------------------------------------------------------------------
# Per-generation VMEM budgeting.
# ----------------------------------------------------------------------------
@functools.lru_cache(maxsize=1)
def _vmem_limit_bytes():
    """Scoped VMEM limit: ~3/4 of per-core capacity, capped (v7x 64 MiB -> 48 MiB,
    v5e/v6e 128 MiB -> 96 MiB); conservative fallback if the query is unavailable."""
    cap = 64 * 1024 * 1024
    try:
        info = pltpu.get_tpu_info()
        c = getattr(info, "vmem_capacity_bytes", None)
        if c:
            cap = int(c)
    except Exception:
        pass
    return min((cap * 3) // 4, 96 * 1024 * 1024)


def _round_up(x, m):
    return ((x + m - 1) // m) * m


def _tile_and_pad(p, cap_lanes):
    """Pick a lane tile (multiple of 128, <= cap) and a padded extent that is an
    exact multiple of the tile (avoids the old 'no divisor -> 128-lane tile' trap
    while keeping padding overhead <= one tile)."""
    cap = max(128, (cap_lanes // 128) * 128)
    p128 = _round_up(p, 128)
    n = -(-p128 // cap)                       # number of tiles
    pt = _round_up(-(-p128 // n), 128)        # per-tile lanes (<= cap)
    return pt, n * pt


def _wave_tile(p, cin, cout):
    """Tile for the wave-mul weight stream: ~1/4 of the scoped limit per weight
    buffer (double-buffered weights use half), capped at 4096 lanes."""
    budget = _vmem_limit_bytes() // 4
    cap_lanes = min(4096, max(128, budget // (cin * cout * 2)))   # bf16 weights
    return _tile_and_pad(p, cap_lanes)


def _pick_chunk(pt, cout):
    """Inner lane chunk so the live (cout, chunk) f32 accumulator stays <= 64 KiB
    (16 vregs)."""
    chunk = max(128, min(pt, (65536 // (cout * 4)) // 128 * 128))
    while pt % chunk:
        chunk -= 128
    return chunk


# ----------------------------------------------------------------------------
# db4 wavelet filters (pywt convention), symmetric padding mode,
# matching pytorch_wavelets DWTForward / DWTInverse.
# ----------------------------------------------------------------------------
_DB4_REC_LO = np.array([
    0.23037781330885523, 0.7148465705525415, 0.6308807679295904,
    -0.02798376941698385, -0.18703481171888114, 0.030841381835986965,
    0.032883011666982945, -0.010597401784997278], dtype=np.float64)
_DB4_DEC_LO = _DB4_REC_LO[::-1].copy()
_DB4_REC_HI = np.array([(-1.0) ** k for k in range(8)]) * _DB4_DEC_LO
_L = 8  # filter length

_AF_LO = _DB4_REC_LO
_AF_HI = _DB4_REC_HI
_SF_LO = _DB4_REC_LO
_SF_HI = _DB4_REC_HI


# TODO(synk): move the db4 DWT/IDWT filter banks themselves into Pallas (taps via
# pltpu.roll along lanes, strided slices along sublanes); they remain plain-JAX
# glue here and are the largest remaining HBM consumer at ERA5 resolution.
def _dwt1d_last(x, flo, fhi):
    """Single-level analysis along the last axis (symmetric pad, stride-2 correlation)."""
    n = x.shape[-1]
    outsize = (n + _L - 1) // 2
    p = 2 * (outsize - 1) - n + _L
    pad = [(0, 0)] * (x.ndim - 1) + [(p // 2, (p + 1) // 2)]
    xp = jnp.pad(x, pad, mode='symmetric')
    lo = jnp.zeros(x.shape[:-1] + (outsize,), x.dtype)
    hi = jnp.zeros_like(lo)
    for t in range(_L):
        sl = xp[..., t: t + 2 * (outsize - 1) + 1: 2]
        lo = lo + sl * float(flo[t])
        hi = hi + sl * float(fhi[t])
    return lo, hi


def _dwt1d_axis(x, flo, fhi, axis):
    xs = jnp.swapaxes(x, axis, -1)
    lo, hi = _dwt1d_last(xs, flo, fhi)
    return jnp.swapaxes(lo, axis, -1), jnp.swapaxes(hi, axis, -1)


def dwt2d(x, J):
    """x: (B, C, H, W) -> (ll, [highs_level1, ..., highs_levelJ]); highs: (B,C,3,h,w)."""
    ll = x
    highs = []
    for _ in range(J):
        lo_w, hi_w = _dwt1d_axis(ll, _AF_LO, _AF_HI, -1)
        ll_n, lh = _dwt1d_axis(lo_w, _AF_LO, _AF_HI, -2)
        hl, hh = _dwt1d_axis(hi_w, _AF_LO, _AF_HI, -2)
        highs.append(jnp.stack([lh, hl, hh], axis=2))
        ll = ll_n
    return ll, highs


def _idwt1d_last(lo, hi, glo, ghi):
    """Single-level synthesis along last axis (== conv_transpose stride 2, padding L-2)."""
    n = lo.shape[-1]
    up_shape = lo.shape[:-1] + (2 * n - 1,)
    ulo = jnp.zeros(up_shape, lo.dtype).at[..., ::2].set(lo)
    uhi = jnp.zeros(up_shape, hi.dtype).at[..., ::2].set(hi)
    full = 2 * n + _L - 2
    y = jnp.zeros(lo.shape[:-1] + (full,), lo.dtype)
    for k in range(_L):
        y = y.at[..., k: k + 2 * n - 1].add(ulo * float(glo[k]) + uhi * float(ghi[k]))
    return y[..., _L - 2: 2 * n]


def _idwt1d_axis(lo, hi, glo, ghi, axis):
    los = jnp.swapaxes(lo, axis, -1)
    his = jnp.swapaxes(hi, axis, -1)
    y = _idwt1d_last(los, his, glo, ghi)
    return jnp.swapaxes(y, axis, -1)


def idwt2d(ll, highs):
    """Inverse of dwt2d, matching pytorch_wavelets DWTInverse ordering."""
    for h in highs[::-1]:
        if ll.shape[-2] > h.shape[-2]:
            ll = ll[..., :-1, :]
        if ll.shape[-1] > h.shape[-1]:
            ll = ll[..., :-1]
        lh, hl, hh = h[:, :, 0], h[:, :, 1], h[:, :, 2]
        lo = _idwt1d_axis(ll, lh, _SF_LO, _SF_HI, -2)
        hi = _idwt1d_axis(hl, hh, _SF_LO, _SF_HI, -2)
        ll = _idwt1d_axis(lo, hi, _SF_LO, _SF_HI, -1)
    return ll


# ----------------------------------------------------------------------------
# Elementwise helpers used inside Pallas kernels.
# ----------------------------------------------------------------------------
def _gelu(x):
    # tanh-approximation GELU (torch F.gelu(approximate='tanh')): 1 EUP tanh plus
    # a handful of VALU ops, vs ~20 VALU ops + exp for the exact-erf polynomial.
    c = 0.7978845608028654  # sqrt(2/pi)
    return 0.5 * x * (1.0 + jnp.tanh(c * (x + 0.044715 * x * x * x)))


# ----------------------------------------------------------------------------
# Pallas kernels.
# ----------------------------------------------------------------------------
def _lift_kernel(x_ref, g_ref, w_ref, b_ref, o_ref):
    # fc0 lift fused with grid features, as 3 broadcast FMAs on the VPU
    # (a K=3 matmul wastes the MXU's K dimension).
    a = x_ref[0]                                   # (1, Pt)  raw field
    g = g_ref[...]                                 # (2, Pt)  gridx / gridy
    w = w_ref[...]                                 # (width, 3)
    o_ref[0] = (w[:, 0:1] * a + w[:, 1:2] * g[0:1, :] + w[:, 2:3] * g[1:2, :]
                + b_ref[...])


def lift_pallas(x0, w, b, *, max_lanes=8192):
    """x0: (B, sx, sy) raw field; w: (3, width); b: (width,) -> (B, width, sx, sy)."""
    bsz, sx, sy = x0.shape
    width = w.shape[1]
    p = sx * sy
    pt, p_pad = _tile_and_pad(p, max_lanes)
    xf = x0.reshape(bsz, 1, p)
    if p_pad != p:
        xf = jnp.pad(xf, ((0, 0), (0, 0), (0, p_pad - p)))
    # Grid features depend only on static shapes -> constant-folded at compile time.
    gx = jnp.linspace(0.0, 360.0, sx, dtype=jnp.float32)
    gy = jnp.linspace(90.0, -90.0, sy, dtype=jnp.float32)
    gxf = jnp.broadcast_to(gx[:, None], (sx, sy)).reshape(-1)
    gyf = jnp.broadcast_to(gy[None, :], (sx, sy)).reshape(-1)
    g = jnp.stack([gxf, gyf], axis=0)
    if p_pad != p:
        g = jnp.pad(g, ((0, 0), (0, p_pad - p)))
    out = pl.pallas_call(
        _lift_kernel,
        out_shape=jax.ShapeDtypeStruct((bsz, width, p_pad), jnp.float32),
        grid=(p_pad // pt, bsz),
        in_specs=[pl.BlockSpec((1, 1, pt), lambda pi, bi: (bi, 0, pi)),
                  pl.BlockSpec((2, pt), lambda pi, bi: (0, pi)),
                  pl.BlockSpec((width, 3), lambda pi, bi: (0, 0)),
                  pl.BlockSpec((width, 1), lambda pi, bi: (0, 0))],
        out_specs=pl.BlockSpec((1, width, pt), lambda pi, bi: (bi, 0, pi)),
        compiler_params=pltpu.CompilerParams(
            dimension_semantics=("parallel", "parallel"),
            vmem_limit_bytes=_vmem_limit_bytes()),
    )(xf, g, w.T, b.reshape(width, 1))
    return out[:, :, :p].reshape(bsz, width, sx, sy)


def _head_kernel(x_ref, w1_ref, b1_ref, w2_ref, b2_ref, o_ref):
    # fc1 (bf16 MXU, f32 acc) + tanh-GELU (f32) + fc2 as a sublane reduction.
    x = x_ref[0].astype(jnp.bfloat16)                       # (width, Pt)
    w1 = w1_ref[...].astype(jnp.bfloat16)                   # (128, width)
    h = jnp.dot(w1, x, preferred_element_type=jnp.float32) + b1_ref[...]
    h = _gelu(h)
    o_ref[0] = jnp.sum(h * w2_ref[...], axis=0, keepdims=True) + b2_ref[...]


def head_pallas(v, w1, b1, w2, b2, *, max_lanes=2048):
    """v: (B, width, H, W); fc1 (width,128)+GELU, fc2 (128,1) -> (B, H, W, 1)."""
    bsz, width, hh, ww = v.shape
    hdim = w1.shape[1]
    p = hh * ww
    pt, p_pad = _tile_and_pad(p, max_lanes)
    vf = v.reshape(bsz, width, p)
    if p_pad != p:
        vf = jnp.pad(vf, ((0, 0), (0, 0), (0, p_pad - p)))
    out = pl.pallas_call(
        _head_kernel,
        out_shape=jax.ShapeDtypeStruct((bsz, 1, p_pad), jnp.float32),
        grid=(p_pad // pt, bsz),
        in_specs=[pl.BlockSpec((1, width, pt), lambda pi, bi: (bi, 0, pi)),
                  pl.BlockSpec((hdim, width), lambda pi, bi: (0, 0)),
                  pl.BlockSpec((hdim, 1), lambda pi, bi: (0, 0)),
                  pl.BlockSpec((hdim, 1), lambda pi, bi: (0, 0)),
                  pl.BlockSpec((1, 1), lambda pi, bi: (0, 0))],
        out_specs=pl.BlockSpec((1, 1, pt), lambda pi, bi: (bi, 0, pi)),
        compiler_params=pltpu.CompilerParams(
            dimension_semantics=("parallel", "parallel"),
            vmem_limit_bytes=_vmem_limit_bytes()),
    )(vf, w1.T, b1.reshape(hdim, 1), w2, b2.reshape(1, 1))
    return out[:, 0, :p].reshape(bsz, hh, ww, 1)


def _wave_mul_kernel(x_ref, w_ref, o_ref, *, cin, chunk):
    # out[o, p] = sum_i x[i, p] * w[i, o, p]   (einsum 'bixy,ioxy->boxy' per batch,
    # per subband).  Inner loop over lane chunks keeps the live (cout, chunk) f32
    # accumulator <= ~16 vregs; fori_loop over Cin bounds the live weight slices.
    cout = o_ref.shape[2]
    pt = o_ref.shape[3]

    @pl.loop(0, pt // chunk)
    def _(c):
        off = pl.multiple_of(c * chunk, chunk)

        def body(i, acc):
            xi = x_ref[0, 0, pl.ds(i, 1), pl.ds(off, chunk)]              # (1, chunk)
            wi = w_ref[0, pl.ds(i, 1), :, pl.ds(off, chunk)]              # (1, cout, chunk) bf16
            return acc + xi * wi[0].astype(jnp.float32)

        acc = lax.fori_loop(0, cin, body, jnp.zeros((cout, chunk), jnp.float32))
        o_ref[0, 0, :, pl.ds(off, chunk)] = acc


def wave_mul4_pallas(x4, w4):
    """x4: (4, B, Cin, h, w) f32; w4: (4, Cin, Cout, P_pad) pre-packed bf16
    -> (4, B, Cout, h, w) f32.  One fused kernel for the LL/LH/HL/HH mixes."""
    s, b, cin, hh, ww = x4.shape
    cout = w4.shape[2]
    p = hh * ww
    pt, p_pad = _wave_tile(p, cin, cout)
    assert p_pad == w4.shape[3], (p_pad, w4.shape)
    xf = x4.reshape(s, b, cin, p)
    if p_pad != p:
        xf = jnp.pad(xf, ((0, 0), (0, 0), (0, 0), (0, p_pad - p)))
    chunk = _pick_chunk(pt, cout)
    out = pl.pallas_call(
        functools.partial(_wave_mul_kernel, cin=cin, chunk=chunk),
        out_shape=jax.ShapeDtypeStruct((s, b, cout, p_pad), jnp.float32),
        grid=(s, p_pad // pt, b),   # batch innermost: weight block stays resident
        in_specs=[pl.BlockSpec((1, 1, cin, pt), lambda si, pi, bi: (si, bi, 0, pi)),
                  pl.BlockSpec((1, cin, cout, pt), lambda si, pi, bi: (si, 0, 0, pi))],
        out_specs=pl.BlockSpec((1, 1, cout, pt), lambda si, pi, bi: (si, bi, 0, pi)),
        compiler_params=pltpu.CompilerParams(
            dimension_semantics=("parallel", "parallel", "parallel"),
            vmem_limit_bytes=_vmem_limit_bytes()),
    )(xf, w4)
    return out[..., :p].reshape(s, b, cout, hh, ww)


def _pw_kernel(x_ref, x1_ref, w_ref, b_ref, o_ref, *, apply_gelu):
    # 1x1 conv (bf16 MXU, f32 acc) + bias + wavelet branch + (optional) tanh-GELU.
    xb = x_ref[0].astype(jnp.bfloat16)                      # (Cin, Pt)
    wb = w_ref[...].astype(jnp.bfloat16)                    # (Cout, Cin)
    y = jnp.dot(wb, xb, preferred_element_type=jnp.float32)
    y = y + b_ref[...] + x1_ref[0]
    if apply_gelu:
        y = _gelu(y)
    o_ref[0] = y


def pointwise_combine_pallas(x, x1, w, b, *, apply_gelu, max_lanes=4096):
    """x: (B,Cin,H,W) through 1x1 conv W (Cout,Cin) + bias, added to x1 (B,Cout,H,W)."""
    bsz, cin, hh, ww = x.shape
    cout = w.shape[0]
    p = hh * ww
    pt, p_pad = _tile_and_pad(p, max_lanes)
    xf = x.reshape(bsz, cin, p)
    x1f = x1.reshape(bsz, cout, p)
    if p_pad != p:
        xf = jnp.pad(xf, ((0, 0), (0, 0), (0, p_pad - p)))
        x1f = jnp.pad(x1f, ((0, 0), (0, 0), (0, p_pad - p)))
    out = pl.pallas_call(
        functools.partial(_pw_kernel, apply_gelu=apply_gelu),
        out_shape=jax.ShapeDtypeStruct((bsz, cout, p_pad), jnp.float32),
        grid=(p_pad // pt, bsz),
        in_specs=[pl.BlockSpec((1, cin, pt), lambda pi, bi: (bi, 0, pi)),
                  pl.BlockSpec((1, cout, pt), lambda pi, bi: (bi, 0, pi)),
                  pl.BlockSpec((cout, cin), lambda pi, bi: (0, 0)),
                  pl.BlockSpec((cout, 1), lambda pi, bi: (0, 0))],
        out_specs=pl.BlockSpec((1, cout, pt), lambda pi, bi: (bi, 0, pi)),
        compiler_params=pltpu.CompilerParams(
            dimension_semantics=("parallel", "parallel"),
            vmem_limit_bytes=_vmem_limit_bytes()),
    )(xf, x1f, w, b.reshape(cout, 1))
    return out[:, :, :p].reshape(bsz, cout, hh, ww)


# ----------------------------------------------------------------------------
# WNO2d forward pass.
# ----------------------------------------------------------------------------
def wave_conv2d(x, w_packed, level):
    """WaveConv2d: DWT -> fused channel mixing (Pallas) on LL + last-level highs -> IDWT."""
    ll, highs = dwt2d(x, level)
    h_last = highs[-1]
    stacked = jnp.stack([ll, h_last[:, :, 0], h_last[:, :, 1], h_last[:, :, 2]], axis=0)
    out = wave_mul4_pallas(stacked, w_packed)               # (4, B, Cout, h, w)
    highs = list(highs)
    highs[-1] = jnp.stack([out[1], out[2], out[3]], axis=2)
    return idwt2d(out[0], highs)


def wno2d_forward(x, params, *, level, padding):
    # fc0 lift (grid features fused in-kernel) -> (B, width, S, S), then F.pad [0,p,0,p]
    v = lift_pallas(x[..., 0], params['fc0_w'], params['fc0_b'])
    v = jnp.pad(v, ((0, 0), (0, 0), (0, padding), (0, padding)))

    for k in range(4):
        x1 = wave_conv2d(v, params[f'conv{k}_packed'], level)
        v = pointwise_combine_pallas(v, x1, params[f'w{k}_w'], params[f'w{k}_b'],
                                     apply_gelu=(k < 3))

    if padding > 0:
        v = v[..., :-padding, :-padding]

    # fc1 + GELU + fc2 fused (Pallas, lane-dense output)
    return head_pallas(v, params['fc1_w'], params['fc1_b'],
                       params['fc2_w'], params['fc2_b'])


# ----------------------------------------------------------------------------
# Deterministic parameter init (shapes follow the torch module __init__) and
# one-time packing of the wave weights (stack 4 subbands, flatten+pad, bf16).
# ----------------------------------------------------------------------------
def init_params(key, width, modes, in_feat=3):
    keys = iter(jax.random.split(key, 64))
    p = {}

    def nrm(shape, scale=0.1):
        return scale * jax.random.normal(next(keys), shape, jnp.float32)

    def uni(shape, scale):
        return scale * jax.random.uniform(next(keys), shape, jnp.float32)

    p['fc0_w'] = nrm((in_feat, width))
    p['fc0_b'] = nrm((width,))
    scale = 1.0 / (width * width)
    for k in range(4):
        p[f'conv{k}'] = tuple(uni((width, width, modes, modes), scale) for _ in range(4))
        p[f'w{k}_w'] = nrm((width, width))      # Conv2d(width, width, 1) weight, squeezed
        p[f'w{k}_b'] = nrm((width,))
    p['fc1_w'] = nrm((width, 128))
    p['fc1_b'] = nrm((128,))
    p['fc2_w'] = nrm((128, 1))
    p['fc2_b'] = nrm((1,))
    return p


def prepare_params(params):
    """Pack wave weights once per model: (4, Cin, Cout, modes1*modes2) padded to the
    wave tile and cast to bf16 (streamed as bf16, accumulated in f32 in-kernel)."""
    p = dict(params)
    for k in range(4):
        w1, w2, w3, w4 = p.pop(f'conv{k}')
        cin, cout, m1, m2 = w1.shape
        pp = m1 * m2
        _, p_pad = _wave_tile(pp, cin, cout)
        ws = jnp.stack([w1, w2, w3, w4], axis=0).reshape(4, cin, cout, pp)
        if p_pad != pp:
            ws = jnp.pad(ws, ((0, 0), (0, 0), (0, 0), (0, p_pad - pp)))
        p[f'conv{k}_packed'] = ws.astype(jnp.bfloat16)
    return p


if __name__ == "__main__":
    B, S = 2, 16          # batch, spatial
    WIDTH = 32            # lifted channel width (module default 64; small test size)
    LEVEL = 2             # wavelet levels (module default 5; reduced for 16x16 inputs)
    PADDING = 2

    # modes1 == modes2 == size of LL subband of the (S+padding)^2 dummy after LEVEL DWTs
    m = S + PADDING
    for _ in range(LEVEL):
        m = (m + _L - 1) // 2
    MODES = m

    key = jax.random.PRNGKey(0)
    kx, kp = jax.random.split(key)
    x = jax.random.normal(kx, (B, S, S, 1), jnp.float32)
    params = prepare_params(init_params(kp, WIDTH, MODES))

    fwd = jax.jit(functools.partial(wno2d_forward, level=LEVEL, padding=PADDING))
    out = jax.block_until_ready(fwd(x, params))

    assert out.shape == (B, S, S, 1), out.shape
    assert bool(jnp.all(jnp.isfinite(out)))
    print("KERNEL_OK")
</pallas_src>

<mosaic_0001>
module attributes {stable_mosaic.version = 11 : i64} {
  func.func @_lift_kernel(%arg0: i32, %arg1: i32, %arg2: memref<1x1x256xf32, #tpu.memory_space<vmem>>, %arg3: memref<2x256xf32, #tpu.memory_space<vmem>>, %arg4: memref<32x3xf32, #tpu.memory_space<vmem>>, %arg5: memref<32x1xf32, #tpu.memory_space<vmem>>, %arg6: memref<1x32x256xf32, #tpu.memory_space<vmem>>) attributes {dimension_semantics = [#tpu.dimension_semantics<parallel>, #tpu.dimension_semantics<parallel>], iteration_bounds = array<i64: 1, 2>, scalar_prefetch = 0 : i64, scratch_operands = 0 : i64, tpu.core_type = #tpu.core_type<tc>, window_params = [{transform_indices = @transform_0, window_bounds = array<i64: 1, 1, 256>}, {transform_indices = @transform_1, window_bounds = array<i64: 2, 256>}, {pipeline_mode = #tpu.pipeline_mode<synchronous>, transform_indices = @transform_2, window_bounds = array<i64: 32, 3>}, {pipeline_mode = #tpu.pipeline_mode<synchronous>, transform_indices = @transform_3, window_bounds = array<i64: 32, 1>}, {transform_indices = @transform_4, window_bounds = array<i64: 1, 32, 256>}]} {
    %c0 = arith.constant 0 : index
    %c0_0 = arith.constant 0 : index
    %c0_1 = arith.constant 0 : index
    %0 = vector.load %arg2[%c0, %c0_0, %c0_1] : memref<1x1x256xf32, #tpu.memory_space<vmem>>, vector<1x1x256xf32>
    %1 = vector.shape_cast %0 : vector<1x1x256xf32> to vector<1x256xf32>
    %c0_2 = arith.constant 0 : index
    %c0_3 = arith.constant 0 : index
    %2 = vector.load %arg3[%c0_2, %c0_3] : memref<2x256xf32, #tpu.memory_space<vmem>>, vector<2x256xf32>
    %c0_4 = arith.constant 0 : index
    %c0_5 = arith.constant 0 : index
    %3 = vector.load %arg4[%c0_4, %c0_5] : memref<32x3xf32, #tpu.memory_space<vmem>>, vector<32x3xf32>
    %4 = vector.extract_strided_slice %3 {offsets = [0, 0], sizes = [32, 1], strides = [1, 1]} : vector<32x3xf32> to vector<32x1xf32>
    %5 = vector.broadcast %4 : vector<32x1xf32> to vector<32x256xf32>
    %6 = vector.broadcast %1 : vector<1x256xf32> to vector<32x256xf32>
    %7 = arith.mulf %5, %6 : vector<32x256xf32>
    %8 = vector.extract_strided_slice %3 {offsets = [0, 1], sizes = [32, 1], strides = [1, 1]} : vector<32x3xf32> to vector<32x1xf32>
    %9 = vector.extract_strided_slice %2 {offsets = [0, 0], sizes = [1, 256], strides = [1, 1]} : vector<2x256xf32> to vector<1x256xf32>
    %10 = vector.broadcast %8 : vector<32x1xf32> to vector<32x256xf32>
    %11 = vector.broadcast %9 : vector<1x256xf32> to vector<32x256xf32>
    %12 = arith.mulf %10, %11 : vector<32x256xf32>
    %13 = arith.addf %7, %12 : vector<32x256xf32>
    %14 = vector.extract_strided_slice %3 {offsets = [0, 2], sizes = [32, 1], strides = [1, 1]} : vector<32x3xf32> to vector<32x1xf32>
    %15 = vector.extract_strided_slice %2 {offsets = [1, 0], sizes = [1, 256], strides = [1, 1]} : vector<2x256xf32> to vector<1x256xf32>
    %16 = vector.broadcast %14 : vector<32x1xf32> to vector<32x256xf32>
    %17 = vector.broadcast %15 : vector<1x256xf32> to vector<32x256xf32>
    %18 = arith.mulf %16, %17 : vector<32x256xf32>
    %19 = arith.addf %13, %18 : vector<32x256xf32>
    %c0_6 = arith.constant 0 : index
    %c0_7 = arith.constant 0 : index
    %20 = vector.load %arg5[%c0_6, %c0_7] : memref<32x1xf32, #tpu.memory_space<vmem>>, vector<32x1xf32>
    %21 = vector.broadcast %20 : vector<32x1xf32> to vector<32x256xf32>
    %22 = arith.addf %19, %21 : vector<32x256xf32>
    %c0_8 = arith.constant 0 : index
    %c0_9 = arith.constant 0 : index
    %c0_10 = arith.constant 0 : index
    %23 = vector.load %arg6[%c0_8, %c0_9, %c0_10] : memref<1x32x256xf32, #tpu.memory_space<vmem>>, vector<1x32x256xf32>
    %24 = vector.shape_cast %23 : vector<1x32x256xf32> to vector<32x256xf32>
    %25 = vector.shape_cast %22 : vector<32x256xf32> to vector<1x32x256xf32>
    tpu.vector_store %arg6[%c0_8, %c0_9, %c0_10], %25 {strides = array<i32>} : memref<1x32x256xf32, #tpu.memory_space<vmem>>, vector<1x32x256xf32>,
    return
  }
  func.func @transform_0(%arg0: i32, %arg1: i32) -> (i32, i32, i32) {
    %c0_i32 = arith.constant 0 : i32
    %c0_i32_0 = arith.constant 0 : i32
    return %arg1, %c0_i32, %arg0 : i32, i32, i32
  }
  func.func @transform_1(%arg0: i32, %arg1: i32) -> (i32, i32) {
    %c0_i32 = arith.constant 0 : i32
    %c0_i32_0 = arith.constant 0 : i32
    return %c0_i32, %arg0 : i32, i32
  }
  func.func @transform_2(%arg0: i32, %arg1: i32) -> (i32, i32) {
    %c0_i32 = arith.constant 0 : i32
    %c0_i32_0 = arith.constant 0 : i32
    %c0_i32_1 = arith.constant 0 : i32
    return %c0_i32, %c0_i32_0 : i32, i32
  }
  func.func @transform_3(%arg0: i32, %arg1: i32) -> (i32, i32) {
    %c0_i32 = arith.constant 0 : i32
    %c0_i32_0 = arith.constant 0 : i32
    %c0_i32_1 = arith.constant 0 : i32
    return %c0_i32, %c0_i32_0 : i32, i32
  }
  func.func @transform_4(%arg0: i32, %arg1: i32) -> (i32, i32, i32) {
    %c0_i32 = arith.constant 0 : i32
    %c0_i32_0 = arith.constant 0 : i32
    return %arg1, %c0_i32, %arg0 : i32, i32, i32
  }
}

module attributes {stable_mosaic.version = 11 : i64} {
  func.func @_wave_mul_kernel(%arg0: i32, %arg1: i32, %arg2: i32, %arg3: memref<1x1x32x128xf32, #tpu.memory_space<vmem>>, %arg4: memref<1x32x32x128xbf16, #tpu.memory_space<vmem>>, %arg5: memref<1x1x32x128xf32, #tpu.memory_space<vmem>>) attributes {dimension_semantics = [#tpu.dimension_semantics<parallel>, #tpu.dimension_semantics<parallel>, #tpu.dimension_semantics<parallel>], iteration_bounds = array<i64: 4, 1, 2>, scalar_prefetch = 0 : i64, scratch_operands = 0 : i64, tpu.core_type = #tpu.core_type<tc>, window_params = [{transform_indices = @transform_0, window_bounds = array<i64: 1, 1, 32, 128>}, {transform_indices = @transform_1, window_bounds = array<i64: 1, 32, 32, 128>}, {transform_indices = @transform_2, window_bounds = array<i64: 1, 1, 32, 128>}]} {
    %c0_i32 = arith.constant 0 : i32
    %c1_i32 = arith.constant 1 : i32
    %0 = arith.muli %c0_i32, %c1_i32 : i32
    %c0_i32_0 = arith.constant 0 : i32
    %1 = arith.addi %c0_i32_0, %0 : i32
    %c128_i32 = arith.constant 128 : i32
    %2 = arith.muli %1, %c128_i32 : i32
    %3 = tpu.assume_multiple %2, 128 : i32
    %cst = arith.constant 0.000000e+00 : f32
    %4 = vector.broadcast %cst : f32 to vector<32x128xf32>
    %c0_i32_1 = arith.constant 0 : i32
    %c32_i32 = arith.constant 32 : i32
    %5 = arith.addi %c0_i32_1, %c32_i32 : i32
    %c1_i32_2 = arith.constant 1 : i32
    %6 = scf.for %arg6 = %c0_i32_1 to %5 step %c1_i32_2 iter_args(%arg7 = %4) -> (vector<32x128xf32>)  : i32 {
      %c0_7 = arith.constant 0 : index
      %c0_8 = arith.constant 0 : index
      %11 = arith.index_cast %arg6 : i32 to index
      %12 = arith.index_cast %3 : i32 to index
      %13 = vector.load %arg3[%c0_7, %c0_8, %11, %12] : memref<1x1x32x128xf32, #tpu.memory_space<vmem>>, vector<1x1x1x128xf32>
      %14 = vector.shape_cast %13 : vector<1x1x1x128xf32> to vector<1x128xf32>
      %c0_9 = arith.constant 0 : index
      %15 = arith.index_cast %arg6 : i32 to index
      %c0_10 = arith.constant 0 : index
      %16 = arith.index_cast %3 : i32 to index
      %17 = vector.load %arg4[%c0_9, %15, %c0_10, %16] : memref<1x32x32x128xbf16, #tpu.memory_space<vmem>>, vector<1x1x32x128xbf16>
      %18 = vector.shape_cast %17 : vector<1x1x32x128xbf16> to vector<1x32x128xbf16>
      %19 = vector.shape_cast %18 : vector<1x32x128xbf16> to vector<32x128xbf16>
      %20 = arith.extf %19 : vector<32x128xbf16> to vector<32x128xf32>
      %21 = vector.broadcast %14 : vector<1x128xf32> to vector<32x128xf32>
      %22 = arith.mulf %21, %20 : vector<32x128xf32>
      %23 = arith.addf %arg7, %22 : vector<32x128xf32>
      scf.yield %23 : vector<32x128xf32>
    }
    %c32_i32_3 = arith.constant 32 : i32
    %c0 = arith.constant 0 : index
    %c0_4 = arith.constant 0 : index
    %c0_5 = arith.constant 0 : index
    %7 = arith.index_cast %3 : i32 to index
    %8 = vector.load %arg5[%c0, %c0_4, %c0_5, %7] : memref<1x1x32x128xf32, #tpu.memory_space<vmem>>, vector<1x1x32x128xf32>
    %9 = vector.shape_cast %8 : vector<1x1x32x128xf32> to vector<32x128xf32>
    %10 = vector.shape_cast %6 : vector<32x128xf32> to vector<1x1x32x128xf32>
    tpu.vector_store %arg5[%c0, %c0_4, %c0_5, %7], %10 {strides = array<i32>} : memref<1x1x32x128xf32, #tpu.memory_space<vmem>>, vector<1x1x32x128xf32>,
    %c1_i32_6 = arith.constant 1 : i32
    return
  }
  func.func @transform_0(%arg0: i32, %arg1: i32, %arg2: i32) -> (i32, i32, i32, i32) {
    %c0_i32 = arith.constant 0 : i32
    %c0_i32_0 = arith.constant 0 : i32
    return %arg0, %arg2, %c0_i32, %arg1 : i32, i32, i32, i32
  }
  func.func @transform_1(%arg0: i32, %arg1: i32, %arg2: i32) -> (i32, i32, i32, i32) {
    %c0_i32 = arith.constant 0 : i32
    %c0_i32_0 = arith.constant 0 : i32
    %c0_i32_1 = arith.constant 0 : i32
    return %arg0, %c0_i32, %c0_i32_0, %arg1 : i32, i32, i32, i32
  }
  func.func @transform_2(%arg0: i32, %arg1: i32, %arg2: i32) -> (i32, i32, i32, i32) {
    %c0_i32 = arith.constant 0 : i32
    %c0_i32_0 = arith.constant 0 : i32
    return %arg0, %arg2, %c0_i32, %arg1 : i32, i32, i32, i32
  }
}

module attributes {stable_mosaic.version = 11 : i64} {
  func.func @_pw_kernel(%arg0: i32, %arg1: i32, %arg2: memref<1x32x384xf32, #tpu.memory_space<vmem>>, %arg3: memref<1x32x384xf32, #tpu.memory_space<vmem>>, %arg4: memref<32x32xf32, #tpu.memory_space<vmem>>, %arg5: memref<32x1xf32, #tpu.memory_space<vmem>>, %arg6: memref<1x32x384xf32, #tpu.memory_space<vmem>>) attributes {dimension_semantics = [#tpu.dimension_semantics<parallel>, #tpu.dimension_semantics<parallel>], iteration_bounds = array<i64: 1, 2>, scalar_prefetch = 0 : i64, scratch_operands = 0 : i64, tpu.core_type = #tpu.core_type<tc>, window_params = [{transform_indices = @transform_0, window_bounds = array<i64: 1, 32, 384>}, {transform_indices = @transform_1, window_bounds = array<i64: 1, 32, 384>}, {pipeline_mode = #tpu.pipeline_mode<synchronous>, transform_indices = @transform_2, window_bounds = array<i64: 32, 32>}, {pipeline_mode = #tpu.pipeline_mode<synchronous>, transform_indices = @transform_3, window_bounds = array<i64: 32, 1>}, {transform_indices = @transform_4, window_bounds = array<i64: 1, 32, 384>}]} {
    %c0 = arith.constant 0 : index
    %c0_0 = arith.constant 0 : index
    %c0_1 = arith.constant 0 : index
    %0 = vector.load %arg2[%c0, %c0_0, %c0_1] : memref<1x32x384xf32, #tpu.memory_space<vmem>>, vector<1x32x384xf32>
    %1 = vector.shape_cast %0 : vector<1x32x384xf32> to vector<32x384xf32>
    %2 = arith.truncf %1 : vector<32x384xf32> to vector<32x384xbf16>
    %c0_2 = arith.constant 0 : index
    %c0_3 = arith.constant 0 : index
    %3 = vector.load %arg4[%c0_2, %c0_3] : memref<32x32xf32, #tpu.memory_space<vmem>>, vector<32x32xf32>
    %4 = arith.truncf %3 : vector<32x32xf32> to vector<32x32xbf16>
    %cst = arith.constant dense<0.000000e+00> : vector<32x384xf32>
    %5 = tpu.matmul %4, %2, %cst {dimension_numbers = #tpu.dot_dimension_numbers<[1], [0], [0], [1], [0, 0, 1, 1], [], []>} : vector<32x32xbf16>, vector<32x384xbf16>, vector<32x384xf32> -> vector<32x384xf32>
    %c0_4 = arith.constant 0 : index
    %c0_5 = arith.constant 0 : index
    %6 = vector.load %arg5[%c0_4, %c0_5] : memref<32x1xf32, #tpu.memory_space<vmem>>, vector<32x1xf32>
    %7 = vector.broadcast %6 : vector<32x1xf32> to vector<32x384xf32>
    %8 = arith.addf %5, %7 : vector<32x384xf32>
    %c0_6 = arith.constant 0 : index
    %c0_7 = arith.constant 0 : index
    %c0_8 = arith.constant 0 : index
    %9 = vector.load %arg3[%c0_6, %c0_7, %c0_8] : memref<1x32x384xf32, #tpu.memory_space<vmem>>, vector<1x32x384xf32>
    %10 = vector.shape_cast %9 : vector<1x32x384xf32> to vector<32x384xf32>
    %11 = arith.addf %8, %10 : vector<32x384xf32>
    %cst_9 = arith.constant 5.000000e-01 : f32
    %12 = vector.broadcast %cst_9 : f32 to vector<32x384xf32>
    %13 = arith.mulf %12, %11 : vector<32x384xf32>
    %cst_10 = arith.constant 4.471500e-02 : f32
    %14 = vector.broadcast %cst_10 : f32 to vector<32x384xf32>
    %15 = arith.mulf %14, %11 : vector<32x384xf32>
    %16 = arith.mulf %15, %11 : vector<32x384xf32>
    %17 = arith.mulf %16, %11 : vector<32x384xf32>
    %18 = arith.addf %11, %17 : vector<32x384xf32>
    %cst_11 = arith.constant 0.797884583 : f32
    %19 = vector.broadcast %cst_11 : f32 to vector<32x384xf32>
    %20 = arith.mulf %19, %18 : vector<32x384xf32>
    %21 = math.tanh %20 : vector<32x384xf32>
    %cst_12 = arith.constant 1.000000e+00 : f32
    %22 = vector.broadcast %cst_12 : f32 to vector<32x384xf32>
    %23 = arith.addf %22, %21 : vector<32x384xf32>
    %24 = arith.mulf %13, %23 : vector<32x384xf32>
    %c0_13 = arith.constant 0 : index
    %c0_14 = arith.constant 0 : index
    %c0_15 = arith.constant 0 : index
    %25 = vector.load %arg6[%c0_13, %c0_14, %c0_15] : memref<1x32x384xf32, #tpu.memory_space<vmem>>, vector<1x32x384xf32>
    %26 = vector.shape_cast %25 : vector<1x32x384xf32> to vector<32x384xf32>
    %27 = vector.shape_cast %24 : vector<32x384xf32> to vector<1x32x384xf32>
    tpu.vector_store %arg6[%c0_13, %c0_14, %c0_15], %27 {strides = array<i32>} : memref<1x32x384xf32, #tpu.memory_space<vmem>>, vector<1x32x384xf32>,
    return
  }
  func.func @transform_0(%arg0: i32, %arg1: i32) -> (i32, i32, i32) {
    %c0_i32 = arith.constant 0 : i32
    %c0_i32_0 = arith.constant 0 : i32
    return %arg1, %c0_i32, %arg0 : i32, i32, i32
  }
  func.func @transform_1(%arg0: i32, %arg1: i32) -> (i32, i32, i32) {
    %c0_i32 = arith.constant 0 : i32
    %c0_i32_0 = arith.constant 0 : i32
    return %arg1, %c0_i32, %arg0 : i32, i32, i32
  }
  func.func @transform_2(%arg0: i32, %arg1: i32) -> (i32, i32) {
    %c0_i32 = arith.constant 0 : i32
    %c0_i32_0 = arith.constant 0 : i32
    %c0_i32_1 = arith.constant 0 : i32
    return %c0_i32, %c0_i32_0 : i32, i32
  }
  func.func @transform_3(%arg0: i32, %arg1: i32) -> (i32, i32) {
    %c0_i32 = arith.constant 0 : i32
    %c0_i32_0 = arith.constant 0 : i32
    %c0_i32_1 = arith.constant 0 : i32
    return %c0_i32, %c0_i32_0 : i32, i32
  }
  func.func @transform_4(%arg0: i32, %arg1: i32) -> (i32, i32, i32) {
    %c0_i32 = arith.constant 0 : i32
    %c0_i32_0 = arith.constant 0 : i32
    return %arg1, %c0_i32, %arg0 : i32, i32, i32
  }
}

module attributes {stable_mosaic.version = 11 : i64} {
  func.func @_pw_kernel(%arg0: i32, %arg1: i32, %arg2: memref<1x32x384xf32, #tpu.memory_space<vmem>>, %arg3: memref<1x32x384xf32, #tpu.memory_space<vmem>>, %arg4: memref<32x32xf32, #tpu.memory_space<vmem>>, %arg5: memref<32x1xf32, #tpu.memory_space<vmem>>, %arg6: memref<1x32x384xf32, #tpu.memory_space<vmem>>) attributes {dimension_semantics = [#tpu.dimension_semantics<parallel>, #tpu.dimension_semantics<parallel>], iteration_bounds = array<i64: 1, 2>, scalar_prefetch = 0 : i64, scratch_operands = 0 : i64, tpu.core_type = #tpu.core_type<tc>, window_params = [{transform_indices = @transform_0, window_bounds = array<i64: 1, 32, 384>}, {transform_indices = @transform_1, window_bounds = array<i64: 1, 32, 384>}, {pipeline_mode = #tpu.pipeline_mode<synchronous>, transform_indices = @transform_2, window_bounds = array<i64: 32, 32>}, {pipeline_mode = #tpu.pipeline_mode<synchronous>, transform_indices = @transform_3, window_bounds = array<i64: 32, 1>}, {transform_indices = @transform_4, window_bounds = array<i64: 1, 32, 384>}]} {
    %c0 = arith.constant 0 : index
    %c0_0 = arith.constant 0 : index
    %c0_1 = arith.constant 0 : index
    %0 = vector.load %arg2[%c0, %c0_0, %c0_1] : memref<1x32x384xf32, #tpu.memory_space<vmem>>, vector<1x32x384xf32>
    %1 = vector.shape_cast %0 : vector<1x32x384xf32> to vector<32x384xf32>
    %2 = arith.truncf %1 : vector<32x384xf32> to vector<32x384xbf16>
    %c0_2 = arith.constant 0 : index
    %c0_3 = arith.constant 0 : index
    %3 = vector.load %arg4[%c0_2, %c0_3] : memref<32x32xf32, #tpu.memory_space<vmem>>, vector<32x32xf32>
    %4 = arith.truncf %3 : vector<32x32xf32> to vector<32x32xbf16>
    %cst = arith.constant dense<0.000000e+00> : vector<32x384xf32>
    %5 = tpu.matmul %4, %2, %cst {dimension_numbers = #tpu.dot_dimension_numbers<[1], [0], [0], [1], [0, 0, 1, 1], [], []>} : vector<32x32xbf16>, vector<32x384xbf16>, vector<32x384xf32> -> vector<32x384xf32>
    %c0_4 = arith.constant 0 : index
    %c0_5 = arith.constant 0 : index
    %6 = vector.load %arg5[%c0_4, %c0_5] : memref<32x1xf32, #tpu.memory_space<vmem>>, vector<32x1xf32>
    %7 = vector.broadcast %6 : vector<32x1xf32> to vector<32x384xf32>
    %8 = arith.addf %5, %7 : vector<32x384xf32>
    %c0_6 = arith.constant 0 : index
    %c0_7 = arith.constant 0 : index
    %c0_8 = arith.constant 0 : index
    %9 = vector.load %arg3[%c0_6, %c0_7, %c0_8] : memref<1x32x384xf32, #tpu.memory_space<vmem>>, vector<1x32x384xf32>
    %10 = vector.shape_cast %9 : vector<1x32x384xf32> to vector<32x384xf32>
    %11 = arith.addf %8, %10 : vector<32x384xf32>
    %c0_9 = arith.constant 0 : index
    %c0_10 = arith.constant 0 : index
    %c0_11 = arith.constant 0 : index
    %12 = vector.load %arg6[%c0_9, %c0_10, %c0_11] : memref<1x32x384xf32, #tpu.memory_space<vmem>>, vector<1x32x384xf32>
    %13 = vector.shape_cast %12 : vector<1x32x384xf32> to vector<32x384xf32>
    %14 = vector.shape_cast %11 : vector<32x384xf32> to vector<1x32x384xf32>
    tpu.vector_store %arg6[%c0_9, %c0_10, %c0_11], %14 {strides = array<i32>} : memref<1x32x384xf32, #tpu.memory_space<vmem>>, vector<1x32x384xf32>,
    return
  }
  func.func @transform_0(%arg0: i32, %arg1: i32) -> (i32, i32, i32) {
    %c0_i32 = arith.constant 0 : i32
    %c0_i32_0 = arith.constant 0 : i32
    return %arg1, %c0_i32, %arg0 : i32, i32, i32
  }
  func.func @transform_1(%arg0: i32, %arg1: i32) -> (i32, i32, i32) {
    %c0_i32 = arith.constant 0 : i32
    %c0_i32_0 = arith.constant 0 : i32
    return %arg1, %c0_i32, %arg0 : i32, i32, i32
  }
  func.func @transform_2(%arg0: i32, %arg1: i32) -> (i32, i32) {
    %c0_i32 = arith.constant 0 : i32
    %c0_i32_0 = arith.constant 0 : i32
    %c0_i32_1 = arith.constant 0 : i32
    return %c0_i32, %c0_i32_0 : i32, i32
  }
  func.func @transform_3(%arg0: i32, %arg1: i32) -> (i32, i32) {
    %c0_i32 = arith.constant 0 : i32
    %c0_i32_0 = arith.constant 0 : i32
    %c0_i32_1 = arith.constant 0 : i32
    return %c0_i32, %c0_i32_0 : i32, i32
  }
  func.func @transform_4(%arg0: i32, %arg1: i32) -> (i32, i32, i32) {
    %c0_i32 = arith.constant 0 : i32
    %c0_i32_0 = arith.constant 0 : i32
    return %arg1, %c0_i32, %arg0 : i32, i32, i32
  }
}

module attributes {stable_mosaic.version = 11 : i64} {
  func.func @_head_kernel(%arg0: i32, %arg1: i32, %arg2: memref<1x32x256xf32, #tpu.memory_space<vmem>>, %arg3: memref<128x32xf32, #tpu.memory_space<vmem>>, %arg4: memref<128x1xf32, #tpu.memory_space<vmem>>, %arg5: memref<128x1xf32, #tpu.memory_space<vmem>>, %arg6: memref<1x1xf32, #tpu.memory_space<vmem>>, %arg7: memref<1x1x256xf32, #tpu.memory_space<vmem>>) attributes {dimension_semantics = [#tpu.dimension_semantics<parallel>, #tpu.dimension_semantics<parallel>], iteration_bounds = array<i64: 1, 2>, scalar_prefetch = 0 : i64, scratch_operands = 0 : i64, tpu.core_type = #tpu.core_type<tc>, window_params = [{transform_indices = @transform_0, window_bounds = array<i64: 1, 32, 256>}, {pipeline_mode = #tpu.pipeline_mode<synchronous>, transform_indices = @transform_1, window_bounds = array<i64: 128, 32>}, {pipeline_mode = #tpu.pipeline_mode<synchronous>, transform_indices = @transform_2, window_bounds = array<i64: 128, 1>}, {pipeline_mode = #tpu.pipeline_mode<synchronous>, transform_indices = @transform_3, window_bounds = array<i64: 128, 1>}, {pipeline_mode = #tpu.pipeline_mode<synchronous>, transform_indices = @transform_4, window_bounds = array<i64: 1, 1>}, {transform_indices = @transform_5, window_bounds = array<i64: 1, 1, 256>}]} {
    %c0 = arith.constant 0 : index
    %c0_0 = arith.constant 0 : index
    %c0_1 = arith.constant 0 : index
    %0 = vector.load %arg2[%c0, %c0_0, %c0_1] : memref<1x32x256xf32, #tpu.memory_space<vmem>>, vector<1x32x256xf32>
    %1 = vector.shape_cast %0 : vector<1x32x256xf32> to vector<32x256xf32>
    %2 = arith.truncf %1 : vector<32x256xf32> to vector<32x256xbf16>
    %c0_2 = arith.constant 0 : index
    %c0_3 = arith.constant 0 : index
    %3 = vector.load %arg3[%c0_2, %c0_3] : memref<128x32xf32, #tpu.memory_space<vmem>>, vector<128x32xf32>
    %4 = arith.truncf %3 : vector<128x32xf32> to vector<128x32xbf16>
    %cst = arith.constant dense<0.000000e+00> : vector<128x256xf32>
    %5 = tpu.matmul %4, %2, %cst {dimension_numbers = #tpu.dot_dimension_numbers<[1], [0], [0], [1], [0, 0, 1, 1], [], []>} : vector<128x32xbf16>, vector<32x256xbf16>, vector<128x256xf32> -> vector<128x256xf32>
    %c0_4 = arith.constant 0 : index
    %c0_5 = arith.constant 0 : index
    %6 = vector.load %arg4[%c0_4, %c0_5] : memref<128x1xf32, #tpu.memory_space<vmem>>, vector<128x1xf32>
    %7 = vector.broadcast %6 : vector<128x1xf32> to vector<128x256xf32>
    %8 = arith.addf %5, %7 : vector<128x256xf32>
    %cst_6 = arith.constant 5.000000e-01 : f32
    %9 = vector.broadcast %cst_6 : f32 to vector<128x256xf32>
    %10 = arith.mulf %9, %8 : vector<128x256xf32>
    %cst_7 = arith.constant 4.471500e-02 : f32
    %11 = vector.broadcast %cst_7 : f32 to vector<128x256xf32>
    %12 = arith.mulf %11, %8 : vector<128x256xf32>
    %13 = arith.mulf %12, %8 : vector<128x256xf32>
    %14 = arith.mulf %13, %8 : vector<128x256xf32>
    %15 = arith.addf %8, %14 : vector<128x256xf32>
    %cst_8 = arith.constant 0.797884583 : f32
    %16 = vector.broadcast %cst_8 : f32 to vector<128x256xf32>
    %17 = arith.mulf %16, %15 : vector<128x256xf32>
    %18 = math.tanh %17 : vector<128x256xf32>
    %cst_9 = arith.constant 1.000000e+00 : f32
    %19 = vector.broadcast %cst_9 : f32 to vector<128x256xf32>
    %20 = arith.addf %19, %18 : vector<128x256xf32>
    %21 = arith.mulf %10, %20 : vector<128x256xf32>
    %c0_10 = arith.constant 0 : index
    %c0_11 = arith.constant 0 : index
    %22 = vector.load %arg5[%c0_10, %c0_11] : memref<128x1xf32, #tpu.memory_space<vmem>>, vector<128x1xf32>
    %23 = vector.broadcast %22 : vector<128x1xf32> to vector<128x256xf32>
    %24 = arith.mulf %21, %23 : vector<128x256xf32>
    %cst_12 = arith.constant dense<0.000000e+00> : vector<256xf32>
    %25 = vector.multi_reduction <add>, %24, %cst_12 [0] : vector<128x256xf32> to vector<256xf32>
    %26 = vector.shape_cast %25 : vector<256xf32> to vector<1x256xf32>
    %c0_13 = arith.constant 0 : index
    %c0_14 = arith.constant 0 : index
    %27 = vector.load %arg6[%c0_13, %c0_14] : memref<1x1xf32, #tpu.memory_space<vmem>>, vector<1x1xf32>
    %28 = vector.broadcast %27 : vector<1x1xf32> to vector<1x256xf32>
    %29 = arith.addf %26, %28 : vector<1x256xf32>
    %c0_15 = arith.constant 0 : index
    %c0_16 = arith.constant 0 : index
    %c0_17 = arith.constant 0 : index
    %30 = vector.load %arg7[%c0_15, %c0_16, %c0_17] : memref<1x1x256xf32, #tpu.memory_space<vmem>>, vector<1x1x256xf32>
    %31 = vector.shape_cast %30 : vector<1x1x256xf32> to vector<1x256xf32>
    %32 = vector.shape_cast %29 : vector<1x256xf32> to vector<1x1x256xf32>
    tpu.vector_store %arg7[%c0_15, %c0_16, %c0_17], %32 {strides = array<i32>} : memref<1x1x256xf32, #tpu.memory_space<vmem>>, vector<1x1x256xf32>,
    return
  }
  func.func @transform_0(%arg0: i32, %arg1: i32) -> (i32, i32, i32) {
    %c0_i32 = arith.constant 0 : i32
    %c0_i32_0 = arith.constant 0 : i32
    return %arg1, %c0_i32, %arg0 : i32, i32, i32
  }
  func.func @transform_1(%arg0: i32, %arg1: i32) -> (i32, i32) {
    %c0_i32 = arith.constant 0 : i32
    %c0_i32_0 = arith.constant 0 : i32
    %c0_i32_1 = arith.constant 0 : i32
    return %c0_i32, %c0_i32_0 : i32, i32
  }
  func.func @transform_2(%arg0: i32, %arg1: i32) -> (i32, i32) {
    %c0_i32 = arith.constant 0 : i32
    %c0_i32_0 = arith.constant 0 : i32
    %c0_i32_1 = arith.constant 0 : i32
    return %c0_i32, %c0_i32_0 : i32, i32
  }
  func.func @transform_3(%arg0: i32, %arg1: i32) -> (i32, i32) {
    %c0_i32 = arith.constant 0 : i32
    %c0_i32_0 = arith.constant 0 : i32
    %c0_i32_1 = arith.constant 0 : i32
    return %c0_i32, %c0_i32_0 : i32, i32
  }
  func.func @transform_4(%arg0: i32, %arg1: i32) -> (i32, i32) {
    %c0_i32 = arith.constant 0 : i32
    %c0_i32_0 = arith.constant 0 : i32
    %c0_i32_1 = arith.constant 0 : i32
    return %c0_i32, %c0_i32_0 : i32, i32
  }
  func.func @transform_5(%arg0: i32, %arg1: i32) -> (i32, i32, i32) {
    %c0_i32 = arith.constant 0 : i32
    %c0_i32_0 = arith.constant 0 : i32
    return %arg1, %c0_i32, %arg0 : i32, i32, i32
  }
}

</mosaic_0001>

<llo_original>
// kernel: squeeze.18
$region0: #{squeeze.18}
  %s0 = inlined_call_operand.vmem [shape: f32[2,16,16], index: 0, kind: input, shape index: {}]
  %s1 = inlined_call_operand.vmem [shape: f32[2,1,256], index: 1, kind: output, shape index: {}]
  $region1: #{squeeze.18} parent=0
    #allocation0 [shape = 'u8[16384]{0}', space=vmem, size = 0x4000, scoped, tag = 'scoped mem for output reshape']
    %v2 = vld [vmem:[%s0] ss:$8 sm:$0xf]
    %vm3 = vcmask 130048
    %4 = vst.msk [vmem:[#allocation0] ss:$8 sm:$0xf] %vm3, %v2
    %s5 = scalar_lea.vmem %s0, 7
    %v6 = vld [vmem:[%s5] ss:$8 sm:$0xf]
    %7 = vrot.lane.b32.xlu0 %v6, 112
    %v8 = vpop.permute.xlu0 %7
    %vm9 = vcmask 1048448
    %10 = vst.msk [vmem:[#allocation0] ss:$8 sm:$0xf] %vm9, %v8
    %s11 = scalar_lea.vmem %s0, 6
    %v12 = vld [vmem:[%s11] ss:$8 sm:$0xf]
    %13 = vrot.lane.b32.xlu0 %v12, 96
    %v14 = vpop.permute.xlu0 %13
    %vm15 = vcmask 917248
    %16 = vst.msk [vmem:[#allocation0] ss:$8 sm:$0xf] %vm15, %v14
    %s17 = scalar_lea.vmem %s0, 5
    %v18 = vld [vmem:[%s17] ss:$8 sm:$0xf]
    %19 = vrot.lane.b32.xlu0 %v18, 80
    %v20 = vpop.permute.xlu0 %19
    %vm21 = vcmask 786048
    %22 = vst.msk [vmem:[#allocation0] ss:$8 sm:$0xf] %vm21, %v20
    %s23 = scalar_lea.vmem %s0, 4
    %v24 = vld [vmem:[%s23] ss:$8 sm:$0xf]
    %25 = vrot.lane.b32.xlu0 %v24, 64
    %v26 = vpop.permute.xlu0 %25
    %vm27 = vcmask 654848
    %28 = vst.msk [vmem:[#allocation0] ss:$8 sm:$0xf] %vm27, %v26
    %s29 = scalar_lea.vmem %s0, 3
    %v30 = vld [vmem:[%s29] ss:$8 sm:$0xf]
    %31 = vrot.lane.b32.xlu0 %v30, 48
    %v32 = vpop.permute.xlu0 %31
    %vm33 = vcmask 523648
    %34 = vst.msk [vmem:[#allocation0] ss:$8 sm:$0xf] %vm33, %v32
    %s35 = scalar_lea.vmem %s0, 2
    %v36 = vld [vmem:[%s35] ss:$8 sm:$0xf]
    %37 = vrot.lane.b32.xlu0 %v36, 32
    %v38 = vpop.permute.xlu0 %37
    %vm39 = vcmask 392448
    %40 = vst.msk [vmem:[#allocation0] ss:$8 sm:$0xf] %vm39, %v38
    %s41 = scalar_lea.vmem %s0, 1
    %v42 = vld [vmem:[%s41] ss:$8 sm:$0xf]
    %43 = vrot.lane.b32.xlu0 %v42, 16
    %v44 = vpop.permute.xlu0 %43
    %vm45 = vcmask 261248
    %46 = vst.msk [vmem:[#allocation0] ss:$8 sm:$0xf] %vm45, %v44
    %s48 = sshllo.u32 0, 1
    %v50 = vld [vmem:[#allocation0] sm:%s48]
    %s51 = sshllo.u32 0, 1
    %52 = vst [vmem:[%s1] sm:%s51] %v50
    %s53 = scalar_lea.vmem [#allocation0], 8
    %v54 = vld [vmem:[%s53] sm:%s48]
    %s55 = sshllo.u32 0, 1
    %s56 = scalar_lea.vmem %s1, 1
    %57 = vst [vmem:[%s56] sm:%s55] %v54
    %s58 = scalar_lea.vmem [#allocation0], 16
    %v59 = vld [vmem:[%s58] sm:%s48]
    %s60 = sshllo.u32 0, 1
    %s61 = smul.addr 1, 2
    %s62 = scalar_lea.vmem %s1, %s61
    %63 = vst [vmem:[%s62] sm:%s60] %v59
    %s64 = scalar_lea.vmem [#allocation0], 24
    %v65 = vld [vmem:[%s64] sm:%s48]
    %s66 = sshllo.u32 0, 1
    %s67 = smul.addr 1, 3
    %s68 = scalar_lea.vmem %s1, %s67
    %69 = vst [vmem:[%s68] sm:%s66] %v65

// kernel: wno2d_forward.10
$region0: #{wno2d_forward.10}
  #allocation0 [shape = 'u32[]', space=smem, size = 0x4, offset = 0x4, fixed_abs, tag = 'smem constant byte address 0x4 - core index']
  #allocation1 [shape = 'u32[144,128]{1,0:T(1,128)}', space=vmem, size = 0x12000, scoped, tag = 'internal scratch']
  %s0 = inlined_call_operand.vmem [shape: f32[2,1,256], index: 0, kind: input, shape index: {}]
  %s1 = inlined_call_operand.vmem [shape: f32[2,256], index: 1, kind: input, shape index: {}]
  %s2 = inlined_call_operand.vmem [shape: f32[32,3], index: 2, kind: input, shape index: {}]
  %s3 = inlined_call_operand.vmem [shape: f32[32,1], index: 3, kind: input, shape index: {}]
  %s4 = inlined_call_operand.vmem [shape: f32[2,32,256], index: 4, kind: output, shape index: {}]
  %s5 = sld [smem:[#allocation0]]
  $region49: #{wno2d_forward.10} parent=0
    _
  %s7 = ssub.s32 1, %s5
  %s8 = scalar_select 0, %s7, %s5
  loop: start=0, step=1, limit=4
  $region2: #{wno2d_forward.10} parent=0 // loop_pre_header
    _
  $region3: #{wno2d_forward.10} parent=0 // loop_header
    %s10 = sphi 0, %s14
    %p11 = scmp.ge.s32.totalorder %s10, 4
    %s17 = sphi 0, %s29
    %s18 = sphi 0, %s25
    %s19 = sphi 0, %s17
    %s20 = sphi 0, %s18
    %s21 = sphi 0, %s19
    %s22 = sphi 0, %s20
    %s34 = sphi 0, %s36
    %s37 = sphi 0, %s34
    %s38 = sphi 0, %s37
    %s54 = sphi 0, %s38
    %s60 = sphi 0, %s62
    %s63 = sphi 0, %s60
    %s64 = sphi 0, %s63
    %s80 = sphi 0, %s64
    %s84 = sphi 0, %s84
    %s86 = sphi 0, %s84
    %s87 = sphi 0, %s86
    %s101 = sphi 0, %s87
    %s105 = sphi 0, %s105
    %s107 = sphi 0, %s105
    %s108 = sphi 0, %s107
    %s122 = sphi 0, %s108
    %s130 = sphi 0, %s132
    %s133 = sphi 0, %s130
    %s134 = sphi 0, %s133
    %s150 = sphi 0, %s134
  $region4: #{wno2d_forward.10} parent=0 // loop_header_branch
    %13 = sbr.rel (%p11) target = $region8
  $region5: #{wno2d_forward.10} parent=0 // loop_body
    %s15 = ssub.s32 %s10, 1
    %s16 = ssub.s32 %s10, 2
    %s23 = sadd.s32 1, %s18
    %p24 = scmp.ge.s32.totalorder %s23, 2
    %s25 = scalar_select %p24, 0, %s23
    %s26 = sadd.s32 1, %s17
    %s27 = scalar_select %p24, %s26, %s17
    %p28 = scmp.ge.s32.totalorder %s27, 1
    %s29 = scalar_select %p28, 0, %s27
    %s30 = ssub.s32 %s18, %s25
    %s31 = ssub.s32 %s17, %s29
    %s32 = sor.u32 %s30, %s31
    %p33 = scmp.eq.s32.totalorder %s32, 0
    %s35 = sadd.s32 %s34, 1
    %s36 = scalar_select %p33, %s34, %s35
    %p39 = pneg %p33
    %p40 = scmp.eq.s32.totalorder %s10, 1
    %p41 = por %p39, %p40
    %p42 = scmp.ne.s32.totalorder %s34, %s37
    %p43 = scmp.eq.s32.totalorder %s10, 0
    %p44 = por %p42, %p43
    %p45 = scmp.ne.s32.totalorder %s34, %s37
    %p46 = scmp.eq.s32.totalorder %s15, 1
    %p47 = por %p45, %p46
    %p48 = scmp.ne.s32.totalorder %s37, %s38
    %p49 = scmp.eq.s32.totalorder %s15, 0
    %p50 = por %p48, %p49
    %p51 = scmp.ne.s32.totalorder %s37, %s38
    %p52 = scmp.eq.s32.totalorder %s16, 1
    %p53 = por %p51, %p52
    %p55 = scmp.ne.s32.totalorder %s38, %s54
    %p56 = scmp.eq.s32.totalorder %s16, 0
    %p57 = por %p55, %p56
    %s58 = ssub.s32 %s17, %s29
    %p59 = scmp.eq.s32.totalorder %s58, 0
    %s61 = sadd.s32 %s60, 1
    %s62 = scalar_select %p59, %s60, %s61
    %p65 = pneg %p59
    %p66 = scmp.eq.s32.totalorder %s10, 1
    %p67 = por %p65, %p66
    %p68 = scmp.ne.s32.totalorder %s60, %s63
    %p69 = scmp.eq.s32.totalorder %s10, 0
    %p70 = por %p68, %p69
    %p71 = scmp.ne.s32.totalorder %s60, %s63
    %p72 = scmp.eq.s32.totalorder %s15, 1
    %p73 = por %p71, %p72
    %p74 = scmp.ne.s32.totalorder %s63, %s64
    %p75 = scmp.eq.s32.totalorder %s15, 0
    %p76 = por %p74, %p75
    %p77 = scmp.ne.s32.totalorder %s63, %s64
    %p78 = scmp.eq.s32.totalorder %s16, 1
    %p79 = por %p77, %p78
    %p81 = scmp.ne.s32.totalorder %s64, %s80
    %p82 = scmp.eq.s32.totalorder %s16, 0
    %p83 = por %p81, %p82
    %s85 = sadd.s32 %s84, 1
    %p88 = scmp.eq.s32.totalorder %s10, 1
    %p89 = scmp.ne.s32.totalorder %s84, %s86
    %p90 = scmp.eq.s32.totalorder %s10, 0
    %p91 = por %p89, %p90
    %p92 = scmp.ne.s32.totalorder %s84, %s86
    %p93 = scmp.eq.s32.totalorder %s15, 1
    %p94 = por %p92, %p93
    %p95 = scmp.ne.s32.totalorder %s86, %s87
    %p96 = scmp.eq.s32.totalorder %s15, 0
    %p97 = por %p95, %p96
    %p98 = scmp.ne.s32.totalorder %s86, %s87
    %p99 = scmp.eq.s32.totalorder %s16, 1
    %p100 = por %p98, %p99
    %p102 = scmp.ne.s32.totalorder %s87, %s101
    %p103 = scmp.eq.s32.totalorder %s16, 0
    %p104 = por %p102, %p103
    %s106 = sadd.s32 %s105, 1
    %p109 = scmp.eq.s32.totalorder %s10, 1
    %p110 = scmp.ne.s32.totalorder %s105, %s107
    %p111 = scmp.eq.s32.totalorder %s10, 0
    %p112 = por %p110, %p111
    %p113 = scmp.ne.s32.totalorder %s105, %s107
    %p114 = scmp.eq.s32.totalorder %s15, 1
    %p115 = por %p113, %p114
    %p116 = scmp.ne.s32.totalorder %s107, %s108
    %p117 = scmp.eq.s32.totalorder %s15, 0
    %p118 = por %p116, %p117
    %p119 = scmp.ne.s32.totalorder %s107, %s108
    %p120 = scmp.eq.s32.totalorder %s16, 1
    %p121 = por %p119, %p120
    %p123 = scmp.ne.s32.totalorder %s108, %s122
    %p124 = scmp.eq.s32.totalorder %s16, 0
    %p125 = por %p123, %p124
    %s126 = ssub.s32 %s18, %s25
    %s127 = ssub.s32 %s17, %s29
    %s128 = sor.u32 %s126, %s127
    %p129 = scmp.eq.s32.totalorder %s128, 0
    %s131 = sadd.s32 %s130, 1
    %s132 = scalar_select %p129, %s130, %s131
    %p135 = pneg %p129
    %p136 = scmp.eq.s32.totalorder %s10, 1
    %p137 = por %p135, %p136
    %p138 = scmp.ne.s32.totalorder %s130, %s133
    %p139 = scmp.eq.s32.totalorder %s10, 0
    %p140 = por %p138, %p139
    %p141 = scmp.ne.s32.totalorder %s130, %s133
    %p142 = scmp.eq.s32.totalorder %s15, 1
    %p143 = por %p141, %p142
    %p144 = scmp.ne.s32.totalorder %s133, %s134
    %p145 = scmp.eq.s32.totalorder %s15, 0
    %p146 = por %p144, %p145
    %p147 = scmp.ne.s32.totalorder %s133, %s134
    %p148 = scmp.eq.s32.totalorder %s16, 1
    %p149 = por %p147, %p148
    %p151 = scmp.ne.s32.totalorder %s134, %s150
    %p152 = scmp.eq.s32.totalorder %s16, 0
    %p153 = por %p151, %p152
    %p154 = scmp.le.s32.totalorder 1, %s10
    %p155 = scmp.lt.s32.totalorder %s10, 3
    %p156 = pnand %p154, %p155
    %p157 = pneg %p156
    // Predicated region
    $region9: #{wno2d_forward.10} parent=5 // pred_check
      _
    $region10: #{wno2d_forward.10} parent=5 // pred_check_branch
      %159 = sbr.rel (%p156) target = $region12
    $region11: #{wno2d_forward.10} parent=5 // pred_region
      %s160 = ssub.s32 %s10, 1
      // Predicated region
      $region13: #{wno2d_forward.10} parent=11 // pred_check
        %p161 = pneg %p76
      $region14: #{wno2d_forward.10} parent=11 // pred_check_branch
        %163 = sbr.rel (%p161) target = $region16
      $region15: #{wno2d_forward.10} parent=11 // pred_region
        %s164 = smul.u32 2, %s19
        %p165 = scmp.lt.s32.totalorder %s164, 1
        %s166 = scalar_select %p165, %s164, 1
        %s167 = smul.addr %s166, 2
        %s168 = scalar_lea.vmem %s1, %s167
        %s169 = smul.u32 2, %s19
      $region16: #{wno2d_forward.10} parent=11 // pred_fallthru
        _
      // Predicated region
      $region17: #{wno2d_forward.10} parent=11 // pred_check
        %p170 = pneg %p97
      $region18: #{wno2d_forward.10} parent=11 // pred_check_branch
        %172 = sbr.rel (%p170) target = $region20
      $region19: #{wno2d_forward.10} parent=11 // pred_region
        _
      $region20: #{wno2d_forward.10} parent=11 // pred_fallthru
        _
      // Predicated region
      $region21: #{wno2d_forward.10} parent=11 // pred_check
        %p173 = pneg %p118
      $region22: #{wno2d_forward.10} parent=11 // pred_check_branch
        %175 = sbr.rel (%p173) target = $region24
      $region23: #{wno2d_forward.10} parent=11 // pred_region
        _
      $region24: #{wno2d_forward.10} parent=11 // pred_fallthru
        _
    $region12: #{wno2d_forward.10} parent=5 // pred_fallthru
      _
    %p176 = scmp.lt.s32.totalorder %s10, 2
    // Predicated region
    $region25: #{wno2d_forward.10} parent=5 // pred_check
      %p177 = pneg %p176
    $region26: #{wno2d_forward.10} parent=5 // pred_check_branch
      %179 = sbr.rel (%p177) target = $region28
    $region27: #{wno2d_forward.10} parent=5 // pred_region
      // Predicated region
      $region29: #{wno2d_forward.10} parent=27 // pred_check
        %p180 = pneg %p44
      $region30: #{wno2d_forward.10} parent=27 // pred_check_branch
        %182 = sbr.rel (%p180) target = $region32
      $region31: #{wno2d_forward.10} parent=27 // pred_region
        %s183 = smul.u32 2, %s17
        %p184 = scmp.lt.s32.totalorder %s18, 1
        %s185 = scalar_select %p184, %s18, 1
        %p186 = scmp.lt.s32.totalorder %s183, 1
        %s187 = scalar_select %p186, %s183, 1
        %s188 = smul.addr %s185, 2
        %s189 = sadd.s32 %s187, %s188
        %s190 = scalar_lea.vmem %s0, %s189
        %s191 = smul.u32 2, %s17
      $region32: #{wno2d_forward.10} parent=27 // pred_fallthru
        _
    $region28: #{wno2d_forward.10} parent=5 // pred_fallthru
      _
    %p192 = scmp.le.s32.totalorder 1, %s10
    %p193 = scmp.lt.s32.totalorder %s10, 3
    %p194 = pnand %p192, %p193
    %p195 = pneg %p194
    // Predicated region
    $region33: #{wno2d_forward.10} parent=5 // pred_check
      _
    $region34: #{wno2d_forward.10} parent=5 // pred_check_branch
      %197 = sbr.rel (%p194) target = $region36
    $region35: #{wno2d_forward.10} parent=5 // pred_region
      %s198 = ssub.s32 %s10, 1
      %s199 = smul.u32 2, %s19
      %p200 = scmp.lt.s32.totalorder %s20, 1
      %s201 = scalar_select %p200, %s20, 1
      %p202 = scmp.lt.s32.totalorder %s199, 1
      %s203 = scalar_select %p202, %s199, 1
      %s204 = smul.addr %s201, 2
      %s205 = sadd.s32 %s203, %s204
      %s206 = scalar_lea.vmem %s0, %s205
      %p207 = pneg %p50
      %p208 = pneg %p47
      %s209 = smul.u32 2, %s19
      %p210 = scmp.lt.s32.totalorder %s209, 1
      %s211 = scalar_select %p210, %s209, 1
      %s212 = smul.addr %s211, 2
      %s213 = scalar_lea.vmem %s1, %s212
      %p214 = pneg %p76
      %p215 = pneg %p73
      %p216 = pneg %p97
      %p217 = pneg %p94
      %p218 = pneg %p118
      %p219 = pneg %p115
      %p220 = pneg %p146
      %p221 = pneg %p143
      %s222 = smul.u32 2, %s19
      %p223 = scmp.lt.s32.totalorder %s20, 1
      %s224 = scalar_select %p223, %s20, 1
      %p225 = scmp.lt.s32.totalorder %s222, 1
      %s226 = scalar_select %p225, %s222, 1
      %s227 = smul.addr %s224, 8
      %s228 = sadd.s32 %s226, %s227
      %s229 = smul.addr %s228, 8
      %s230 = scalar_lea.vmem %s4, %s229
      %s231 = smul.u32 2, %s19
      %p232 = scmp.lt.s32.totalorder %s20, 1
      %s233 = scalar_select %p232, %s20, 1
      %p234 = scmp.lt.s32.totalorder %s231, 1
      %s235 = scalar_select %p234, %s231, 1
      %s236 = smul.addr %s233, 2
      %s237 = sadd.s32 %s235, %s236
      %s238 = scalar_lea.vmem %s0, %s237
      %s239 = smul.u32 2, %s19
      %s240 = smul.u32 2, %s19
      %p241 = scmp.lt.s32.totalorder %s240, 1
      %s242 = scalar_select %p241, %s240, 1
      %s243 = smul.addr %s242, 2
      %s244 = scalar_lea.vmem %s1, %s243
      %s245 = smul.u32 2, %s19
      %s246 = smul.u32 2, %s19
      %p247 = scmp.lt.s32.totalorder %s20, 1
      %s248 = scalar_select %p247, %s20, 1
      %p249 = scmp.lt.s32.totalorder %s246, 1
      %s250 = scalar_select %p249, %s246, 1
      %s251 = smul.addr %s248, 8
      %s252 = sadd.s32 %s250, %s251
      %s253 = smul.addr %s252, 8
      %s254 = scalar_lea.vmem %s4, %s253
      %s255 = smul.u32 2, %s19
      %v256 = vld [vmem:[%s238] sm:$0x3]
      %v257 = vld [vmem:[%s244] sm:$0xf]
      %v258 = vld [vmem:[%s2] sm:$0xff]
      %v259 = vld [vmem:[%s2 + $0x8] sm:$0xff]
      %v260 = vld [vmem:[%s2 + $0x10] sm:$0xff]
      %v261 = vld [vmem:[%s2 + $0x18] sm:$0xff]
      %263 = vset.pattern.permute.xlu0 0
      %264 = vperm.xlu0 %263, %v258
      %v265 = vpop.permute.xlu0 %264
      %268 = vset.pattern.permute.xlu0 0
      %269 = vperm.xlu0 %268, %v259
      %v270 = vpop.permute.xlu0 %269
      %273 = vset.pattern.permute.xlu0 0
      %274 = vperm.xlu0 %273, %v260
      %v275 = vpop.permute.xlu0 %274
      %278 = vset.pattern.permute.xlu0 0
      %279 = vperm.xlu0 %278, %v261
      %v280 = vpop.permute.xlu0 %279
      %v283 = vlaneseq
      %v284 = vshrl.u32 %v283, 7
      %v285 = vsub.s32 0, %v284
      %v286 = vrot.slane %v256, %v285
      %v287 = vlaneseq
      %v288 = vshrl.u32 %v287, 7
      %v289 = vsub.s32 1, %v288
      %v290 = vrot.slane %v256, %v289
      %v293 = vmul.f32 %v265, %v286
      %v294 = vmul.f32 %v265, %v290
      %v295 = vmul.f32 %v270, %v286
      %v296 = vmul.f32 %v270, %v290
      %v297 = vmul.f32 %v275, %v286
      %v298 = vmul.f32 %v275, %v290
      %v299 = vmul.f32 %v280, %v286
      %v300 = vmul.f32 %v280, %v290
      %301 = vset.pattern.permute.xlu0 1
      %302 = vperm.xlu0 %301, %v258
      %v303 = vpop.permute.xlu0 %302
      %305 = vset.pattern.permute.xlu0 1
      %306 = vperm.xlu0 %305, %v259
      %v307 = vpop.permute.xlu0 %306
      %309 = vset.pattern.permute.xlu0 1
      %310 = vperm.xlu0 %309, %v260
      %v311 = vpop.permute.xlu0 %310
      %313 = vset.pattern.permute.xlu0 1
      %314 = vperm.xlu0 %313, %v261
      %v315 = vpop.permute.xlu0 %314
      %v318 = vlaneseq
      %v319 = vshrl.u32 %v318, 7
      %v320 = vsub.s32 0, %v319
      %v321 = vrot.slane %v257, %v320
      %v322 = vlaneseq
      %v323 = vshrl.u32 %v322, 7
      %v324 = vsub.s32 2, %v323
      %v325 = vrot.slane %v257, %v324
      %v328 = vlaneseq
      %v329 = vshrl.u32 %v328, 7
      %v330 = vsub.s32 0, %v329
      %v331 = vrot.slane %v321, %v330
      %v332 = vlaneseq
      %v333 = vshrl.u32 %v332, 7
      %v334 = vsub.s32 0, %v333
      %v335 = vrot.slane %v325, %v334
      %v336 = vmul.f32 %v303, %v331
      %v337 = vmul.f32 %v303, %v335
      %v338 = vmul.f32 %v307, %v331
      %v339 = vmul.f32 %v307, %v335
      %v340 = vmul.f32 %v311, %v331
      %v341 = vmul.f32 %v311, %v335
      %v342 = vmul.f32 %v315, %v331
      %v343 = vmul.f32 %v315, %v335
      %v344 = vadd.f32 %v293, %v336
      %v345 = vadd.f32 %v294, %v337
      %v346 = vadd.f32 %v295, %v338
      %v347 = vadd.f32 %v296, %v339
      %v348 = vadd.f32 %v297, %v340
      %v349 = vadd.f32 %v298, %v341
      %v350 = vadd.f32 %v299, %v342
      %v351 = vadd.f32 %v300, %v343
      %352 = vset.pattern.permute.xlu0 2
      %353 = vperm.xlu0 %352, %v258
      %v354 = vpop.permute.xlu0 %353
      %356 = vset.pattern.permute.xlu0 2
      %357 = vperm.xlu0 %356, %v259
      %v358 = vpop.permute.xlu0 %357
      %360 = vset.pattern.permute.xlu0 2
      %361 = vperm.xlu0 %360, %v260
      %v362 = vpop.permute.xlu0 %361
      %364 = vset.pattern.permute.xlu0 2
      %365 = vperm.xlu0 %364, %v261
      %v366 = vpop.permute.xlu0 %365
      %v368 = vlaneseq
      %v369 = vshrl.u32 %v368, 7
      %v370 = vsub.s32 1, %v369
      %v371 = vrot.slane %v257, %v370
      %v372 = vlaneseq
      %v373 = vshrl.u32 %v372, 7
      %v374 = vsub.s32 3, %v373
      %v375 = vrot.slane %v257, %v374
      %v378 = vlaneseq
      %v379 = vshrl.u32 %v378, 7
      %v380 = vsub.s32 1, %v379
      %v381 = vrot.slane %v371, %v380
      %v382 = vlaneseq
      %v383 = vshrl.u32 %v382, 7
      %v384 = vsub.s32 1, %v383
      %v385 = vrot.slane %v375, %v384
      %v386 = vmul.f32 %v354, %v381
      %v387 = vmul.f32 %v354, %v385
      %v388 = vmul.f32 %v358, %v381
      %v389 = vmul.f32 %v358, %v385
      %v390 = vmul.f32 %v362, %v381
      %v391 = vmul.f32 %v362, %v385
      %v392 = vmul.f32 %v366, %v381
      %v393 = vmul.f32 %v366, %v385
      %v394 = vadd.f32 %v344, %v386
      %v395 = vadd.f32 %v345, %v387
      %v396 = vadd.f32 %v346, %v388
      %v397 = vadd.f32 %v347, %v389
      %v398 = vadd.f32 %v348, %v390
      %v399 = vadd.f32 %v349, %v391
      %v400 = vadd.f32 %v350, %v392
      %v401 = vadd.f32 %v351, %v393
      %v402 = vld [vmem:[%s3] sm:$0xff]
      %v403 = vld [vmem:[%s3 + $0x8] sm:$0xff]
      %v404 = vld [vmem:[%s3 + $0x10] sm:$0xff]
      %v405 = vld [vmem:[%s3 + $0x18] sm:$0xff]
      %407 = vset.pattern.permute.xlu0 0
      %408 = vperm.xlu0 %407, %v402
      %v409 = vpop.permute.xlu0 %408
      %412 = vset.pattern.permute.xlu0 0
      %413 = vperm.xlu0 %412, %v403
      %v414 = vpop.permute.xlu0 %413
      %417 = vset.pattern.permute.xlu0 0
      %418 = vperm.xlu0 %417, %v404
      %v419 = vpop.permute.xlu0 %418
      %422 = vset.pattern.permute.xlu0 0
      %423 = vperm.xlu0 %422, %v405
      %v424 = vpop.permute.xlu0 %423
      %v426 = vadd.f32 %v394, %v409
      %v427 = vadd.f32 %v395, %v409
      %v428 = vadd.f32 %v396, %v414
      %v429 = vadd.f32 %v397, %v414
      %v430 = vadd.f32 %v398, %v419
      %v431 = vadd.f32 %v399, %v419
      %v432 = vadd.f32 %v400, %v424
      %v433 = vadd.f32 %v401, %v424
      %434 = vst [vmem:[%s254] sm:$0xff] %v426
      %435 = vst [vmem:[%s254 + $0x8] sm:$0xff] %v427
      %436 = vst [vmem:[%s254 + $0x10] sm:$0xff] %v428
      %437 = vst [vmem:[%s254 + $0x18] sm:$0xff] %v429
      %438 = vst [vmem:[%s254 + $0x20] sm:$0xff] %v430
      %439 = vst [vmem:[%s254 + $0x28] sm:$0xff] %v431
      %440 = vst [vmem:[%s254 + $0x30] sm:$0xff] %v432
      %441 = vst [vmem:[%s254 + $0x38] sm:$0xff] %v433
      %s442 = smul.u32 2, %s19
      %p443 = scmp.lt.s32.totalorder %s20, 1
      %s444 = scalar_select %p443, %s20, 1
      %p445 = scmp.lt.s32.totalorder %s442, 1
      %s446 = scalar_select %p445, %s442, 1
      %s447 = smul.addr %s444, 8
      %s448 = sadd.s32 %s446, %s447
      %s449 = smul.addr %s448, 8
      %s450 = scalar_lea.vmem %s4, %s449
      // Predicated region
      $region37: #{wno2d_forward.10} parent=35 // pred_check
        %p451 = pneg %p143
      $region38: #{wno2d_forward.10} parent=35 // pred_check_branch
        %453 = sbr.rel (%p451) target = $region40
      $region39: #{wno2d_forward.10} parent=35 // pred_region
        %s454 = smul.u32 2, %s19
      $region40: #{wno2d_forward.10} parent=35 // pred_fallthru
        _
    $region36: #{wno2d_forward.10} parent=5 // pred_fallthru
      _
    %p455 = scmp.le.s32.totalorder 2, %s10
    // Predicated region
    $region41: #{wno2d_forward.10} parent=5 // pred_check
      %p456 = pneg %p455
    $region42: #{wno2d_forward.10} parent=5 // pred_check_branch
      %458 = sbr.rel (%p456) target = $region44
    $region43: #{wno2d_forward.10} parent=5 // pred_region
      %s459 = ssub.s32 %s10, 2
      // Predicated region
      $region45: #{wno2d_forward.10} parent=43 // pred_check
        %p460 = pneg %p149
      $region46: #{wno2d_forward.10} parent=43 // pred_check_branch
        %462 = sbr.rel (%p460) target = $region48
      $region47: #{wno2d_forward.10} parent=43 // pred_region
        %s463 = smul.u32 2, %s21
        %p464 = scmp.lt.s32.totalorder %s22, 1
        %s465 = scalar_select %p464, %s22, 1
        %p466 = scmp.lt.s32.totalorder %s463, 1
        %s467 = scalar_select %p466, %s463, 1
        %s468 = smul.addr %s465, 8
        %s469 = sadd.s32 %s467, %s468
        %s470 = smul.addr %s469, 8
        %s471 = scalar_lea.vmem %s4, %s470
      $region48: #{wno2d_forward.10} parent=43 // pred_fallthru
        _
    $region44: #{wno2d_forward.10} parent=5 // pred_fallthru
      _
  $region6: #{wno2d_forward.10} parent=0 // loop_footer
    %s14 = sadd.s32 1, %s10
  $region7: #{wno2d_forward.10} parent=0 // loop_footer_branch
    %9 = sbr.rel target = $region3
  $region8: #{wno2d_forward.10} parent=0 // loop_exit
    _

// kernel: wno2d_forward.11
$region0: #{wno2d_forward.11}
  #allocation0 [shape = 'u32[]', space=smem, size = 0x4, offset = 0x4, fixed_abs, tag = 'smem constant byte address 0x4 - core index']
  #allocation1 [shape = 'u32[144,128]{1,0:T(1,128)}', space=vmem, size = 0x12000, scoped, tag = 'internal scratch']
  %s0 = inlined_call_operand.vmem [shape: f32[4,2,32,128], index: 0, kind: input, shape index: {}]
  %s1 = inlined_call_operand.vmem [shape: bf16[4,32,32,128], index: 1, kind: input, shape index: {}]
  %s2 = inlined_call_operand.vmem [shape: f32[4,2,32,128], index: 2, kind: output, shape index: {}]
  %s3 = sld [smem:[#allocation0]]
  $region48: #{wno2d_forward.11} parent=0
    _
  %s5 = ssub.s32 1, %s3
  %s6 = scalar_select 0, %s5, %s3
  loop: start=0, step=1, limit=10
  $region2: #{wno2d_forward.11} parent=0 // loop_pre_header
    _
  $region3: #{wno2d_forward.11} parent=0 // loop_header
    %s8 = sphi 0, %s12
    %p9 = scmp.ge.s32.totalorder %s8, 10
    %s15 = sphi 0, %s34
    %s16 = sphi 0, %s30
    %s17 = sphi 0, %s26
    %s18 = sphi 0, %s15
    %s19 = sphi 0, %s16
    %s20 = sphi 0, %s17
    %s21 = sphi 0, %s18
    %s22 = sphi 0, %s19
    %s23 = sphi 0, %s20
    %s41 = sphi 0, %s43
    %s44 = sphi 0, %s41
    %s45 = sphi 0, %s44
    %s61 = sphi 0, %s45
    %s69 = sphi 0, %s71
    %s72 = sphi 0, %s69
    %s73 = sphi 0, %s72
    %s89 = sphi 0, %s73
    %s99 = sphi 0, %s101
    %s102 = sphi 0, %s99
    %s103 = sphi 0, %s102
    %s119 = sphi 0, %s103
  $region4: #{wno2d_forward.11} parent=0 // loop_header_branch
    %11 = sbr.rel (%p9) target = $region8
  $region5: #{wno2d_forward.11} parent=0 // loop_body
    %s13 = ssub.s32 %s8, 1
    %s14 = ssub.s32 %s8, 2
    %s24 = sadd.s32 1, %s17
    %p25 = scmp.ge.s32.totalorder %s24, 2
    %s26 = scalar_select %p25, 0, %s24
    %s27 = sadd.s32 1, %s16
    %s28 = scalar_select %p25, %s27, %s16
    %p29 = scmp.ge.s32.totalorder %s28, 1
    %s30 = scalar_select %p29, 0, %s28
    %s31 = sadd.s32 1, %s15
    %s32 = scalar_select %p29, %s31, %s15
    %p33 = scmp.ge.s32.totalorder %s32, 4
    %s34 = scalar_select %p33, 0, %s32
    %s35 = ssub.s32 %s15, %s34
    %s36 = ssub.s32 %s17, %s26
    %s37 = sor.u32 %s35, %s36
    %s38 = ssub.s32 %s16, %s30
    %s39 = sor.u32 %s37, %s38
    %p40 = scmp.eq.s32.totalorder %s39, 0
    %s42 = sadd.s32 %s41, 1
    %s43 = scalar_select %p40, %s41, %s42
    %p46 = pneg %p40
    %p47 = scmp.eq.s32.totalorder %s8, 7
    %p48 = por %p46, %p47
    %p49 = scmp.ne.s32.totalorder %s41, %s44
    %p50 = scmp.eq.s32.totalorder %s8, 0
    %p51 = por %p49, %p50
    %p52 = scmp.ne.s32.totalorder %s41, %s44
    %p53 = scmp.eq.s32.totalorder %s13, 7
    %p54 = por %p52, %p53
    %p55 = scmp.ne.s32.totalorder %s44, %s45
    %p56 = scmp.eq.s32.totalorder %s13, 0
    %p57 = por %p55, %p56
    %p58 = scmp.ne.s32.totalorder %s44, %s45
    %p59 = scmp.eq.s32.totalorder %s14, 7
    %p60 = por %p58, %p59
    %p62 = scmp.ne.s32.totalorder %s45, %s61
    %p63 = scmp.eq.s32.totalorder %s14, 0
    %p64 = por %p62, %p63
    %s65 = ssub.s32 %s15, %s34
    %s66 = ssub.s32 %s16, %s30
    %s67 = sor.u32 %s65, %s66
    %p68 = scmp.eq.s32.totalorder %s67, 0
    %s70 = sadd.s32 %s69, 1
    %s71 = scalar_select %p68, %s69, %s70
    %p74 = pneg %p68
    %p75 = scmp.eq.s32.totalorder %s8, 7
    %p76 = por %p74, %p75
    %p77 = scmp.ne.s32.totalorder %s69, %s72
    %p78 = scmp.eq.s32.totalorder %s8, 0
    %p79 = por %p77, %p78
    %p80 = scmp.ne.s32.totalorder %s69, %s72
    %p81 = scmp.eq.s32.totalorder %s13, 7
    %p82 = por %p80, %p81
    %p83 = scmp.ne.s32.totalorder %s72, %s73
    %p84 = scmp.eq.s32.totalorder %s13, 0
    %p85 = por %p83, %p84
    %p86 = scmp.ne.s32.totalorder %s72, %s73
    %p87 = scmp.eq.s32.totalorder %s14, 7
    %p88 = por %p86, %p87
    %p90 = scmp.ne.s32.totalorder %s73, %s89
    %p91 = scmp.eq.s32.totalorder %s14, 0
    %p92 = por %p90, %p91
    %s93 = ssub.s32 %s15, %s34
    %s94 = ssub.s32 %s17, %s26
    %s95 = sor.u32 %s93, %s94
    %s96 = ssub.s32 %s16, %s30
    %s97 = sor.u32 %s95, %s96
    %p98 = scmp.eq.s32.totalorder %s97, 0
    %s100 = sadd.s32 %s99, 1
    %s101 = scalar_select %p98, %s99, %s100
    %p104 = pneg %p98
    %p105 = scmp.eq.s32.totalorder %s8, 7
    %p106 = por %p104, %p105
    %p107 = scmp.ne.s32.totalorder %s99, %s102
    %p108 = scmp.eq.s32.totalorder %s8, 0
    %p109 = por %p107, %p108
    %p110 = scmp.ne.s32.totalorder %s99, %s102
    %p111 = scmp.eq.s32.totalorder %s13, 7
    %p112 = por %p110, %p111
    %p113 = scmp.ne.s32.totalorder %s102, %s103
    %p114 = scmp.eq.s32.totalorder %s13, 0
    %p115 = por %p113, %p114
    %p116 = scmp.ne.s32.totalorder %s102, %s103
    %p117 = scmp.eq.s32.totalorder %s14, 7
    %p118 = por %p116, %p117
    %p120 = scmp.ne.s32.totalorder %s103, %s119
    %p121 = scmp.eq.s32.totalorder %s14, 0
    %p122 = por %p120, %p121
    %p123 = scmp.le.s32.totalorder 1, %s8
    %p124 = scmp.lt.s32.totalorder %s8, 9
    %p125 = pnand %p123, %p124
    %p126 = pneg %p125
    // Predicated region
    $region9: #{wno2d_forward.11} parent=5 // pred_check
      _
    $region10: #{wno2d_forward.11} parent=5 // pred_check_branch
      %128 = sbr.rel (%p125) target = $region12
    $region11: #{wno2d_forward.11} parent=5 // pred_region
      %s129 = ssub.s32 %s8, 1
    $region12: #{wno2d_forward.11} parent=5 // pred_fallthru
      _
    %p130 = scmp.lt.s32.totalorder %s8, 8
    // Predicated region
    $region13: #{wno2d_forward.11} parent=5 // pred_check
      %p131 = pneg %p130
    $region14: #{wno2d_forward.11} parent=5 // pred_check_branch
      %133 = sbr.rel (%p131) target = $region16
    $region15: #{wno2d_forward.11} parent=5 // pred_region
      // Predicated region
      $region17: #{wno2d_forward.11} parent=15 // pred_check
        %p134 = pneg %p51
      $region18: #{wno2d_forward.11} parent=15 // pred_check_branch
        %136 = sbr.rel (%p134) target = $region20
      $region19: #{wno2d_forward.11} parent=15 // pred_region
        %p137 = scmp.lt.s32.totalorder %s15, 3
        %s138 = scalar_select %p137, %s15, 3
        %p139 = scmp.lt.s32.totalorder %s17, 1
        %s140 = scalar_select %p139, %s17, 1
        %p141 = scmp.lt.s32.totalorder %s16, 0
        %s142 = scalar_select %p141, %s16, 0
        %s143 = smul.addr %s140, 4
        %s144 = sadd.s32 %s142, %s143
        %s145 = smul.addr %s138, 8
        %s146 = sadd.s32 %s144, %s145
        %s147 = smul.addr %s146, 8
        %s148 = scalar_lea.vmem %s0, %s147
      $region20: #{wno2d_forward.11} parent=15 // pred_fallthru
        _
      // Predicated region
      $region21: #{wno2d_forward.11} parent=15 // pred_check
        %p149 = pneg %p79
      $region22: #{wno2d_forward.11} parent=15 // pred_check_branch
        %151 = sbr.rel (%p149) target = $region24
      $region23: #{wno2d_forward.11} parent=15 // pred_region
        %p152 = scmp.lt.s32.totalorder %s15, 3
        %s153 = scalar_select %p152, %s15, 3
        %p154 = scmp.lt.s32.totalorder %s16, 0
        %s155 = scalar_select %p154, %s16, 0
        %s156 = smul.addr %s153, 128
        %s157 = sadd.s32 %s155, %s156
        %s158 = smul.addr %s157, 4
        %s159 = scalar_lea.vmem %s1, %s158
      $region24: #{wno2d_forward.11} parent=15 // pred_fallthru
        _
    $region16: #{wno2d_forward.11} parent=5 // pred_fallthru
      _
    %p160 = scmp.le.s32.totalorder 1, %s8
    %p161 = scmp.lt.s32.totalorder %s8, 9
    %p162 = pnand %p160, %p161
    %p163 = pneg %p162
    // Predicated region
    $region25: #{wno2d_forward.11} parent=5 // pred_check
      _
    $region26: #{wno2d_forward.11} parent=5 // pred_check_branch
      %165 = sbr.rel (%p162) target = $region28
    $region27: #{wno2d_forward.11} parent=5 // pred_region
      %s166 = ssub.s32 %s8, 1
      %p167 = scmp.lt.s32.totalorder %s18, 3
      %s168 = scalar_select %p167, %s18, 3
      %p169 = scmp.lt.s32.totalorder %s20, 1
      %s170 = scalar_select %p169, %s20, 1
      %p171 = scmp.lt.s32.totalorder %s19, 0
      %s172 = scalar_select %p171, %s19, 0
      %s173 = smul.addr %s170, 4
      %s174 = sadd.s32 %s172, %s173
      %s175 = smul.addr %s168, 8
      %s176 = sadd.s32 %s174, %s175
      %s177 = smul.addr %s176, 8
      %s178 = scalar_lea.vmem %s0, %s177
      %p179 = pneg %p57
      %p180 = pneg %p54
      %p181 = scmp.lt.s32.totalorder %s18, 3
      %s182 = scalar_select %p181, %s18, 3
      %p183 = scmp.lt.s32.totalorder %s19, 0
      %s184 = scalar_select %p183, %s19, 0
      %s185 = smul.addr %s182, 128
      %s186 = sadd.s32 %s184, %s185
      %s187 = smul.addr %s186, 4
      %s188 = scalar_lea.vmem %s1, %s187
      %p189 = pneg %p85
      %p190 = pneg %p82
      %p191 = pneg %p115
      %p192 = pneg %p112
      %p193 = scmp.lt.s32.totalorder %s18, 3
      %s194 = scalar_select %p193, %s18, 3
      %p195 = scmp.lt.s32.totalorder %s20, 1
      %s196 = scalar_select %p195, %s20, 1
      %p197 = scmp.lt.s32.totalorder %s19, 0
      %s198 = scalar_select %p197, %s19, 0
      %s199 = smul.addr %s196, 4
      %s200 = sadd.s32 %s198, %s199
      %s201 = smul.addr %s194, 8
      %s202 = sadd.s32 %s200, %s201
      %s203 = smul.addr %s202, 8
      %s204 = scalar_lea.vmem %s2, %s203
      %p205 = scmp.lt.s32.totalorder %s18, 3
      %s206 = scalar_select %p205, %s18, 3
      %p207 = scmp.lt.s32.totalorder %s20, 1
      %s208 = scalar_select %p207, %s20, 1
      %p209 = scmp.lt.s32.totalorder %s19, 0
      %s210 = scalar_select %p209, %s19, 0
      %s211 = smul.addr %s208, 4
      %s212 = sadd.s32 %s210, %s211
      %s213 = smul.addr %s206, 8
      %s214 = sadd.s32 %s212, %s213
      %s215 = smul.addr %s214, 8
      %s216 = scalar_lea.vmem %s0, %s215
      %p217 = scmp.lt.s32.totalorder %s18, 3
      %s218 = scalar_select %p217, %s18, 3
      %p219 = scmp.lt.s32.totalorder %s19, 0
      %s220 = scalar_select %p219, %s19, 0
      %s221 = smul.addr %s218, 128
      %s222 = sadd.s32 %s220, %s221
      %s223 = smul.addr %s222, 4
      %s224 = scalar_lea.vmem %s1, %s223
      %p225 = scmp.lt.s32.totalorder %s18, 3
      %s226 = scalar_select %p225, %s18, 3
      %p227 = scmp.lt.s32.totalorder %s20, 1
      %s228 = scalar_select %p227, %s20, 1
      %p229 = scmp.lt.s32.totalorder %s19, 0
      %s230 = scalar_select %p229, %s19, 0
      %s231 = smul.addr %s228, 4
      %s232 = sadd.s32 %s230, %s231
      %s233 = smul.addr %s226, 8
      %s234 = sadd.s32 %s232, %s233
      %s235 = smul.addr %s234, 8
      %s236 = scalar_lea.vmem %s2, %s235
      loop: start=0, step=1, limit=32
      $region29: #{wno2d_forward.11} parent=27 // loop_pre_header
        _
      $region30: #{wno2d_forward.11} parent=27 // loop_header
        %s238 = sphi 0, %s242
        %p239 = scmp.ge.s32.totalorder %s238, 32
        %v243 = vphi 0.0, %v270
        %v244 = vphi 0.0, %v271
        %v245 = vphi 0.0, %v272
        %v246 = vphi 0.0, %v273
      $region31: #{wno2d_forward.11} parent=27 // loop_header_branch
        %241 = sbr.rel (%p239) target = $region35
      $region32: #{wno2d_forward.11} parent=27 // loop_body
        %s247 = sadd.s32 0, %s238
        %s248 = scalar_lea.vmem %s216, %s247
        %v249 = vld [vmem:[%s248] sm:$0x1]
        %s250 = smul.u32 %s238, 4
        %s251 = sadd.s32 0, %s250
        %s252 = smul.addr %s251, 4
        %s253 = scalar_lea.vmem %s224, %s252
        %v254 = vld [vmem:[%s253] sm:$0xf]
        %v255 = vld [vmem:[%s253 + $0x4] sm:$0xf]
        %v256 = vld [vmem:[%s253 + $0x8] sm:$0xf]
        %v257 = vld [vmem:[%s253 + $0xc] sm:$0xf]
        %v258 = vunpack.c.l.bf16 %v254
        %v259 = vunpack.c.l.bf16 %v255
        %v260 = vunpack.c.l.bf16 %v256
        %v261 = vunpack.c.l.bf16 %v257
        %v262 = vlaneseq
        %v263 = vshrl.u32 %v262, 7
        %v264 = vsub.s32 0, %v263
        %v265 = vrot.slane %v249, %v264
        %v266 = vmul.f32 %v265, %v258
        %v267 = vmul.f32 %v265, %v259
        %v268 = vmul.f32 %v265, %v260
        %v269 = vmul.f32 %v265, %v261
        %v270 = vadd.f32 %v243, %v266
        %v271 = vadd.f32 %v244, %v267
        %v272 = vadd.f32 %v245, %v268
        %v273 = vadd.f32 %v246, %v269
      $region33: #{wno2d_forward.11} parent=27 // loop_footer
        %s242 = sadd.s32 1, %s238
      $region34: #{wno2d_forward.11} parent=27 // loop_footer_branch
        %237 = sbr.rel target = $region30
      $region35: #{wno2d_forward.11} parent=27 // loop_exit
        _
      %274 = vst [vmem:[%s236] sm:$0xff] %v243
      %275 = vst [vmem:[%s236 + $0x8] sm:$0xff] %v244
      %276 = vst [vmem:[%s236 + $0x10] sm:$0xff] %v245
      %277 = vst [vmem:[%s236 + $0x18] sm:$0xff] %v246
      %p278 = scmp.lt.s32.totalorder %s18, 3
      %s279 = scalar_select %p278, %s18, 3
      %p280 = scmp.lt.s32.totalorder %s20, 1
      %s281 = scalar_select %p280, %s20, 1
      %p282 = scmp.lt.s32.totalorder %s19, 0
      %s283 = scalar_select %p282, %s19, 0
      %s284 = smul.addr %s281, 4
      %s285 = sadd.s32 %s283, %s284
      %s286 = smul.addr %s279, 8
      %s287 = sadd.s32 %s285, %s286
      %s288 = smul.addr %s287, 8
      %s289 = scalar_lea.vmem %s2, %s288
      // Predicated region
      $region36: #{wno2d_forward.11} parent=27 // pred_check
        %p290 = pneg %p112
      $region37: #{wno2d_forward.11} parent=27 // pred_check_branch
        %292 = sbr.rel (%p290) target = $region39
      $region38: #{wno2d_forward.11} parent=27 // pred_region
        _
      $region39: #{wno2d_forward.11} parent=27 // pred_fallthru
        _
    $region28: #{wno2d_forward.11} parent=5 // pred_fallthru
      _
    %p293 = scmp.le.s32.totalorder 2, %s8
    // Predicated region
    $region40: #{wno2d_forward.11} parent=5 // pred_check
      %p294 = pneg %p293
    $region41: #{wno2d_forward.11} parent=5 // pred_check_branch
      %296 = sbr.rel (%p294) target = $region43
    $region42: #{wno2d_forward.11} parent=5 // pred_region
      %s297 = ssub.s32 %s8, 2
      // Predicated region
      $region44: #{wno2d_forward.11} parent=42 // pred_check
        %p298 = pneg %p118
      $region45: #{wno2d_forward.11} parent=42 // pred_check_branch
        %300 = sbr.rel (%p298) target = $region47
      $region46: #{wno2d_forward.11} parent=42 // pred_region
        %p301 = scmp.lt.s32.totalorder %s21, 3
        %s302 = scalar_select %p301, %s21, 3
        %p303 = scmp.lt.s32.totalorder %s23, 1
        %s304 = scalar_select %p303, %s23, 1
        %p305 = scmp.lt.s32.totalorder %s22, 0
        %s306 = scalar_select %p305, %s22, 0
        %s307 = smul.addr %s304, 4
        %s308 = sadd.s32 %s306, %s307
        %s309 = smul.addr %s302, 8
        %s310 = sadd.s32 %s308, %s309
        %s311 = smul.addr %s310, 8
        %s312 = scalar_lea.vmem %s2, %s311
      $region47: #{wno2d_forward.11} parent=42 // pred_fallthru
        _
    $region43: #{wno2d_forward.11} parent=5 // pred_fallthru
      _
  $region6: #{wno2d_forward.11} parent=0 // loop_footer
    %s12 = sadd.s32 1, %s8
  $region7: #{wno2d_forward.11} parent=0 // loop_footer_branch
    %7 = sbr.rel target = $region3
  $region8: #{wno2d_forward.11} parent=0 // loop_exit
    _

// kernel: wno2d_forward.12
$region0: #{wno2d_forward.12}
  #allocation0 [shape = 'u32[]', space=smem, size = 0x4, offset = 0x4, fixed_abs, tag = 'smem constant byte address 0x4 - core index']
  #allocation1 [shape = 'u32[144,128]{1,0:T(1,128)}', space=vmem, size = 0x12000, scoped, tag = 'internal scratch']
  %s0 = inlined_call_operand.vmem [shape: f32[2,32,384], index: 0, kind: input, shape index: {}]
  %s1 = inlined_call_operand.vmem [shape: f32[2,32,384], index: 1, kind: input, shape index: {}]
  %s2 = inlined_call_operand.vmem [shape: f32[32,32], index: 2, kind: input, shape index: {}]
  %s3 = inlined_call_operand.vmem [shape: f32[32,1], index: 3, kind: input, shape index: {}]
  %s4 = inlined_call_operand.vmem [shape: f32[2,32,384], index: 4, kind: output, shape index: {}]
  %s5 = sld [smem:[#allocation0]]
  $region49: #{wno2d_forward.12} parent=0
    _
  %s7 = ssub.s32 1, %s5
  %s8 = scalar_select 0, %s7, %s5
  loop: start=0, step=1, limit=4
  $region2: #{wno2d_forward.12} parent=0 // loop_pre_header
    _
  $region3: #{wno2d_forward.12} parent=0 // loop_header
    %s10 = sphi 0, %s14
    %p11 = scmp.ge.s32.totalorder %s10, 4
    %s17 = sphi 0, %s29
    %s18 = sphi 0, %s25
    %s19 = sphi 0, %s17
    %s20 = sphi 0, %s18
    %s21 = sphi 0, %s19
    %s22 = sphi 0, %s20
    %s34 = sphi 0, %s36
    %s37 = sphi 0, %s34
    %s38 = sphi 0, %s37
    %s54 = sphi 0, %s38
    %s62 = sphi 0, %s64
    %s65 = sphi 0, %s62
    %s66 = sphi 0, %s65
    %s82 = sphi 0, %s66
    %s86 = sphi 0, %s86
    %s88 = sphi 0, %s86
    %s89 = sphi 0, %s88
    %s103 = sphi 0, %s89
    %s107 = sphi 0, %s107
    %s109 = sphi 0, %s107
    %s110 = sphi 0, %s109
    %s124 = sphi 0, %s110
    %s132 = sphi 0, %s134
    %s135 = sphi 0, %s132
    %s136 = sphi 0, %s135
    %s152 = sphi 0, %s136
  $region4: #{wno2d_forward.12} parent=0 // loop_header_branch
    %13 = sbr.rel (%p11) target = $region8
  $region5: #{wno2d_forward.12} parent=0 // loop_body
    %s15 = ssub.s32 %s10, 1
    %s16 = ssub.s32 %s10, 2
    %s23 = sadd.s32 1, %s18
    %p24 = scmp.ge.s32.totalorder %s23, 2
    %s25 = scalar_select %p24, 0, %s23
    %s26 = sadd.s32 1, %s17
    %s27 = scalar_select %p24, %s26, %s17
    %p28 = scmp.ge.s32.totalorder %s27, 1
    %s29 = scalar_select %p28, 0, %s27
    %s30 = ssub.s32 %s18, %s25
    %s31 = ssub.s32 %s17, %s29
    %s32 = sor.u32 %s30, %s31
    %p33 = scmp.eq.s32.totalorder %s32, 0
    %s35 = sadd.s32 %s34, 1
    %s36 = scalar_select %p33, %s34, %s35
    %p39 = pneg %p33
    %p40 = scmp.eq.s32.totalorder %s10, 1
    %p41 = por %p39, %p40
    %p42 = scmp.ne.s32.totalorder %s34, %s37
    %p43 = scmp.eq.s32.totalorder %s10, 0
    %p44 = por %p42, %p43
    %p45 = scmp.ne.s32.totalorder %s34, %s37
    %p46 = scmp.eq.s32.totalorder %s15, 1
    %p47 = por %p45, %p46
    %p48 = scmp.ne.s32.totalorder %s37, %s38
    %p49 = scmp.eq.s32.totalorder %s15, 0
    %p50 = por %p48, %p49
    %p51 = scmp.ne.s32.totalorder %s37, %s38
    %p52 = scmp.eq.s32.totalorder %s16, 1
    %p53 = por %p51, %p52
    %p55 = scmp.ne.s32.totalorder %s38, %s54
    %p56 = scmp.eq.s32.totalorder %s16, 0
    %p57 = por %p55, %p56
    %s58 = ssub.s32 %s18, %s25
    %s59 = ssub.s32 %s17, %s29
    %s60 = sor.u32 %s58, %s59
    %p61 = scmp.eq.s32.totalorder %s60, 0
    %s63 = sadd.s32 %s62, 1
    %s64 = scalar_select %p61, %s62, %s63
    %p67 = pneg %p61
    %p68 = scmp.eq.s32.totalorder %s10, 1
    %p69 = por %p67, %p68
    %p70 = scmp.ne.s32.totalorder %s62, %s65
    %p71 = scmp.eq.s32.totalorder %s10, 0
    %p72 = por %p70, %p71
    %p73 = scmp.ne.s32.totalorder %s62, %s65
    %p74 = scmp.eq.s32.totalorder %s15, 1
    %p75 = por %p73, %p74
    %p76 = scmp.ne.s32.totalorder %s65, %s66
    %p77 = scmp.eq.s32.totalorder %s15, 0
    %p78 = por %p76, %p77
    %p79 = scmp.ne.s32.totalorder %s65, %s66
    %p80 = scmp.eq.s32.totalorder %s16, 1
    %p81 = por %p79, %p80
    %p83 = scmp.ne.s32.totalorder %s66, %s82
    %p84 = scmp.eq.s32.totalorder %s16, 0
    %p85 = por %p83, %p84
    %s87 = sadd.s32 %s86, 1
    %p90 = scmp.eq.s32.totalorder %s10, 1
    %p91 = scmp.ne.s32.totalorder %s86, %s88
    %p92 = scmp.eq.s32.totalorder %s10, 0
    %p93 = por %p91, %p92
    %p94 = scmp.ne.s32.totalorder %s86, %s88
    %p95 = scmp.eq.s32.totalorder %s15, 1
    %p96 = por %p94, %p95
    %p97 = scmp.ne.s32.totalorder %s88, %s89
    %p98 = scmp.eq.s32.totalorder %s15, 0
    %p99 = por %p97, %p98
    %p100 = scmp.ne.s32.totalorder %s88, %s89
    %p101 = scmp.eq.s32.totalorder %s16, 1
    %p102 = por %p100, %p101
    %p104 = scmp.ne.s32.totalorder %s89, %s103
    %p105 = scmp.eq.s32.totalorder %s16, 0
    %p106 = por %p104, %p105
    %s108 = sadd.s32 %s107, 1
    %p111 = scmp.eq.s32.totalorder %s10, 1
    %p112 = scmp.ne.s32.totalorder %s107, %s109
    %p113 = scmp.eq.s32.totalorder %s10, 0
    %p114 = por %p112, %p113
    %p115 = scmp.ne.s32.totalorder %s107, %s109
    %p116 = scmp.eq.s32.totalorder %s15, 1
    %p117 = por %p115, %p116
    %p118 = scmp.ne.s32.totalorder %s109, %s110
    %p119 = scmp.eq.s32.totalorder %s15, 0
    %p120 = por %p118, %p119
    %p121 = scmp.ne.s32.totalorder %s109, %s110
    %p122 = scmp.eq.s32.totalorder %s16, 1
    %p123 = por %p121, %p122
    %p125 = scmp.ne.s32.totalorder %s110, %s124
    %p126 = scmp.eq.s32.totalorder %s16, 0
    %p127 = por %p125, %p126
    %s128 = ssub.s32 %s18, %s25
    %s129 = ssub.s32 %s17, %s29
    %s130 = sor.u32 %s128, %s129
    %p131 = scmp.eq.s32.totalorder %s130, 0
    %s133 = sadd.s32 %s132, 1
    %s134 = scalar_select %p131, %s132, %s133
    %p137 = pneg %p131
    %p138 = scmp.eq.s32.totalorder %s10, 1
    %p139 = por %p137, %p138
    %p140 = scmp.ne.s32.totalorder %s132, %s135
    %p141 = scmp.eq.s32.totalorder %s10, 0
    %p142 = por %p140, %p141
    %p143 = scmp.ne.s32.totalorder %s132, %s135
    %p144 = scmp.eq.s32.totalorder %s15, 1
    %p145 = por %p143, %p144
    %p146 = scmp.ne.s32.totalorder %s135, %s136
    %p147 = scmp.eq.s32.totalorder %s15, 0
    %p148 = por %p146, %p147
    %p149 = scmp.ne.s32.totalorder %s135, %s136
    %p150 = scmp.eq.s32.totalorder %s16, 1
    %p151 = por %p149, %p150
    %p153 = scmp.ne.s32.totalorder %s136, %s152
    %p154 = scmp.eq.s32.totalorder %s16, 0
    %p155 = por %p153, %p154
    %p156 = scmp.le.s32.totalorder 1, %s10
    %p157 = scmp.lt.s32.totalorder %s10, 3
    %p158 = pnand %p156, %p157
    %p159 = pneg %p158
    // Predicated region
    $region9: #{wno2d_forward.12} parent=5 // pred_check
      _
    $region10: #{wno2d_forward.12} parent=5 // pred_check_branch
      %161 = sbr.rel (%p158) target = $region12
    $region11: #{wno2d_forward.12} parent=5 // pred_region
      %s162 = ssub.s32 %s10, 1
      // Predicated region
      $region13: #{wno2d_forward.12} parent=11 // pred_check
        %p163 = pneg %p99
      $region14: #{wno2d_forward.12} parent=11 // pred_check_branch
        %165 = sbr.rel (%p163) target = $region16
      $region15: #{wno2d_forward.12} parent=11 // pred_region
        _
      $region16: #{wno2d_forward.12} parent=11 // pred_fallthru
        _
      // Predicated region
      $region17: #{wno2d_forward.12} parent=11 // pred_check
        %p166 = pneg %p120
      $region18: #{wno2d_forward.12} parent=11 // pred_check_branch
        %168 = sbr.rel (%p166) target = $region20
      $region19: #{wno2d_forward.12} parent=11 // pred_region
        _
      $region20: #{wno2d_forward.12} parent=11 // pred_fallthru
        _
    $region12: #{wno2d_forward.12} parent=5 // pred_fallthru
      _
    %p169 = scmp.lt.s32.totalorder %s10, 2
    // Predicated region
    $region21: #{wno2d_forward.12} parent=5 // pred_check
      %p170 = pneg %p169
    $region22: #{wno2d_forward.12} parent=5 // pred_check_branch
      %172 = sbr.rel (%p170) target = $region24
    $region23: #{wno2d_forward.12} parent=5 // pred_region
      // Predicated region
      $region25: #{wno2d_forward.12} parent=23 // pred_check
        %p173 = pneg %p44
      $region26: #{wno2d_forward.12} parent=23 // pred_check_branch
        %175 = sbr.rel (%p173) target = $region28
      $region27: #{wno2d_forward.12} parent=23 // pred_region
        %s176 = smul.u32 3, %s17
        %p177 = scmp.lt.s32.totalorder %s18, 1
        %s178 = scalar_select %p177, %s18, 1
        %p179 = scmp.lt.s32.totalorder %s176, 2
        %s180 = scalar_select %p179, %s176, 2
        %s181 = smul.addr %s178, 12
        %s182 = sadd.s32 %s180, %s181
        %s183 = smul.addr %s182, 8
        %s184 = scalar_lea.vmem %s0, %s183
        %s185 = smul.u32 3, %s17
      $region28: #{wno2d_forward.12} parent=23 // pred_fallthru
        _
      // Predicated region
      $region29: #{wno2d_forward.12} parent=23 // pred_check
        %p186 = pneg %p72
      $region30: #{wno2d_forward.12} parent=23 // pred_check_branch
        %188 = sbr.rel (%p186) target = $region32
      $region31: #{wno2d_forward.12} parent=23 // pred_region
        %s189 = smul.u32 3, %s17
        %p190 = scmp.lt.s32.totalorder %s18, 1
        %s191 = scalar_select %p190, %s18, 1
        %p192 = scmp.lt.s32.totalorder %s189, 2
        %s193 = scalar_select %p192, %s189, 2
        %s194 = smul.addr %s191, 12
        %s195 = sadd.s32 %s193, %s194
        %s196 = smul.addr %s195, 8
        %s197 = scalar_lea.vmem %s1, %s196
        %s198 = smul.u32 3, %s17
      $region32: #{wno2d_forward.12} parent=23 // pred_fallthru
        _
    $region24: #{wno2d_forward.12} parent=5 // pred_fallthru
      _
    %p199 = scmp.le.s32.totalorder 1, %s10
    %p200 = scmp.lt.s32.totalorder %s10, 3
    %p201 = pnand %p199, %p200
    %p202 = pneg %p201
    // Predicated region
    $region33: #{wno2d_forward.12} parent=5 // pred_check
      _
    $region34: #{wno2d_forward.12} parent=5 // pred_check_branch
      %204 = sbr.rel (%p201) target = $region36
    $region35: #{wno2d_forward.12} parent=5 // pred_region
      %s205 = ssub.s32 %s10, 1
      %s206 = smul.u32 3, %s19
      %p207 = scmp.lt.s32.totalorder %s20, 1
      %s208 = scalar_select %p207, %s20, 1
      %p209 = scmp.lt.s32.totalorder %s206, 2
      %s210 = scalar_select %p209, %s206, 2
      %s211 = smul.addr %s208, 12
      %s212 = sadd.s32 %s210, %s211
      %s213 = smul.addr %s212, 8
      %s214 = scalar_lea.vmem %s0, %s213
      %p215 = pneg %p50
      %p216 = pneg %p47
      %s217 = smul.u32 3, %s19
      %p218 = scmp.lt.s32.totalorder %s20, 1
      %s219 = scalar_select %p218, %s20, 1
      %p220 = scmp.lt.s32.totalorder %s217, 2
      %s221 = scalar_select %p220, %s217, 2
      %s222 = smul.addr %s219, 12
      %s223 = sadd.s32 %s221, %s222
      %s224 = smul.addr %s223, 8
      %s225 = scalar_lea.vmem %s1, %s224
      %p226 = pneg %p78
      %p227 = pneg %p75
      %p228 = pneg %p99
      %p229 = pneg %p96
      %p230 = pneg %p120
      %p231 = pneg %p117
      %p232 = pneg %p148
      %p233 = pneg %p145
      %s234 = smul.u32 3, %s19
      %p235 = scmp.lt.s32.totalorder %s20, 1
      %s236 = scalar_select %p235, %s20, 1
      %p237 = scmp.lt.s32.totalorder %s234, 2
      %s238 = scalar_select %p237, %s234, 2
      %s239 = smul.addr %s236, 12
      %s240 = sadd.s32 %s238, %s239
      %s241 = smul.addr %s240, 8
      %s242 = scalar_lea.vmem %s4, %s241
      %s243 = smul.u32 3, %s19
      %p244 = scmp.lt.s32.totalorder %s20, 1
      %s245 = scalar_select %p244, %s20, 1
      %p246 = scmp.lt.s32.totalorder %s243, 2
      %s247 = scalar_select %p246, %s243, 2
      %s248 = smul.addr %s245, 12
      %s249 = sadd.s32 %s247, %s248
      %s250 = smul.addr %s249, 8
      %s251 = scalar_lea.vmem %s0, %s250
      %s252 = smul.u32 3, %s19
      %s253 = smul.u32 3, %s19
      %p254 = scmp.lt.s32.totalorder %s20, 1
      %s255 = scalar_select %p254, %s20, 1
      %p256 = scmp.lt.s32.totalorder %s253, 2
      %s257 = scalar_select %p256, %s253, 2
      %s258 = smul.addr %s255, 12
      %s259 = sadd.s32 %s257, %s258
      %s260 = smul.addr %s259, 8
      %s261 = scalar_lea.vmem %s1, %s260
      %s262 = smul.u32 3, %s19
      %s263 = smul.u32 3, %s19
      %p264 = scmp.lt.s32.totalorder %s20, 1
      %s265 = scalar_select %p264, %s20, 1
      %p266 = scmp.lt.s32.totalorder %s263, 2
      %s267 = scalar_select %p266, %s263, 2
      %s268 = smul.addr %s265, 12
      %s269 = sadd.s32 %s267, %s268
      %s270 = smul.addr %s269, 8
      %s271 = scalar_lea.vmem %s4, %s270
      %s272 = smul.u32 3, %s19
      %v274 = vld [vmem:[%s251] sm:$0xff]
      %v275 = vld [vmem:[%s251 + $0x8] sm:$0xff]
      %v276 = vld [vmem:[%s251 + $0x10] sm:$0xff]
      %v277 = vld [vmem:[%s251 + $0x18] sm:$0xff]
      %v278 = vld [vmem:[%s251 + $0x20] sm:$0xff]
      %v279 = vld [vmem:[%s251 + $0x28] sm:$0xff]
      %v280 = vld [vmem:[%s251 + $0x30] sm:$0xff]
      %v281 = vld [vmem:[%s251 + $0x38] sm:$0xff]
      %v282 = vld [vmem:[%s251 + $0x40] sm:$0xff]
      %v283 = vld [vmem:[%s251 + $0x48] sm:$0xff]
      %v284 = vld [vmem:[%s251 + $0x50] sm:$0xff]
      %v285 = vld [vmem:[%s251 + $0x58] sm:$0xff]
      %v286 = vpack.c.bf16 %v277, %v274
      %v287 = vpack.c.bf16 %v278, %v275
      %v288 = vpack.c.bf16 %v279, %v276
      %v289 = vpack.c.bf16 %v283, %v280
      %v290 = vpack.c.bf16 %v284, %v281
      %v291 = vpack.c.bf16 %v285, %v282
      %v292 = vld [vmem:[%s2] sm:$0xff]
      %v293 = vld [vmem:[%s2 + $0x8] sm:$0xff]
      %v294 = vld [vmem:[%s2 + $0x10] sm:$0xff]
      %v295 = vld [vmem:[%s2 + $0x18] sm:$0xff]
      %v296 = vpack.c.bf16 %v293, %v292
      %v297 = vpack.c.bf16 %v295, %v294
      %v298 = vld [vmem:[%s3] sm:$0xff]
      %v299 = vld [vmem:[%s3 + $0x8] sm:$0xff]
      %v300 = vld [vmem:[%s3 + $0x10] sm:$0xff]
      %v301 = vld [vmem:[%s3 + $0x18] sm:$0xff]
      %303 = vset.pattern.permute.xlu0 0
      %304 = vperm.xlu0 %303, %v298
      %v305 = vpop.permute.xlu0 %304
      %308 = vset.pattern.permute.xlu0 0
      %309 = vperm.xlu0 %308, %v299
      %v310 = vpop.permute.xlu0 %309
      %313 = vset.pattern.permute.xlu0 0
      %314 = vperm.xlu0 %313, %v300
      %v315 = vpop.permute.xlu0 %314
      %318 = vset.pattern.permute.xlu0 0
      %319 = vperm.xlu0 %318, %v301
      %v320 = vpop.permute.xlu0 %319
      %vm322 = vcmask 261120
      %v324 = vsel %vm322, %v296, 0
      %v327 = vsel %vm322, %v297, 0
      %329 = vmatprep.subr.bf16.mxu0 %v287
      %330 = vmatpush1.bf16.msra.mxu0 %v286
      %331 = vmatprep.subr.bf16.mxu0 %v290
      %332 = vmatpush1.bf16.msra.mxu0 %v289
      %333 = vmatprep.subr.bf16.mxu0 0
      %334 = vmatpush1.bf16.msra.mxu0 0
      %335 = vmatprep.subr.bf16.mxu0 0
      %336 = vmatpush1.bf16.msra.mxu0 0
      %337 = vmatprep.subr.bf16.mxu0 0
      %338 = vmatpush1.bf16.msra.mxu0 0
      %339 = vmatprep.subr.bf16.mxu0 0
      %340 = vmatpush1.bf16.msra.mxu0 0
      %341 = vmatprep.subr.bf16.mxu0 0
      %342 = vmatpush1.bf16.msra.mxu0 0
      %343 = vmatprep.subr.bf16.mxu0 0
      %344 = vmatpush1.bf16.msra.mxu0 0
      %345 = vmatprep.subr.bf16.mxu0 0
      %346 = vmatpush1.bf16.msra.mxu0 0
      %347 = vmatprep.subr.bf16.mxu0 0
      %348 = vmatpush1.bf16.msra.mxu0 0
      %349 = vmatprep.subr.bf16.mxu0 0
      %350 = vmatpush1.bf16.msra.mxu0 0
      %351 = vmatprep.subr.bf16.mxu0 0
      %352 = vmatpush1.bf16.msra.mxu0 0
      %353 = vmatprep.subr.bf16.mxu0 0
      %354 = vmatpush1.bf16.msra.mxu0 0
      %355 = vmatprep.subr.bf16.mxu0 0
      %356 = vmatpush1.bf16.msra.mxu0 0
      %357 = vmatprep.subr.bf16.mxu0 0
      %358 = vmatpush1.bf16.msra.mxu0 0
      %359 = vmatprep.subr.bf16.mxu0 0
      %360 = vmatpush1.bf16.msra.mxu0 0
      %361 = vmatprep.mubr.bf16.mxu0 0
      %362 = vmatmul.mubr.bf16.gmra.mrb[0].mxu0 %v324
      %v363 = vpop.f32.mrb[0].mxu0
      %v364 = vadd.f32 %v305, %v363
      %v365 = vpop.f32.mrb[0].mxu0
      %v366 = vadd.f32 %v305, %v365
      %v367 = vpop.f32.mrb[0].mxu0
      %v368 = vadd.f32 %v310, %v367
      %v369 = vpop.f32.mrb[0].mxu0
      %v370 = vadd.f32 %v310, %v369
      %371 = vmatprep.mubr.bf16.mxu0 0
      %372 = vmatmul.mubr.bf16.gmra.mrb[0].mxu0 %v327
      %v373 = vpop.f32.mrb[0].mxu0
      %v374 = vadd.f32 %v315, %v373
      %v375 = vpop.f32.mrb[0].mxu0
      %v376 = vadd.f32 %v315, %v375
      %v377 = vpop.f32.mrb[0].mxu0
      %v378 = vadd.f32 %v320, %v377
      %v379 = vpop.f32.mrb[0].mxu0
      %v380 = vadd.f32 %v320, %v379
      %381 = vdwg.mxu0
      %382 = vmatprep.subr.bf16.mxu0 0
      %383 = vmatpush1.bf16.msra.mxu0 %v288
      %384 = vmatprep.subr.bf16.mxu0 0
      %385 = vmatpush1.bf16.msra.mxu0 %v291
      %386 = vmatprep.subr.bf16.mxu0 0
      %387 = vmatpush1.bf16.msra.mxu0 0
      %388 = vmatprep.subr.bf16.mxu0 0
      %389 = vmatpush1.bf16.msra.mxu0 0
      %390 = vmatprep.subr.bf16.mxu0 0
      %391 = vmatpush1.bf16.msra.mxu0 0
      %392 = vmatprep.subr.bf16.mxu0 0
      %393 = vmatpush1.bf16.msra.mxu0 0
      %394 = vmatprep.subr.bf16.mxu0 0
      %395 = vmatpush1.bf16.msra.mxu0 0
      %396 = vmatprep.subr.bf16.mxu0 0
      %397 = vmatpush1.bf16.msra.mxu0 0
      %398 = vmatprep.subr.bf16.mxu0 0
      %399 = vmatpush1.bf16.msra.mxu0 0
      %400 = vmatprep.subr.bf16.mxu0 0
      %401 = vmatpush1.bf16.msra.mxu0 0
      %402 = vmatprep.subr.bf16.mxu0 0
      %403 = vmatpush1.bf16.msra.mxu0 0
      %404 = vmatprep.subr.bf16.mxu0 0
      %405 = vmatpush1.bf16.msra.mxu0 0
      %406 = vmatprep.subr.bf16.mxu0 0
      %407 = vmatpush1.bf16.msra.mxu0 0
      %408 = vmatprep.subr.bf16.mxu0 0
      %409 = vmatpush1.bf16.msra.mxu0 0
      %410 = vmatprep.subr.bf16.mxu0 0
      %411 = vmatpush1.bf16.msra.mxu0 0
      %412 = vmatprep.subr.bf16.mxu0 0
      %413 = vmatpush1.bf16.msra.mxu0 0
      %414 = vmatprep.mubr.bf16.mxu0 0
      %415 = vmatmul.mubr.bf16.gmra.mrb[0].mxu0 %v324
      %v416 = vpop.f32.mrb[0].mxu0
      %v417 = vadd.f32 %v305, %v416
      %v418 = vpop.f32.mrb[0].mxu0
      %v419 = vpop.f32.mrb[0].mxu0
      %v420 = vadd.f32 %v310, %v419
      %v421 = vpop.f32.mrb[0].mxu0
      %422 = vmatprep.mubr.bf16.mxu0 0
      %423 = vmatmul.mubr.bf16.gmra.mrb[0].mxu0 %v327
      %v424 = vpop.f32.mrb[0].mxu0
      %v425 = vadd.f32 %v315, %v424
      %v426 = vpop.f32.mrb[0].mxu0
      %v427 = vpop.f32.mrb[0].mxu0
      %v428 = vadd.f32 %v320, %v427
      %v429 = vpop.f32.mrb[0].mxu0
      %430 = vdwg.mxu0
      %v431 = vld [vmem:[%s261] sm:$0xff]
      %v432 = vld [vmem:[%s261 + $0x8] sm:$0xff]
      %v433 = vld [vmem:[%s261 + $0x10] sm:$0xff]
      %v434 = vld [vmem:[%s261 + $0x18] sm:$0xff]
      %v435 = vld [vmem:[%s261 + $0x20] sm:$0xff]
      %v436 = vld [vmem:[%s261 + $0x28] sm:$0xff]
      %v437 = vld [vmem:[%s261 + $0x30] sm:$0xff]
      %v438 = vld [vmem:[%s261 + $0x38] sm:$0xff]
      %v439 = vld [vmem:[%s261 + $0x40] sm:$0xff]
      %v440 = vld [vmem:[%s261 + $0x48] sm:$0xff]
      %v441 = vld [vmem:[%s261 + $0x50] sm:$0xff]
      %v442 = vld [vmem:[%s261 + $0x58] sm:$0xff]
      %v443 = vadd.f32 %v364, %v431
      %v444 = vadd.f32 %v366, %v432
      %v445 = vadd.f32 %v417, %v433
      %v446 = vadd.f32 %v368, %v434
      %v447 = vadd.f32 %v370, %v435
      %v448 = vadd.f32 %v420, %v436
      %v449 = vadd.f32 %v374, %v437
      %v450 = vadd.f32 %v376, %v438
      %v451 = vadd.f32 %v425, %v439
      %v452 = vadd.f32 %v378, %v440
      %v453 = vadd.f32 %v380, %v441
      %v454 = vadd.f32 %v428, %v442
      %v455 = vmul.f32 %v443, 0.5
      %v456 = vmul.f32 %v444, 0.5
      %v457 = vmul.f32 %v445, 0.5
      %v458 = vmul.f32 %v446, 0.5
      %v459 = vmul.f32 %v447, 0.5
      %v460 = vmul.f32 %v448, 0.5
      %v461 = vmul.f32 %v449, 0.5
      %v462 = vmul.f32 %v450, 0.5
      %v463 = vmul.f32 %v451, 0.5
      %v464 = vmul.f32 %v452, 0.5
      %v465 = vmul.f32 %v453, 0.5
      %v466 = vmul.f32 %v454, 0.5
      %v467 = vmul.f32 %v443, 0.044715
      %v468 = vmul.f32 %v444, 0.044715
      %v469 = vmul.f32 %v445, 0.044715
      %v470 = vmul.f32 %v446, 0.044715
      %v471 = vmul.f32 %v447, 0.044715
      %v472 = vmul.f32 %v448, 0.044715
      %v473 = vmul.f32 %v449, 0.044715
      %v474 = vmul.f32 %v450, 0.044715
      %v475 = vmul.f32 %v451, 0.044715
      %v476 = vmul.f32 %v452, 0.044715
      %v477 = vmul.f32 %v453, 0.044715
      %v478 = vmul.f32 %v454, 0.044715
      %v479 = vmul.f32 %v467, %v443
      %v480 = vmul.f32 %v468, %v444
      %v481 = vmul.f32 %v469, %v445
      %v482 = vmul.f32 %v470, %v446
      %v483 = vmul.f32 %v471, %v447
      %v484 = vmul.f32 %v472, %v448
      %v485 = vmul.f32 %v473, %v449
      %v486 = vmul.f32 %v474, %v450
      %v487 = vmul.f32 %v475, %v451
      %v488 = vmul.f32 %v476, %v452
      %v489 = vmul.f32 %v477, %v453
      %v490 = vmul.f32 %v478, %v454
      %v491 = vmul.f32 %v479, %v443
      %v492 = vmul.f32 %v480, %v444
      %v493 = vmul.f32 %v481, %v445
      %v494 = vmul.f32 %v482, %v446
      %v495 = vmul.f32 %v483, %v447
      %v496 = vmul.f32 %v484, %v448
      %v497 = vmul.f32 %v485, %v449
      %v498 = vmul.f32 %v486, %v450
      %v499 = vmul.f32 %v487, %v451
      %v500 = vmul.f32 %v488, %v452
      %v501 = vmul.f32 %v489, %v453
      %v502 = vmul.f32 %v490, %v454
      %v503 = vadd.f32 %v443, %v491
      %v504 = vadd.f32 %v444, %v492
      %v505 = vadd.f32 %v445, %v493
      %v506 = vadd.f32 %v446, %v494
      %v507 = vadd.f32 %v447, %v495
      %v508 = vadd.f32 %v448, %v496
      %v509 = vadd.f32 %v449, %v497
      %v510 = vadd.f32 %v450, %v498
      %v511 = vadd.f32 %v451, %v499
      %v512 = vadd.f32 %v452, %v500
      %v513 = vadd.f32 %v453, %v501
      %v514 = vadd.f32 %v454, %v502
      %v515 = vmul.f32 %v503, 0.7978846
      %v516 = vmul.f32 %v504, 0.7978846
      %v517 = vmul.f32 %v505, 0.7978846
      %v518 = vmul.f32 %v506, 0.7978846
      %v519 = vmul.f32 %v507, 0.7978846
      %v520 = vmul.f32 %v508, 0.7978846
      %v521 = vmul.f32 %v509, 0.7978846
      %v522 = vmul.f32 %v510, 0.7978846
      %v523 = vmul.f32 %v511, 0.7978846
      %v524 = vmul.f32 %v512, 0.7978846
      %v525 = vmul.f32 %v513, 0.7978846
      %v526 = vmul.f32 %v514, 0.7978846
      %v527 = vtanh.pop %v515
      %v528 = vtanh.pop %v516
      %v529 = vtanh.pop %v517
      %v530 = vtanh.pop %v518
      %v531 = vtanh.pop %v519
      %v532 = vtanh.pop %v520
      %v533 = vtanh.pop %v521
      %v534 = vtanh.pop %v522
      %v535 = vtanh.pop %v523
      %v536 = vtanh.pop %v524
      %v537 = vtanh.pop %v525
      %v538 = vtanh.pop %v526
      %v539 = vadd.f32 %v527, 1.0
      %v540 = vadd.f32 %v528, 1.0
      %v541 = vadd.f32 %v529, 1.0
      %v542 = vadd.f32 %v530, 1.0
      %v543 = vadd.f32 %v531, 1.0
      %v544 = vadd.f32 %v532, 1.0
      %v545 = vadd.f32 %v533, 1.0
      %v546 = vadd.f32 %v534, 1.0
      %v547 = vadd.f32 %v535, 1.0
      %v548 = vadd.f32 %v536, 1.0
      %v549 = vadd.f32 %v537, 1.0
      %v550 = vadd.f32 %v538, 1.0
      %v551 = vmul.f32 %v455, %v539
      %v552 = vmul.f32 %v456, %v540
      %v553 = vmul.f32 %v457, %v541
      %v554 = vmul.f32 %v458, %v542
      %v555 = vmul.f32 %v459, %v543
      %v556 = vmul.f32 %v460, %v544
      %v557 = vmul.f32 %v461, %v545
      %v558 = vmul.f32 %v462, %v546
      %v559 = vmul.f32 %v463, %v547
      %v560 = vmul.f32 %v464, %v548
      %v561 = vmul.f32 %v465, %v549
      %v562 = vmul.f32 %v466, %v550
      %563 = vst [vmem:[%s271] sm:$0xff] %v551
      %564 = vst [vmem:[%s271 + $0x8] sm:$0xff] %v552
      %565 = vst [vmem:[%s271 + $0x10] sm:$0xff] %v553
      %566 = vst [vmem:[%s271 + $0x18] sm:$0xff] %v554
      %567 = vst [vmem:[%s271 + $0x20] sm:$0xff] %v555
      %568 = vst [vmem:[%s271 + $0x28] sm:$0xff] %v556
      %569 = vst [vmem:[%s271 + $0x30] sm:$0xff] %v557
      %570 = vst [vmem:[%s271 + $0x38] sm:$0xff] %v558
      %571 = vst [vmem:[%s271 + $0x40] sm:$0xff] %v559
      %572 = vst [vmem:[%s271 + $0x48] sm:$0xff] %v560
      %573 = vst [vmem:[%s271 + $0x50] sm:$0xff] %v561
      %574 = vst [vmem:[%s271 + $0x58] sm:$0xff] %v562
      %s575 = smul.u32 3, %s19
      %p576 = scmp.lt.s32.totalorder %s20, 1
      %s577 = scalar_select %p576, %s20, 1
      %p578 = scmp.lt.s32.totalorder %s575, 2
      %s579 = scalar_select %p578, %s575, 2
      %s580 = smul.addr %s577, 12
      %s581 = sadd.s32 %s579, %s580
      %s582 = smul.addr %s581, 8
      %s583 = scalar_lea.vmem %s4, %s582
      // Predicated region
      $region37: #{wno2d_forward.12} parent=35 // pred_check
        %p584 = pneg %p145
      $region38: #{wno2d_forward.12} parent=35 // pred_check_branch
        %586 = sbr.rel (%p584) target = $region40
      $region39: #{wno2d_forward.12} parent=35 // pred_region
        %s587 = smul.u32 3, %s19
      $region40: #{wno2d_forward.12} parent=35 // pred_fallthru
        _
    $region36: #{wno2d_forward.12} parent=5 // pred_fallthru
      _
    %p588 = scmp.le.s32.totalorder 2, %s10
    // Predicated region
    $region41: #{wno2d_forward.12} parent=5 // pred_check
      %p589 = pneg %p588
    $region42: #{wno2d_forward.12} parent=5 // pred_check_branch
      %591 = sbr.rel (%p589) target = $region44
    $region43: #{wno2d_forward.12} parent=5 // pred_region
      %s592 = ssub.s32 %s10, 2
      // Predicated region
      $region45: #{wno2d_forward.12} parent=43 // pred_check
        %p593 = pneg %p151
      $region46: #{wno2d_forward.12} parent=43 // pred_check_branch
        %595 = sbr.rel (%p593) target = $region48
      $region47: #{wno2d_forward.12} parent=43 // pred_region
        %s596 = smul.u32 3, %s21
        %p597 = scmp.lt.s32.totalorder %s22, 1
        %s598 = scalar_select %p597, %s22, 1
        %p599 = scmp.lt.s32.totalorder %s596, 2
        %s600 = scalar_select %p599, %s596, 2
        %s601 = smul.addr %s598, 12
        %s602 = sadd.s32 %s600, %s601
        %s603 = smul.addr %s602, 8
        %s604 = scalar_lea.vmem %s4, %s603
      $region48: #{wno2d_forward.12} parent=43 // pred_fallthru
        _
    $region44: #{wno2d_forward.12} parent=5 // pred_fallthru
      _
  $region6: #{wno2d_forward.12} parent=0 // loop_footer
    %s14 = sadd.s32 1, %s10
  $region7: #{wno2d_forward.12} parent=0 // loop_footer_branch
    %9 = sbr.rel target = $region3
  $region8: #{wno2d_forward.12} parent=0 // loop_exit
    _

// kernel: wno2d_forward.18
$region0: #{wno2d_forward.18}
  #allocation0 [shape = 'u32[]', space=smem, size = 0x4, offset = 0x4, fixed_abs, tag = 'smem constant byte address 0x4 - core index']
  #allocation1 [shape = 'u32[144,128]{1,0:T(1,128)}', space=vmem, size = 0x12000, scoped, tag = 'internal scratch']
  %s0 = inlined_call_operand.vmem [shape: f32[2,32,384], index: 0, kind: input, shape index: {}]
  %s1 = inlined_call_operand.vmem [shape: f32[2,32,384], index: 1, kind: input, shape index: {}]
  %s2 = inlined_call_operand.vmem [shape: f32[32,32], index: 2, kind: input, shape index: {}]
  %s3 = inlined_call_operand.vmem [shape: f32[32,1], index: 3, kind: input, shape index: {}]
  %s4 = inlined_call_operand.vmem [shape: f32[2,32,384], index: 4, kind: output, shape index: {}]
  %s5 = sld [smem:[#allocation0]]
  $region49: #{wno2d_forward.18} parent=0
    _
  %s7 = ssub.s32 1, %s5
  %s8 = scalar_select 0, %s7, %s5
  loop: start=0, step=1, limit=4
  $region2: #{wno2d_forward.18} parent=0 // loop_pre_header
    _
  $region3: #{wno2d_forward.18} parent=0 // loop_header
    %s10 = sphi 0, %s14
    %p11 = scmp.ge.s32.totalorder %s10, 4
    %s17 = sphi 0, %s29
    %s18 = sphi 0, %s25
    %s19 = sphi 0, %s17
    %s20 = sphi 0, %s18
    %s21 = sphi 0, %s19
    %s22 = sphi 0, %s20
    %s34 = sphi 0, %s36
    %s37 = sphi 0, %s34
    %s38 = sphi 0, %s37
    %s54 = sphi 0, %s38
    %s62 = sphi 0, %s64
    %s65 = sphi 0, %s62
    %s66 = sphi 0, %s65
    %s82 = sphi 0, %s66
    %s86 = sphi 0, %s86
    %s88 = sphi 0, %s86
    %s89 = sphi 0, %s88
    %s103 = sphi 0, %s89
    %s107 = sphi 0, %s107
    %s109 = sphi 0, %s107
    %s110 = sphi 0, %s109
    %s124 = sphi 0, %s110
    %s132 = sphi 0, %s134
    %s135 = sphi 0, %s132
    %s136 = sphi 0, %s135
    %s152 = sphi 0, %s136
  $region4: #{wno2d_forward.18} parent=0 // loop_header_branch
    %13 = sbr.rel (%p11) target = $region8
  $region5: #{wno2d_forward.18} parent=0 // loop_body
    %s15 = ssub.s32 %s10, 1
    %s16 = ssub.s32 %s10, 2
    %s23 = sadd.s32 1, %s18
    %p24 = scmp.ge.s32.totalorder %s23, 2
    %s25 = scalar_select %p24, 0, %s23
    %s26 = sadd.s32 1, %s17
    %s27 = scalar_select %p24, %s26, %s17
    %p28 = scmp.ge.s32.totalorder %s27, 1
    %s29 = scalar_select %p28, 0, %s27
    %s30 = ssub.s32 %s18, %s25
    %s31 = ssub.s32 %s17, %s29
    %s32 = sor.u32 %s30, %s31
    %p33 = scmp.eq.s32.totalorder %s32, 0
    %s35 = sadd.s32 %s34, 1
    %s36 = scalar_select %p33, %s34, %s35
    %p39 = pneg %p33
    %p40 = scmp.eq.s32.totalorder %s10, 1
    %p41 = por %p39, %p40
    %p42 = scmp.ne.s32.totalorder %s34, %s37
    %p43 = scmp.eq.s32.totalorder %s10, 0
    %p44 = por %p42, %p43
    %p45 = scmp.ne.s32.totalorder %s34, %s37
    %p46 = scmp.eq.s32.totalorder %s15, 1
    %p47 = por %p45, %p46
    %p48 = scmp.ne.s32.totalorder %s37, %s38
    %p49 = scmp.eq.s32.totalorder %s15, 0
    %p50 = por %p48, %p49
    %p51 = scmp.ne.s32.totalorder %s37, %s38
    %p52 = scmp.eq.s32.totalorder %s16, 1
    %p53 = por %p51, %p52
    %p55 = scmp.ne.s32.totalorder %s38, %s54
    %p56 = scmp.eq.s32.totalorder %s16, 0
    %p57 = por %p55, %p56
    %s58 = ssub.s32 %s18, %s25
    %s59 = ssub.s32 %s17, %s29
    %s60 = sor.u32 %s58, %s59
    %p61 = scmp.eq.s32.totalorder %s60, 0
    %s63 = sadd.s32 %s62, 1
    %s64 = scalar_select %p61, %s62, %s63
    %p67 = pneg %p61
    %p68 = scmp.eq.s32.totalorder %s10, 1
    %p69 = por %p67, %p68
    %p70 = scmp.ne.s32.totalorder %s62, %s65
    %p71 = scmp.eq.s32.totalorder %s10, 0
    %p72 = por %p70, %p71
    %p73 = scmp.ne.s32.totalorder %s62, %s65
    %p74 = scmp.eq.s32.totalorder %s15, 1
    %p75 = por %p73, %p74
    %p76 = scmp.ne.s32.totalorder %s65, %s66
    %p77 = scmp.eq.s32.totalorder %s15, 0
    %p78 = por %p76, %p77
    %p79 = scmp.ne.s32.totalorder %s65, %s66
    %p80 = scmp.eq.s32.totalorder %s16, 1
    %p81 = por %p79, %p80
    %p83 = scmp.ne.s32.totalorder %s66, %s82
    %p84 = scmp.eq.s32.totalorder %s16, 0
    %p85 = por %p83, %p84
    %s87 = sadd.s32 %s86, 1
    %p90 = scmp.eq.s32.totalorder %s10, 1
    %p91 = scmp.ne.s32.totalorder %s86, %s88
    %p92 = scmp.eq.s32.totalorder %s10, 0
    %p93 = por %p91, %p92
    %p94 = scmp.ne.s32.totalorder %s86, %s88
    %p95 = scmp.eq.s32.totalorder %s15, 1
    %p96 = por %p94, %p95
    %p97 = scmp.ne.s32.totalorder %s88, %s89
    %p98 = scmp.eq.s32.totalorder %s15, 0
    %p99 = por %p97, %p98
    %p100 = scmp.ne.s32.totalorder %s88, %s89
    %p101 = scmp.eq.s32.totalorder %s16, 1
    %p102 = por %p100, %p101
    %p104 = scmp.ne.s32.totalorder %s89, %s103
    %p105 = scmp.eq.s32.totalorder %s16, 0
    %p106 = por %p104, %p105
    %s108 = sadd.s32 %s107, 1
    %p111 = scmp.eq.s32.totalorder %s10, 1
    %p112 = scmp.ne.s32.totalorder %s107, %s109
    %p113 = scmp.eq.s32.totalorder %s10, 0
    %p114 = por %p112, %p113
    %p115 = scmp.ne.s32.totalorder %s107, %s109
    %p116 = scmp.eq.s32.totalorder %s15, 1
    %p117 = por %p115, %p116
    %p118 = scmp.ne.s32.totalorder %s109, %s110
    %p119 = scmp.eq.s32.totalorder %s15, 0
    %p120 = por %p118, %p119
    %p121 = scmp.ne.s32.totalorder %s109, %s110
    %p122 = scmp.eq.s32.totalorder %s16, 1
    %p123 = por %p121, %p122
    %p125 = scmp.ne.s32.totalorder %s110, %s124
    %p126 = scmp.eq.s32.totalorder %s16, 0
    %p127 = por %p125, %p126
    %s128 = ssub.s32 %s18, %s25
    %s129 = ssub.s32 %s17, %s29
    %s130 = sor.u32 %s128, %s129
    %p131 = scmp.eq.s32.totalorder %s130, 0
    %s133 = sadd.s32 %s132, 1
    %s134 = scalar_select %p131, %s132, %s133
    %p137 = pneg %p131
    %p138 = scmp.eq.s32.totalorder %s10, 1
    %p139 = por %p137, %p138
    %p140 = scmp.ne.s32.totalorder %s132, %s135
    %p141 = scmp.eq.s32.totalorder %s10, 0
    %p142 = por %p140, %p141
    %p143 = scmp.ne.s32.totalorder %s132, %s135
    %p144 = scmp.eq.s32.totalorder %s15, 1
    %p145 = por %p143, %p144
    %p146 = scmp.ne.s32.totalorder %s135, %s136
    %p147 = scmp.eq.s32.totalorder %s15, 0
    %p148 = por %p146, %p147
    %p149 = scmp.ne.s32.totalorder %s135, %s136
    %p150 = scmp.eq.s32.totalorder %s16, 1
    %p151 = por %p149, %p150
    %p153 = scmp.ne.s32.totalorder %s136, %s152
    %p154 = scmp.eq.s32.totalorder %s16, 0
    %p155 = por %p153, %p154
    %p156 = scmp.le.s32.totalorder 1, %s10
    %p157 = scmp.lt.s32.totalorder %s10, 3
    %p158 = pnand %p156, %p157
    %p159 = pneg %p158
    // Predicated region
    $region9: #{wno2d_forward.18} parent=5 // pred_check
      _
    $region10: #{wno2d_forward.18} parent=5 // pred_check_branch
      %161 = sbr.rel (%p158) target = $region12
    $region11: #{wno2d_forward.18} parent=5 // pred_region
      %s162 = ssub.s32 %s10, 1
      // Predicated region
      $region13: #{wno2d_forward.18} parent=11 // pred_check
        %p163 = pneg %p99
      $region14: #{wno2d_forward.18} parent=11 // pred_check_branch
        %165 = sbr.rel (%p163) target = $region16
      $region15: #{wno2d_forward.18} parent=11 // pred_region
        _
      $region16: #{wno2d_forward.18} parent=11 // pred_fallthru
        _
      // Predicated region
      $region17: #{wno2d_forward.18} parent=11 // pred_check
        %p166 = pneg %p120
      $region18: #{wno2d_forward.18} parent=11 // pred_check_branch
        %168 = sbr.rel (%p166) target = $region20
      $region19: #{wno2d_forward.18} parent=11 // pred_region
        _
      $region20: #{wno2d_forward.18} parent=11 // pred_fallthru
        _
    $region12: #{wno2d_forward.18} parent=5 // pred_fallthru
      _
    %p169 = scmp.lt.s32.totalorder %s10, 2
    // Predicated region
    $region21: #{wno2d_forward.18} parent=5 // pred_check
      %p170 = pneg %p169
    $region22: #{wno2d_forward.18} parent=5 // pred_check_branch
      %172 = sbr.rel (%p170) target = $region24
    $region23: #{wno2d_forward.18} parent=5 // pred_region
      // Predicated region
      $region25: #{wno2d_forward.18} parent=23 // pred_check
        %p173 = pneg %p44
      $region26: #{wno2d_forward.18} parent=23 // pred_check_branch
        %175 = sbr.rel (%p173) target = $region28
      $region27: #{wno2d_forward.18} parent=23 // pred_region
        %s176 = smul.u32 3, %s17
        %p177 = scmp.lt.s32.totalorder %s18, 1
        %s178 = scalar_select %p177, %s18, 1
        %p179 = scmp.lt.s32.totalorder %s176, 2
        %s180 = scalar_select %p179, %s176, 2
        %s181 = smul.addr %s178, 12
        %s182 = sadd.s32 %s180, %s181
        %s183 = smul.addr %s182, 8
        %s184 = scalar_lea.vmem %s0, %s183
        %s185 = smul.u32 3, %s17
      $region28: #{wno2d_forward.18} parent=23 // pred_fallthru
        _
      // Predicated region
      $region29: #{wno2d_forward.18} parent=23 // pred_check
        %p186 = pneg %p72
      $region30: #{wno2d_forward.18} parent=23 // pred_check_branch
        %188 = sbr.rel (%p186) target = $region32
      $region31: #{wno2d_forward.18} parent=23 // pred_region
        %s189 = smul.u32 3, %s17
        %p190 = scmp.lt.s32.totalorder %s18, 1
        %s191 = scalar_select %p190, %s18, 1
        %p192 = scmp.lt.s32.totalorder %s189, 2
        %s193 = scalar_select %p192, %s189, 2
        %s194 = smul.addr %s191, 12
        %s195 = sadd.s32 %s193, %s194
        %s196 = smul.addr %s195, 8
        %s197 = scalar_lea.vmem %s1, %s196
        %s198 = smul.u32 3, %s17
      $region32: #{wno2d_forward.18} parent=23 // pred_fallthru
        _
    $region24: #{wno2d_forward.18} parent=5 // pred_fallthru
      _
    %p199 = scmp.le.s32.totalorder 1, %s10
    %p200 = scmp.lt.s32.totalorder %s10, 3
    %p201 = pnand %p199, %p200
    %p202 = pneg %p201
    // Predicated region
    $region33: #{wno2d_forward.18} parent=5 // pred_check
      _
    $region34: #{wno2d_forward.18} parent=5 // pred_check_branch
      %204 = sbr.rel (%p201) target = $region36
    $region35: #{wno2d_forward.18} parent=5 // pred_region
      %s205 = ssub.s32 %s10, 1
      %s206 = smul.u32 3, %s19
      %p207 = scmp.lt.s32.totalorder %s20, 1
      %s208 = scalar_select %p207, %s20, 1
      %p209 = scmp.lt.s32.totalorder %s206, 2
      %s210 = scalar_select %p209, %s206, 2
      %s211 = smul.addr %s208, 12
      %s212 = sadd.s32 %s210, %s211
      %s213 = smul.addr %s212, 8
      %s214 = scalar_lea.vmem %s0, %s213
      %p215 = pneg %p50
      %p216 = pneg %p47
      %s217 = smul.u32 3, %s19
      %p218 = scmp.lt.s32.totalorder %s20, 1
      %s219 = scalar_select %p218, %s20, 1
      %p220 = scmp.lt.s32.totalorder %s217, 2
      %s221 = scalar_select %p220, %s217, 2
      %s222 = smul.addr %s219, 12
      %s223 = sadd.s32 %s221, %s222
      %s224 = smul.addr %s223, 8
      %s225 = scalar_lea.vmem %s1, %s224
      %p226 = pneg %p78
      %p227 = pneg %p75
      %p228 = pneg %p99
      %p229 = pneg %p96
      %p230 = pneg %p120
      %p231 = pneg %p117
      %p232 = pneg %p148
      %p233 = pneg %p145
      %s234 = smul.u32 3, %s19
      %p235 = scmp.lt.s32.totalorder %s20, 1
      %s236 = scalar_select %p235, %s20, 1
      %p237 = scmp.lt.s32.totalorder %s234, 2
      %s238 = scalar_select %p237, %s234, 2
      %s239 = smul.addr %s236, 12
      %s240 = sadd.s32 %s238, %s239
      %s241 = smul.addr %s240, 8
      %s242 = scalar_lea.vmem %s4, %s241
      %s243 = smul.u32 3, %s19
      %p244 = scmp.lt.s32.totalorder %s20, 1
      %s245 = scalar_select %p244, %s20, 1
      %p246 = scmp.lt.s32.totalorder %s243, 2
      %s247 = scalar_select %p246, %s243, 2
      %s248 = smul.addr %s245, 12
      %s249 = sadd.s32 %s247, %s248
      %s250 = smul.addr %s249, 8
      %s251 = scalar_lea.vmem %s0, %s250
      %s252 = smul.u32 3, %s19
      %s253 = smul.u32 3, %s19
      %p254 = scmp.lt.s32.totalorder %s20, 1
      %s255 = scalar_select %p254, %s20, 1
      %p256 = scmp.lt.s32.totalorder %s253, 2
      %s257 = scalar_select %p256, %s253, 2
      %s258 = smul.addr %s255, 12
      %s259 = sadd.s32 %s257, %s258
      %s260 = smul.addr %s259, 8
      %s261 = scalar_lea.vmem %s1, %s260
      %s262 = smul.u32 3, %s19
      %s263 = smul.u32 3, %s19
      %p264 = scmp.lt.s32.totalorder %s20, 1
      %s265 = scalar_select %p264, %s20, 1
      %p266 = scmp.lt.s32.totalorder %s263, 2
      %s267 = scalar_select %p266, %s263, 2
      %s268 = smul.addr %s265, 12
      %s269 = sadd.s32 %s267, %s268
      %s270 = smul.addr %s269, 8
      %s271 = scalar_lea.vmem %s4, %s270
      %s272 = smul.u32 3, %s19
      %v274 = vld [vmem:[%s251] sm:$0xff]
      %v275 = vld [vmem:[%s251 + $0x8] sm:$0xff]
      %v276 = vld [vmem:[%s251 + $0x10] sm:$0xff]
      %v277 = vld [vmem:[%s251 + $0x18] sm:$0xff]
      %v278 = vld [vmem:[%s251 + $0x20] sm:$0xff]
      %v279 = vld [vmem:[%s251 + $0x28] sm:$0xff]
      %v280 = vld [vmem:[%s251 + $0x30] sm:$0xff]
      %v281 = vld [vmem:[%s251 + $0x38] sm:$0xff]
      %v282 = vld [vmem:[%s251 + $0x40] sm:$0xff]
      %v283 = vld [vmem:[%s251 + $0x48] sm:$0xff]
      %v284 = vld [vmem:[%s251 + $0x50] sm:$0xff]
      %v285 = vld [vmem:[%s251 + $0x58] sm:$0xff]
      %v286 = vpack.c.bf16 %v277, %v274
      %v287 = vpack.c.bf16 %v278, %v275
      %v288 = vpack.c.bf16 %v279, %v276
      %v289 = vpack.c.bf16 %v283, %v280
      %v290 = vpack.c.bf16 %v284, %v281
      %v291 = vpack.c.bf16 %v285, %v282
      %v292 = vld [vmem:[%s2] sm:$0xff]
      %v293 = vld [vmem:[%s2 + $0x8] sm:$0xff]
      %v294 = vld [vmem:[%s2 + $0x10] sm:$0xff]
      %v295 = vld [vmem:[%s2 + $0x18] sm:$0xff]
      %v296 = vpack.c.bf16 %v293, %v292
      %v297 = vpack.c.bf16 %v295, %v294
      %v298 = vld [vmem:[%s3] sm:$0xff]
      %v299 = vld [vmem:[%s3 + $0x8] sm:$0xff]
      %v300 = vld [vmem:[%s3 + $0x10] sm:$0xff]
      %v301 = vld [vmem:[%s3 + $0x18] sm:$0xff]
      %303 = vset.pattern.permute.xlu0 0
      %304 = vperm.xlu0 %303, %v298
      %v305 = vpop.permute.xlu0 %304
      %308 = vset.pattern.permute.xlu0 0
      %309 = vperm.xlu0 %308, %v299
      %v310 = vpop.permute.xlu0 %309
      %313 = vset.pattern.permute.xlu0 0
      %314 = vperm.xlu0 %313, %v300
      %v315 = vpop.permute.xlu0 %314
      %318 = vset.pattern.permute.xlu0 0
      %319 = vperm.xlu0 %318, %v301
      %v320 = vpop.permute.xlu0 %319
      %vm322 = vcmask 261120
      %v324 = vsel %vm322, %v296, 0
      %v327 = vsel %vm322, %v297, 0
      %329 = vmatprep.subr.bf16.mxu0 %v287
      %330 = vmatpush1.bf16.msra.mxu0 %v286
      %331 = vmatprep.subr.bf16.mxu0 %v290
      %332 = vmatpush1.bf16.msra.mxu0 %v289
      %333 = vmatprep.subr.bf16.mxu0 0
      %334 = vmatpush1.bf16.msra.mxu0 0
      %335 = vmatprep.subr.bf16.mxu0 0
      %336 = vmatpush1.bf16.msra.mxu0 0
      %337 = vmatprep.subr.bf16.mxu0 0
      %338 = vmatpush1.bf16.msra.mxu0 0
      %339 = vmatprep.subr.bf16.mxu0 0
      %340 = vmatpush1.bf16.msra.mxu0 0
      %341 = vmatprep.subr.bf16.mxu0 0
      %342 = vmatpush1.bf16.msra.mxu0 0
      %343 = vmatprep.subr.bf16.mxu0 0
      %344 = vmatpush1.bf16.msra.mxu0 0
      %345 = vmatprep.subr.bf16.mxu0 0
      %346 = vmatpush1.bf16.msra.mxu0 0
      %347 = vmatprep.subr.bf16.mxu0 0
      %348 = vmatpush1.bf16.msra.mxu0 0
      %349 = vmatprep.subr.bf16.mxu0 0
      %350 = vmatpush1.bf16.msra.mxu0 0
      %351 = vmatprep.subr.bf16.mxu0 0
      %352 = vmatpush1.bf16.msra.mxu0 0
      %353 = vmatprep.subr.bf16.mxu0 0
      %354 = vmatpush1.bf16.msra.mxu0 0
      %355 = vmatprep.subr.bf16.mxu0 0
      %356 = vmatpush1.bf16.msra.mxu0 0
      %357 = vmatprep.subr.bf16.mxu0 0
      %358 = vmatpush1.bf16.msra.mxu0 0
      %359 = vmatprep.subr.bf16.mxu0 0
      %360 = vmatpush1.bf16.msra.mxu0 0
      %361 = vmatprep.mubr.bf16.mxu0 0
      %362 = vmatmul.mubr.bf16.gmra.mrb[0].mxu0 %v324
      %v363 = vpop.f32.mrb[0].mxu0
      %v364 = vadd.f32 %v305, %v363
      %v365 = vpop.f32.mrb[0].mxu0
      %v366 = vadd.f32 %v305, %v365
      %v367 = vpop.f32.mrb[0].mxu0
      %v368 = vadd.f32 %v310, %v367
      %v369 = vpop.f32.mrb[0].mxu0
      %v370 = vadd.f32 %v310, %v369
      %371 = vmatprep.mubr.bf16.mxu0 0
      %372 = vmatmul.mubr.bf16.gmra.mrb[0].mxu0 %v327
      %v373 = vpop.f32.mrb[0].mxu0
      %v374 = vadd.f32 %v315, %v373
      %v375 = vpop.f32.mrb[0].mxu0
      %v376 = vadd.f32 %v315, %v375
      %v377 = vpop.f32.mrb[0].mxu0
      %v378 = vadd.f32 %v320, %v377
      %v379 = vpop.f32.mrb[0].mxu0
      %v380 = vadd.f32 %v320, %v379
      %381 = vdwg.mxu0
      %382 = vmatprep.subr.bf16.mxu0 0
      %383 = vmatpush1.bf16.msra.mxu0 %v288
      %384 = vmatprep.subr.bf16.mxu0 0
      %385 = vmatpush1.bf16.msra.mxu0 %v291
      %386 = vmatprep.subr.bf16.mxu0 0
      %387 = vmatpush1.bf16.msra.mxu0 0
      %388 = vmatprep.subr.bf16.mxu0 0
      %389 = vmatpush1.bf16.msra.mxu0 0
      %390 = vmatprep.subr.bf16.mxu0 0
      %391 = vmatpush1.bf16.msra.mxu0 0
      %392 = vmatprep.subr.bf16.mxu0 0
      %393 = vmatpush1.bf16.msra.mxu0 0
      %394 = vmatprep.subr.bf16.mxu0 0
      %395 = vmatpush1.bf16.msra.mxu0 0
      %396 = vmatprep.subr.bf16.mxu0 0
      %397 = vmatpush1.bf16.msra.mxu0 0
      %398 = vmatprep.subr.bf16.mxu0 0
      %399 = vmatpush1.bf16.msra.mxu0 0
      %400 = vmatprep.subr.bf16.mxu0 0
      %401 = vmatpush1.bf16.msra.mxu0 0
      %402 = vmatprep.subr.bf16.mxu0 0
      %403 = vmatpush1.bf16.msra.mxu0 0
      %404 = vmatprep.subr.bf16.mxu0 0
      %405 = vmatpush1.bf16.msra.mxu0 0
      %406 = vmatprep.subr.bf16.mxu0 0
      %407 = vmatpush1.bf16.msra.mxu0 0
      %408 = vmatprep.subr.bf16.mxu0 0
      %409 = vmatpush1.bf16.msra.mxu0 0
      %410 = vmatprep.subr.bf16.mxu0 0
      %411 = vmatpush1.bf16.msra.mxu0 0
      %412 = vmatprep.subr.bf16.mxu0 0
      %413 = vmatpush1.bf16.msra.mxu0 0
      %414 = vmatprep.mubr.bf16.mxu0 0
      %415 = vmatmul.mubr.bf16.gmra.mrb[0].mxu0 %v324
      %v416 = vpop.f32.mrb[0].mxu0
      %v417 = vadd.f32 %v305, %v416
      %v418 = vpop.f32.mrb[0].mxu0
      %v419 = vpop.f32.mrb[0].mxu0
      %v420 = vadd.f32 %v310, %v419
      %v421 = vpop.f32.mrb[0].mxu0
      %422 = vmatprep.mubr.bf16.mxu0 0
      %423 = vmatmul.mubr.bf16.gmra.mrb[0].mxu0 %v327
      %v424 = vpop.f32.mrb[0].mxu0
      %v425 = vadd.f32 %v315, %v424
      %v426 = vpop.f32.mrb[0].mxu0
      %v427 = vpop.f32.mrb[0].mxu0
      %v428 = vadd.f32 %v320, %v427
      %v429 = vpop.f32.mrb[0].mxu0
      %430 = vdwg.mxu0
      %v431 = vld [vmem:[%s261] sm:$0xff]
      %v432 = vld [vmem:[%s261 + $0x8] sm:$0xff]
      %v433 = vld [vmem:[%s261 + $0x10] sm:$0xff]
      %v434 = vld [vmem:[%s261 + $0x18] sm:$0xff]
      %v435 = vld [vmem:[%s261 + $0x20] sm:$0xff]
      %v436 = vld [vmem:[%s261 + $0x28] sm:$0xff]
      %v437 = vld [vmem:[%s261 + $0x30] sm:$0xff]
      %v438 = vld [vmem:[%s261 + $0x38] sm:$0xff]
      %v439 = vld [vmem:[%s261 + $0x40] sm:$0xff]
      %v440 = vld [vmem:[%s261 + $0x48] sm:$0xff]
      %v441 = vld [vmem:[%s261 + $0x50] sm:$0xff]
      %v442 = vld [vmem:[%s261 + $0x58] sm:$0xff]
      %v443 = vadd.f32 %v364, %v431
      %v444 = vadd.f32 %v366, %v432
      %v445 = vadd.f32 %v417, %v433
      %v446 = vadd.f32 %v368, %v434
      %v447 = vadd.f32 %v370, %v435
      %v448 = vadd.f32 %v420, %v436
      %v449 = vadd.f32 %v374, %v437
      %v450 = vadd.f32 %v376, %v438
      %v451 = vadd.f32 %v425, %v439
      %v452 = vadd.f32 %v378, %v440
      %v453 = vadd.f32 %v380, %v441
      %v454 = vadd.f32 %v428, %v442
      %455 = vst [vmem:[%s271] sm:$0xff] %v443
      %456 = vst [vmem:[%s271 + $0x8] sm:$0xff] %v444
      %457 = vst [vmem:[%s271 + $0x10] sm:$0xff] %v445
      %458 = vst [vmem:[%s271 + $0x18] sm:$0xff] %v446
      %459 = vst [vmem:[%s271 + $0x20] sm:$0xff] %v447
      %460 = vst [vmem:[%s271 + $0x28] sm:$0xff] %v448
      %461 = vst [vmem:[%s271 + $0x30] sm:$0xff] %v449
      %462 = vst [vmem:[%s271 + $0x38] sm:$0xff] %v450
      %463 = vst [vmem:[%s271 + $0x40] sm:$0xff] %v451
      %464 = vst [vmem:[%s271 + $0x48] sm:$0xff] %v452
      %465 = vst [vmem:[%s271 + $0x50] sm:$0xff] %v453
      %466 = vst [vmem:[%s271 + $0x58] sm:$0xff] %v454
      %s467 = smul.u32 3, %s19
      %p468 = scmp.lt.s32.totalorder %s20, 1
      %s469 = scalar_select %p468, %s20, 1
      %p470 = scmp.lt.s32.totalorder %s467, 2
      %s471 = scalar_select %p470, %s467, 2
      %s472 = smul.addr %s469, 12
      %s473 = sadd.s32 %s471, %s472
      %s474 = smul.addr %s473, 8
      %s475 = scalar_lea.vmem %s4, %s474
      // Predicated region
      $region37: #{wno2d_forward.18} parent=35 // pred_check
        %p476 = pneg %p145
      $region38: #{wno2d_forward.18} parent=35 // pred_check_branch
        %478 = sbr.rel (%p476) target = $region40
      $region39: #{wno2d_forward.18} parent=35 // pred_region
        %s479 = smul.u32 3, %s19
      $region40: #{wno2d_forward.18} parent=35 // pred_fallthru
        _
    $region36: #{wno2d_forward.18} parent=5 // pred_fallthru
      _
    %p480 = scmp.le.s32.totalorder 2, %s10
    // Predicated region
    $region41: #{wno2d_forward.18} parent=5 // pred_check
      %p481 = pneg %p480
    $region42: #{wno2d_forward.18} parent=5 // pred_check_branch
      %483 = sbr.rel (%p481) target = $region44
    $region43: #{wno2d_forward.18} parent=5 // pred_region
      %s484 = ssub.s32 %s10, 2
      // Predicated region
      $region45: #{wno2d_forward.18} parent=43 // pred_check
        %p485 = pneg %p151
      $region46: #{wno2d_forward.18} parent=43 // pred_check_branch
        %487 = sbr.rel (%p485) target = $region48
      $region47: #{wno2d_forward.18} parent=43 // pred_region
        %s488 = smul.u32 3, %s21
        %p489 = scmp.lt.s32.totalorder %s22, 1
        %s490 = scalar_select %p489, %s22, 1
        %p491 = scmp.lt.s32.totalorder %s488, 2
        %s492 = scalar_select %p491, %s488, 2
        %s493 = smul.addr %s490, 12
        %s494 = sadd.s32 %s492, %s493
        %s495 = smul.addr %s494, 8
        %s496 = scalar_lea.vmem %s4, %s495
      $region48: #{wno2d_forward.18} parent=43 // pred_fallthru
        _
    $region44: #{wno2d_forward.18} parent=5 // pred_fallthru
      _
  $region6: #{wno2d_forward.18} parent=0 // loop_footer
    %s14 = sadd.s32 1, %s10
  $region7: #{wno2d_forward.18} parent=0 // loop_footer_branch
    %9 = sbr.rel target = $region3
  $region8: #{wno2d_forward.18} parent=0 // loop_exit
    _

// kernel: squeeze.35
$region0: #{squeeze.35}
  %s0 = inlined_call_operand.vmem [shape: f32[2,256], index: 0, kind: input, shape index: {}]
  %s1 = inlined_call_operand.hbm [shape: f32[2,16,16,1], index: 1, kind: output, shape index: {}]
  $region1: #{squeeze.35} parent=0
    #allocation0 [shape = 'u8[16384]{0}', space=vmem, size = 0x4000, scoped, tag = 'operand span for operand 1']
    #allocation1 [shape = 's32[1]{0}', space=sflag, size = 0x4, scoped, tag = 'scoped memory for squeeze.35']
    #allocation2 [shape = 'u8[8192]{0}', space=vmem, size = 0x2000, scoped, tag = 'scoped mem for input reshape']
    %2 = vsyncpa [#allocation1], 0
    %s4 = sshllo.u32 0, 2
    %s5 = scalar_lea.vmem %s0, 2
    %v6 = vld [vmem:[%s5] sm:%s4]
    %s7 = scalar_lea.vmem [#allocation2], 8
    %8 = vst [vmem:[%s7] sm:%s4] %v6
    %v9 = vld [vmem:[%s0] sm:%s4]
    %10 = vst [vmem:[#allocation2] sm:%s4] %v9
    %v11 = vld [vmem:[#allocation2] sm:$0x3]
    %vm12 = vcmask 130048
    %13 = vst.msk [vmem:[#allocation0] ss:$16 sm:$0x3] %vm12, %v11
    %s14 = scalar_lea.vmem [#allocation2], 8
    %v15 = vld [vmem:[%s14] sm:$0x3]
    %vm16 = vcmask 130048
    %s17 = scalar_lea.vmem [#allocation0], 8
    %18 = vst.msk [vmem:[%s17] ss:$16 sm:$0x3] %vm16, %v15
    %v19 = vld.sshfl [vmem:[#allocation2] sm:$0xff pattern:$0x99999180]
    %20 = vrot.lane.b32.xlu0 %v19, 112
    %v21 = vpop.permute.xlu0 %20
    %vm22 = vcmask 130048
    %s23 = scalar_lea.vmem [#allocation0], 1
    %24 = vst.msk [vmem:[%s23] ss:$8 sm:$0xf] %vm22, %v21
    %v25 = vld.sshfl [vmem:[#allocation2] sm:$0xff pattern:$0x99999180]
    %26 = vrot.lane.b32.xlu0 %v25, 96
    %v27 = vpop.permute.xlu0 %26
    %vm28 = vcmask 130048
    %s29 = scalar_lea.vmem [#allocation0], 2
    %30 = vst.msk [vmem:[%s29] ss:$8 sm:$0xf] %vm28, %v27
    %v31 = vld.sshfl [vmem:[#allocation2] sm:$0xff pattern:$0x99999180]
    %32 = vrot.lane.b32.xlu0 %v31, 80
    %v33 = vpop.permute.xlu0 %32
    %vm34 = vcmask 130048
    %s35 = scalar_lea.vmem [#allocation0], 3
    %36 = vst.msk [vmem:[%s35] ss:$8 sm:$0xf] %vm34, %v33
    %v37 = vld.sshfl [vmem:[#allocation2] sm:$0xff pattern:$0x99999180]
    %38 = vrot.lane.b32.xlu0 %v37, 64
    %v39 = vpop.permute.xlu0 %38
    %vm40 = vcmask 130048
    %s41 = scalar_lea.vmem [#allocation0], 4
    %42 = vst.msk [vmem:[%s41] ss:$8 sm:$0xf] %vm40, %v39
    %v43 = vld.sshfl [vmem:[#allocation2] sm:$0xff pattern:$0x99999180]
    %44 = vrot.lane.b32.xlu0 %v43, 48
    %v45 = vpop.permute.xlu0 %44
    %vm46 = vcmask 130048
    %s47 = scalar_lea.vmem [#allocation0], 5
    %48 = vst.msk [vmem:[%s47] ss:$8 sm:$0xf] %vm46, %v45
    %v49 = vld.sshfl [vmem:[#allocation2] sm:$0xff pattern:$0x99999180]
    %50 = vrot.lane.b32.xlu0 %v49, 32
    %v51 = vpop.permute.xlu0 %50
    %vm52 = vcmask 130048
    %s53 = scalar_lea.vmem [#allocation0], 6
    %54 = vst.msk [vmem:[%s53] ss:$8 sm:$0xf] %vm52, %v51
    %v55 = vld.sshfl [vmem:[#allocation2] sm:$0xff pattern:$0x99999180]
    %56 = vrot.lane.b32.xlu0 %v55, 16
    %v57 = vpop.permute.xlu0 %56
    %vm58 = vcmask 130048
    %s59 = scalar_lea.vmem [#allocation0], 7
    %60 = vst.msk [vmem:[%s59] ss:$8 sm:$0xf] %vm58, %v57
    %s62 = ssub.s32 512, 512
    %63 = vsyncadd [#allocation1], %s62
    %s65 = sshll.u32 [#allocation0], 4
    %s66 = int_to_ptr.vmem [resolvable:$true] %s65
    %68 = dma.vmem_to_hbm [thread:$0]  %s66, 512, %s1, [#allocation1]
    %69 = dma.done [#allocation1], 512
    %70 = vsyncpa [#allocation1], 1

// kernel: wno2d_forward.19
$region0: #{wno2d_forward.19}
  #allocation0 [shape = 'u32[]', space=smem, size = 0x4, offset = 0x4, fixed_abs, tag = 'smem constant byte address 0x4 - core index']
  #allocation1 [shape = 'u32[144,128]{1,0:T(1,128)}', space=vmem, size = 0x12000, scoped, tag = 'internal scratch']
  #allocation2 [shape = 'f32[1,1]{1,0:T(1,128)S(1)}', space=vmem, size = 0x200, scoped, tag = 'scoped memory for wno2d_forward.19']
  %s0 = inlined_call_operand.vmem [shape: f32[2,32,256], index: 0, kind: input, shape index: {}]
  %s1 = inlined_call_operand.vmem [shape: f32[128,32], index: 1, kind: input, shape index: {}]
  %s2 = inlined_call_operand.vmem [shape: f32[128,1], index: 2, kind: input, shape index: {}]
  %s3 = inlined_call_operand.vmem [shape: f32[128,1], index: 3, kind: input, shape index: {}]
  %s4 = inlined_call_operand.<no memory space> [shape: f32[1,1], index: 4, kind: input, shape index: {}]
  %s5 = inlined_call_operand.vmem [shape: f32[2,1,256], index: 5, kind: output, shape index: {}]
  %s6 = sld [smem:[#allocation0]]
  $region53: #{wno2d_forward.19} parent=0
    _
  %s8 = ssub.s32 1, %s6
  %s9 = scalar_select 0, %s8, %s6
  %v10 = vstv %s4
  %11 = vst [vmem:[#allocation2] sm:$0x1] %v10
  loop: start=0, step=1, limit=4
  $region2: #{wno2d_forward.19} parent=0 // loop_pre_header
    _
  $region3: #{wno2d_forward.19} parent=0 // loop_header
    %s13 = sphi 0, %s17
    %p14 = scmp.ge.s32.totalorder %s13, 4
    %s20 = sphi 0, %s32
    %s21 = sphi 0, %s28
    %s22 = sphi 0, %s20
    %s23 = sphi 0, %s21
    %s24 = sphi 0, %s22
    %s25 = sphi 0, %s23
    %s37 = sphi 0, %s39
    %s40 = sphi 0, %s37
    %s41 = sphi 0, %s40
    %s57 = sphi 0, %s41
    %s61 = sphi 0, %s61
    %s63 = sphi 0, %s61
    %s64 = sphi 0, %s63
    %s78 = sphi 0, %s64
    %s82 = sphi 0, %s82
    %s84 = sphi 0, %s82
    %s85 = sphi 0, %s84
    %s99 = sphi 0, %s85
    %s103 = sphi 0, %s103
    %s105 = sphi 0, %s103
    %s106 = sphi 0, %s105
    %s120 = sphi 0, %s106
    %s124 = sphi 0, %s124
    %s126 = sphi 0, %s124
    %s127 = sphi 0, %s126
    %s141 = sphi 0, %s127
    %s149 = sphi 0, %s151
    %s152 = sphi 0, %s149
    %s153 = sphi 0, %s152
    %s169 = sphi 0, %s153
  $region4: #{wno2d_forward.19} parent=0 // loop_header_branch
    %16 = sbr.rel (%p14) target = $region8
  $region5: #{wno2d_forward.19} parent=0 // loop_body
    %s18 = ssub.s32 %s13, 1
    %s19 = ssub.s32 %s13, 2
    %s26 = sadd.s32 1, %s21
    %p27 = scmp.ge.s32.totalorder %s26, 2
    %s28 = scalar_select %p27, 0, %s26
    %s29 = sadd.s32 1, %s20
    %s30 = scalar_select %p27, %s29, %s20
    %p31 = scmp.ge.s32.totalorder %s30, 1
    %s32 = scalar_select %p31, 0, %s30
    %s33 = ssub.s32 %s21, %s28
    %s34 = ssub.s32 %s20, %s32
    %s35 = sor.u32 %s33, %s34
    %p36 = scmp.eq.s32.totalorder %s35, 0
    %s38 = sadd.s32 %s37, 1
    %s39 = scalar_select %p36, %s37, %s38
    %p42 = pneg %p36
    %p43 = scmp.eq.s32.totalorder %s13, 1
    %p44 = por %p42, %p43
    %p45 = scmp.ne.s32.totalorder %s37, %s40
    %p46 = scmp.eq.s32.totalorder %s13, 0
    %p47 = por %p45, %p46
    %p48 = scmp.ne.s32.totalorder %s37, %s40
    %p49 = scmp.eq.s32.totalorder %s18, 1
    %p50 = por %p48, %p49
    %p51 = scmp.ne.s32.totalorder %s40, %s41
    %p52 = scmp.eq.s32.totalorder %s18, 0
    %p53 = por %p51, %p52
    %p54 = scmp.ne.s32.totalorder %s40, %s41
    %p55 = scmp.eq.s32.totalorder %s19, 1
    %p56 = por %p54, %p55
    %p58 = scmp.ne.s32.totalorder %s41, %s57
    %p59 = scmp.eq.s32.totalorder %s19, 0
    %p60 = por %p58, %p59
    %s62 = sadd.s32 %s61, 1
    %p65 = scmp.eq.s32.totalorder %s13, 1
    %p66 = scmp.ne.s32.totalorder %s61, %s63
    %p67 = scmp.eq.s32.totalorder %s13, 0
    %p68 = por %p66, %p67
    %p69 = scmp.ne.s32.totalorder %s61, %s63
    %p70 = scmp.eq.s32.totalorder %s18, 1
    %p71 = por %p69, %p70
    %p72 = scmp.ne.s32.totalorder %s63, %s64
    %p73 = scmp.eq.s32.totalorder %s18, 0
    %p74 = por %p72, %p73
    %p75 = scmp.ne.s32.totalorder %s63, %s64
    %p76 = scmp.eq.s32.totalorder %s19, 1
    %p77 = por %p75, %p76
    %p79 = scmp.ne.s32.totalorder %s64, %s78
    %p80 = scmp.eq.s32.totalorder %s19, 0
    %p81 = por %p79, %p80
    %s83 = sadd.s32 %s82, 1
    %p86 = scmp.eq.s32.totalorder %s13, 1
    %p87 = scmp.ne.s32.totalorder %s82, %s84
    %p88 = scmp.eq.s32.totalorder %s13, 0
    %p89 = por %p87, %p88
    %p90 = scmp.ne.s32.totalorder %s82, %s84
    %p91 = scmp.eq.s32.totalorder %s18, 1
    %p92 = por %p90, %p91
    %p93 = scmp.ne.s32.totalorder %s84, %s85
    %p94 = scmp.eq.s32.totalorder %s18, 0
    %p95 = por %p93, %p94
    %p96 = scmp.ne.s32.totalorder %s84, %s85
    %p97 = scmp.eq.s32.totalorder %s19, 1
    %p98 = por %p96, %p97
    %p100 = scmp.ne.s32.totalorder %s85, %s99
    %p101 = scmp.eq.s32.totalorder %s19, 0
    %p102 = por %p100, %p101
    %s104 = sadd.s32 %s103, 1
    %p107 = scmp.eq.s32.totalorder %s13, 1
    %p108 = scmp.ne.s32.totalorder %s103, %s105
    %p109 = scmp.eq.s32.totalorder %s13, 0
    %p110 = por %p108, %p109
    %p111 = scmp.ne.s32.totalorder %s103, %s105
    %p112 = scmp.eq.s32.totalorder %s18, 1
    %p113 = por %p111, %p112
    %p114 = scmp.ne.s32.totalorder %s105, %s106
    %p115 = scmp.eq.s32.totalorder %s18, 0
    %p116 = por %p114, %p115
    %p117 = scmp.ne.s32.totalorder %s105, %s106
    %p118 = scmp.eq.s32.totalorder %s19, 1
    %p119 = por %p117, %p118
    %p121 = scmp.ne.s32.totalorder %s106, %s120
    %p122 = scmp.eq.s32.totalorder %s19, 0
    %p123 = por %p121, %p122
    %s125 = sadd.s32 %s124, 1
    %p128 = scmp.eq.s32.totalorder %s13, 1
    %p129 = scmp.ne.s32.totalorder %s124, %s126
    %p130 = scmp.eq.s32.totalorder %s13, 0
    %p131 = por %p129, %p130
    %p132 = scmp.ne.s32.totalorder %s124, %s126
    %p133 = scmp.eq.s32.totalorder %s18, 1
    %p134 = por %p132, %p133
    %p135 = scmp.ne.s32.totalorder %s126, %s127
    %p136 = scmp.eq.s32.totalorder %s18, 0
    %p137 = por %p135, %p136
    %p138 = scmp.ne.s32.totalorder %s126, %s127
    %p139 = scmp.eq.s32.totalorder %s19, 1
    %p140 = por %p138, %p139
    %p142 = scmp.ne.s32.totalorder %s127, %s141
    %p143 = scmp.eq.s32.totalorder %s19, 0
    %p144 = por %p142, %p143
    %s145 = ssub.s32 %s21, %s28
    %s146 = ssub.s32 %s20, %s32
    %s147 = sor.u32 %s145, %s146
    %p148 = scmp.eq.s32.totalorder %s147, 0
    %s150 = sadd.s32 %s149, 1
    %s151 = scalar_select %p148, %s149, %s150
    %p154 = pneg %p148
    %p155 = scmp.eq.s32.totalorder %s13, 1
    %p156 = por %p154, %p155
    %p157 = scmp.ne.s32.totalorder %s149, %s152
    %p158 = scmp.eq.s32.totalorder %s13, 0
    %p159 = por %p157, %p158
    %p160 = scmp.ne.s32.totalorder %s149, %s152
    %p161 = scmp.eq.s32.totalorder %s18, 1
    %p162 = por %p160, %p161
    %p163 = scmp.ne.s32.totalorder %s152, %s153
    %p164 = scmp.eq.s32.totalorder %s18, 0
    %p165 = por %p163, %p164
    %p166 = scmp.ne.s32.totalorder %s152, %s153
    %p167 = scmp.eq.s32.totalorder %s19, 1
    %p168 = por %p166, %p167
    %p170 = scmp.ne.s32.totalorder %s153, %s169
    %p171 = scmp.eq.s32.totalorder %s19, 0
    %p172 = por %p170, %p171
    %p173 = scmp.le.s32.totalorder 1, %s13
    %p174 = scmp.lt.s32.totalorder %s13, 3
    %p175 = pnand %p173, %p174
    %p176 = pneg %p175
    // Predicated region
    $region9: #{wno2d_forward.19} parent=5 // pred_check
      _
    $region10: #{wno2d_forward.19} parent=5 // pred_check_branch
      %178 = sbr.rel (%p175) target = $region12
    $region11: #{wno2d_forward.19} parent=5 // pred_region
      %s179 = ssub.s32 %s13, 1
      // Predicated region
      $region13: #{wno2d_forward.19} parent=11 // pred_check
        %p180 = pneg %p74
      $region14: #{wno2d_forward.19} parent=11 // pred_check_branch
        %182 = sbr.rel (%p180) target = $region16
      $region15: #{wno2d_forward.19} parent=11 // pred_region
        _
      $region16: #{wno2d_forward.19} parent=11 // pred_fallthru
        _
      // Predicated region
      $region17: #{wno2d_forward.19} parent=11 // pred_check
        %p183 = pneg %p95
      $region18: #{wno2d_forward.19} parent=11 // pred_check_branch
        %185 = sbr.rel (%p183) target = $region20
      $region19: #{wno2d_forward.19} parent=11 // pred_region
        _
      $region20: #{wno2d_forward.19} parent=11 // pred_fallthru
        _
      // Predicated region
      $region21: #{wno2d_forward.19} parent=11 // pred_check
        %p186 = pneg %p116
      $region22: #{wno2d_forward.19} parent=11 // pred_check_branch
        %188 = sbr.rel (%p186) target = $region24
      $region23: #{wno2d_forward.19} parent=11 // pred_region
        _
      $region24: #{wno2d_forward.19} parent=11 // pred_fallthru
        _
      // Predicated region
      $region25: #{wno2d_forward.19} parent=11 // pred_check
        %p189 = pneg %p137
      $region26: #{wno2d_forward.19} parent=11 // pred_check_branch
        %191 = sbr.rel (%p189) target = $region28
      $region27: #{wno2d_forward.19} parent=11 // pred_region
        _
      $region28: #{wno2d_forward.19} parent=11 // pred_fallthru
        _
    $region12: #{wno2d_forward.19} parent=5 // pred_fallthru
      _
    %p192 = scmp.lt.s32.totalorder %s13, 2
    // Predicated region
    $region29: #{wno2d_forward.19} parent=5 // pred_check
      %p193 = pneg %p192
    $region30: #{wno2d_forward.19} parent=5 // pred_check_branch
      %195 = sbr.rel (%p193) target = $region32
    $region31: #{wno2d_forward.19} parent=5 // pred_region
      // Predicated region
      $region33: #{wno2d_forward.19} parent=31 // pred_check
        %p196 = pneg %p47
      $region34: #{wno2d_forward.19} parent=31 // pred_check_branch
        %198 = sbr.rel (%p196) target = $region36
      $region35: #{wno2d_forward.19} parent=31 // pred_region
        %s199 = smul.u32 2, %s20
        %p200 = scmp.lt.s32.totalorder %s21, 1
        %s201 = scalar_select %p200, %s21, 1
        %p202 = scmp.lt.s32.totalorder %s199, 1
        %s203 = scalar_select %p202, %s199, 1
        %s204 = smul.addr %s201, 8
        %s205 = sadd.s32 %s203, %s204
        %s206 = smul.addr %s205, 8
        %s207 = scalar_lea.vmem %s0, %s206
        %s208 = smul.u32 2, %s20
      $region36: #{wno2d_forward.19} parent=31 // pred_fallthru
        _
    $region32: #{wno2d_forward.19} parent=5 // pred_fallthru
      _
    %p209 = scmp.le.s32.totalorder 1, %s13
    %p210 = scmp.lt.s32.totalorder %s13, 3
    %p211 = pnand %p209, %p210
    %p212 = pneg %p211
    // Predicated region
    $region37: #{wno2d_forward.19} parent=5 // pred_check
      _
    $region38: #{wno2d_forward.19} parent=5 // pred_check_branch
      %214 = sbr.rel (%p211) target = $region40
    $region39: #{wno2d_forward.19} parent=5 // pred_region
      %s215 = ssub.s32 %s13, 1
      %s216 = smul.u32 2, %s22
      %p217 = scmp.lt.s32.totalorder %s23, 1
      %s218 = scalar_select %p217, %s23, 1
      %p219 = scmp.lt.s32.totalorder %s216, 1
      %s220 = scalar_select %p219, %s216, 1
      %s221 = smul.addr %s218, 8
      %s222 = sadd.s32 %s220, %s221
      %s223 = smul.addr %s222, 8
      %s224 = scalar_lea.vmem %s0, %s223
      %p225 = pneg %p53
      %p226 = pneg %p50
      %p227 = pneg %p74
      %p228 = pneg %p71
      %p229 = pneg %p95
      %p230 = pneg %p92
      %p231 = pneg %p116
      %p232 = pneg %p113
      %p233 = pneg %p137
      %p234 = pneg %p134
      %p235 = pneg %p165
      %p236 = pneg %p162
      %s237 = smul.u32 2, %s22
      %p238 = scmp.lt.s32.totalorder %s23, 1
      %s239 = scalar_select %p238, %s23, 1
      %p240 = scmp.lt.s32.totalorder %s237, 1
      %s241 = scalar_select %p240, %s237, 1
      %s242 = smul.addr %s239, 2
      %s243 = sadd.s32 %s241, %s242
      %s244 = scalar_lea.vmem %s5, %s243
      %s245 = smul.u32 2, %s22
      %p246 = scmp.lt.s32.totalorder %s23, 1
      %s247 = scalar_select %p246, %s23, 1
      %p248 = scmp.lt.s32.totalorder %s245, 1
      %s249 = scalar_select %p248, %s245, 1
      %s250 = smul.addr %s247, 8
      %s251 = sadd.s32 %s249, %s250
      %s252 = smul.addr %s251, 8
      %s253 = scalar_lea.vmem %s0, %s252
      %s254 = smul.u32 2, %s22
      %s255 = smul.u32 2, %s22
      %p256 = scmp.lt.s32.totalorder %s23, 1
      %s257 = scalar_select %p256, %s23, 1
      %p258 = scmp.lt.s32.totalorder %s255, 1
      %s259 = scalar_select %p258, %s255, 1
      %s260 = smul.addr %s257, 2
      %s261 = sadd.s32 %s259, %s260
      %s262 = scalar_lea.vmem %s5, %s261
      %s263 = smul.u32 2, %s22
      %v265 = vld [vmem:[%s253] sm:$0xff]
      %v266 = vld [vmem:[%s253 + $0x8] sm:$0xff]
      %v267 = vld [vmem:[%s253 + $0x10] sm:$0xff]
      %v268 = vld [vmem:[%s253 + $0x18] sm:$0xff]
      %v269 = vld [vmem:[%s253 + $0x20] sm:$0xff]
      %v270 = vld [vmem:[%s253 + $0x28] sm:$0xff]
      %v271 = vld [vmem:[%s253 + $0x30] sm:$0xff]
      %v272 = vld [vmem:[%s253 + $0x38] sm:$0xff]
      %v273 = vpack.c.bf16 %v267, %v265
      %v274 = vpack.c.bf16 %v268, %v266
      %v275 = vpack.c.bf16 %v271, %v269
      %v276 = vpack.c.bf16 %v272, %v270
      %v277 = vld [vmem:[%s1] sm:$0xff]
      %v278 = vld [vmem:[%s1 + $0x8] sm:$0xff]
      %v279 = vld [vmem:[%s1 + $0x10] sm:$0xff]
      %v280 = vld [vmem:[%s1 + $0x18] sm:$0xff]
      %v281 = vld [vmem:[%s1 + $0x20] sm:$0xff]
      %v282 = vld [vmem:[%s1 + $0x28] sm:$0xff]
      %v283 = vld [vmem:[%s1 + $0x30] sm:$0xff]
      %v284 = vld [vmem:[%s1 + $0x38] sm:$0xff]
      %v285 = vld [vmem:[%s1 + $0x40] sm:$0xff]
      %v286 = vld [vmem:[%s1 + $0x48] sm:$0xff]
      %v287 = vld [vmem:[%s1 + $0x50] sm:$0xff]
      %v288 = vld [vmem:[%s1 + $0x58] sm:$0xff]
      %v289 = vld [vmem:[%s1 + $0x60] sm:$0xff]
      %v290 = vld [vmem:[%s1 + $0x68] sm:$0xff]
      %v291 = vld [vmem:[%s1 + $0x70] sm:$0xff]
      %v292 = vld [vmem:[%s1 + $0x78] sm:$0xff]
      %v293 = vpack.c.bf16 %v278, %v277
      %v294 = vpack.c.bf16 %v280, %v279
      %v295 = vpack.c.bf16 %v282, %v281
      %v296 = vpack.c.bf16 %v284, %v283
      %v297 = vpack.c.bf16 %v286, %v285
      %v298 = vpack.c.bf16 %v288, %v287
      %v299 = vpack.c.bf16 %v290, %v289
      %v300 = vpack.c.bf16 %v292, %v291
      %v301 = vld [vmem:[%s2] sm:$0xff]
      %v302 = vld [vmem:[%s2 + $0x8] sm:$0xff]
      %v303 = vld [vmem:[%s2 + $0x10] sm:$0xff]
      %v304 = vld [vmem:[%s2 + $0x18] sm:$0xff]
      %v305 = vld [vmem:[%s2 + $0x20] sm:$0xff]
      %v306 = vld [vmem:[%s2 + $0x28] sm:$0xff]
      %v307 = vld [vmem:[%s2 + $0x30] sm:$0xff]
      %v308 = vld [vmem:[%s2 + $0x38] sm:$0xff]
      %v309 = vld [vmem:[%s2 + $0x40] sm:$0xff]
      %v310 = vld [vmem:[%s2 + $0x48] sm:$0xff]
      %v311 = vld [vmem:[%s2 + $0x50] sm:$0xff]
      %v312 = vld [vmem:[%s2 + $0x58] sm:$0xff]
      %v313 = vld [vmem:[%s2 + $0x60] sm:$0xff]
      %v314 = vld [vmem:[%s2 + $0x68] sm:$0xff]
      %v315 = vld [vmem:[%s2 + $0x70] sm:$0xff]
      %v316 = vld [vmem:[%s2 + $0x78] sm:$0xff]
      %318 = vset.pattern.permute.xlu0 0
      %319 = vperm.xlu0 %318, %v301
      %v320 = vpop.permute.xlu0 %319
      %323 = vset.pattern.permute.xlu0 0
      %324 = vperm.xlu0 %323, %v302
      %v325 = vpop.permute.xlu0 %324
      %328 = vset.pattern.permute.xlu0 0
      %329 = vperm.xlu0 %328, %v303
      %v330 = vpop.permute.xlu0 %329
      %333 = vset.pattern.permute.xlu0 0
      %334 = vperm.xlu0 %333, %v304
      %v335 = vpop.permute.xlu0 %334
      %338 = vset.pattern.permute.xlu0 0
      %339 = vperm.xlu0 %338, %v305
      %v340 = vpop.permute.xlu0 %339
      %343 = vset.pattern.permute.xlu0 0
      %344 = vperm.xlu0 %343, %v306
      %v345 = vpop.permute.xlu0 %344
      %348 = vset.pattern.permute.xlu0 0
      %349 = vperm.xlu0 %348, %v307
      %v350 = vpop.permute.xlu0 %349
      %353 = vset.pattern.permute.xlu0 0
      %354 = vperm.xlu0 %353, %v308
      %v355 = vpop.permute.xlu0 %354
      %358 = vset.pattern.permute.xlu0 0
      %359 = vperm.xlu0 %358, %v309
      %v360 = vpop.permute.xlu0 %359
      %363 = vset.pattern.permute.xlu0 0
      %364 = vperm.xlu0 %363, %v310
      %v365 = vpop.permute.xlu0 %364
      %368 = vset.pattern.permute.xlu0 0
      %369 = vperm.xlu0 %368, %v311
      %v370 = vpop.permute.xlu0 %369
      %373 = vset.pattern.permute.xlu0 0
      %374 = vperm.xlu0 %373, %v312
      %v375 = vpop.permute.xlu0 %374
      %378 = vset.pattern.permute.xlu0 0
      %379 = vperm.xlu0 %378, %v313
      %v380 = vpop.permute.xlu0 %379
      %383 = vset.pattern.permute.xlu0 0
      %384 = vperm.xlu0 %383, %v314
      %v385 = vpop.permute.xlu0 %384
      %388 = vset.pattern.permute.xlu0 0
      %389 = vperm.xlu0 %388, %v315
      %v390 = vpop.permute.xlu0 %389
      %393 = vset.pattern.permute.xlu0 0
      %394 = vperm.xlu0 %393, %v316
      %v395 = vpop.permute.xlu0 %394
      %vm397 = vcmask 261120
      %v399 = vsel %vm397, %v293, 0
      %v402 = vsel %vm397, %v294, 0
      %v405 = vsel %vm397, %v295, 0
      %v408 = vsel %vm397, %v296, 0
      %v411 = vsel %vm397, %v297, 0
      %v414 = vsel %vm397, %v298, 0
      %v417 = vsel %vm397, %v299, 0
      %v420 = vsel %vm397, %v300, 0
      %422 = vmatprep.subr.bf16.mxu0 %v274
      %423 = vmatpush1.bf16.msra.mxu0 %v273
      %424 = vmatprep.subr.bf16.mxu0 %v276
      %425 = vmatpush1.bf16.msra.mxu0 %v275
      %426 = vmatprep.subr.bf16.mxu0 0
      %427 = vmatpush1.bf16.msra.mxu0 0
      %428 = vmatprep.subr.bf16.mxu0 0
      %429 = vmatpush1.bf16.msra.mxu0 0
      %430 = vmatprep.subr.bf16.mxu0 0
      %431 = vmatpush1.bf16.msra.mxu0 0
      %432 = vmatprep.subr.bf16.mxu0 0
      %433 = vmatpush1.bf16.msra.mxu0 0
      %434 = vmatprep.subr.bf16.mxu0 0
      %435 = vmatpush1.bf16.msra.mxu0 0
      %436 = vmatprep.subr.bf16.mxu0 0
      %437 = vmatpush1.bf16.msra.mxu0 0
      %438 = vmatprep.subr.bf16.mxu0 0
      %439 = vmatpush1.bf16.msra.mxu0 0
      %440 = vmatprep.subr.bf16.mxu0 0
      %441 = vmatpush1.bf16.msra.mxu0 0
      %442 = vmatprep.subr.bf16.mxu0 0
      %443 = vmatpush1.bf16.msra.mxu0 0
      %444 = vmatprep.subr.bf16.mxu0 0
      %445 = vmatpush1.bf16.msra.mxu0 0
      %446 = vmatprep.subr.bf16.mxu0 0
      %447 = vmatpush1.bf16.msra.mxu0 0
      %448 = vmatprep.subr.bf16.mxu0 0
      %449 = vmatpush1.bf16.msra.mxu0 0
      %450 = vmatprep.subr.bf16.mxu0 0
      %451 = vmatpush1.bf16.msra.mxu0 0
      %452 = vmatprep.subr.bf16.mxu0 0
      %453 = vmatpush1.bf16.msra.mxu0 0
      %454 = vmatprep.mubr.bf16.mxu0 0
      %455 = vmatmul.mubr.bf16.gmra.mrb[0].mxu0 %v399
      %v456 = vpop.f32.mrb[0].mxu0
      %v457 = vadd.f32 %v320, %v456
      %v458 = vpop.f32.mrb[0].mxu0
      %v459 = vadd.f32 %v320, %v458
      %v460 = vpop.f32.mrb[0].mxu0
      %v461 = vadd.f32 %v325, %v460
      %v462 = vpop.f32.mrb[0].mxu0
      %v463 = vadd.f32 %v325, %v462
      %464 = vmatprep.mubr.bf16.mxu0 0
      %465 = vmatmul.mubr.bf16.gmra.mrb[0].mxu0 %v402
      %v466 = vpop.f32.mrb[0].mxu0
      %v467 = vadd.f32 %v330, %v466
      %v468 = vpop.f32.mrb[0].mxu0
      %v469 = vadd.f32 %v330, %v468
      %v470 = vpop.f32.mrb[0].mxu0
      %v471 = vadd.f32 %v335, %v470
      %v472 = vpop.f32.mrb[0].mxu0
      %v473 = vadd.f32 %v335, %v472
      %474 = vmatprep.mubr.bf16.mxu0 0
      %475 = vmatmul.mubr.bf16.gmra.mrb[0].mxu0 %v405
      %v476 = vpop.f32.mrb[0].mxu0
      %v477 = vadd.f32 %v340, %v476
      %v478 = vpop.f32.mrb[0].mxu0
      %v479 = vadd.f32 %v340, %v478
      %v480 = vpop.f32.mrb[0].mxu0
      %v481 = vadd.f32 %v345, %v480
      %v482 = vpop.f32.mrb[0].mxu0
      %v483 = vadd.f32 %v345, %v482
      %484 = vmatprep.mubr.bf16.mxu0 0
      %485 = vmatmul.mubr.bf16.gmra.mrb[0].mxu0 %v408
      %v486 = vpop.f32.mrb[0].mxu0
      %v487 = vadd.f32 %v350, %v486
      %v488 = vpop.f32.mrb[0].mxu0
      %v489 = vadd.f32 %v350, %v488
      %v490 = vpop.f32.mrb[0].mxu0
      %v491 = vadd.f32 %v355, %v490
      %v492 = vpop.f32.mrb[0].mxu0
      %v493 = vadd.f32 %v355, %v492
      %494 = vmatprep.mubr.bf16.mxu0 0
      %495 = vmatmul.mubr.bf16.gmra.mrb[0].mxu0 %v411
      %v496 = vpop.f32.mrb[0].mxu0
      %v497 = vadd.f32 %v360, %v496
      %v498 = vpop.f32.mrb[0].mxu0
      %v499 = vadd.f32 %v360, %v498
      %v500 = vpop.f32.mrb[0].mxu0
      %v501 = vadd.f32 %v365, %v500
      %v502 = vpop.f32.mrb[0].mxu0
      %v503 = vadd.f32 %v365, %v502
      %504 = vmatprep.mubr.bf16.mxu0 0
      %505 = vmatmul.mubr.bf16.gmra.mrb[0].mxu0 %v414
      %v506 = vpop.f32.mrb[0].mxu0
      %v507 = vadd.f32 %v370, %v506
      %v508 = vpop.f32.mrb[0].mxu0
      %v509 = vadd.f32 %v370, %v508
      %v510 = vpop.f32.mrb[0].mxu0
      %v511 = vadd.f32 %v375, %v510
      %v512 = vpop.f32.mrb[0].mxu0
      %v513 = vadd.f32 %v375, %v512
      %514 = vmatprep.mubr.bf16.mxu0 0
      %515 = vmatmul.mubr.bf16.gmra.mrb[0].mxu0 %v417
      %v516 = vpop.f32.mrb[0].mxu0
      %v517 = vadd.f32 %v380, %v516
      %v518 = vpop.f32.mrb[0].mxu0
      %v519 = vadd.f32 %v380, %v518
      %v520 = vpop.f32.mrb[0].mxu0
      %v521 = vadd.f32 %v385, %v520
      %v522 = vpop.f32.mrb[0].mxu0
      %v523 = vadd.f32 %v385, %v522
      %524 = vmatprep.mubr.bf16.mxu0 0
      %525 = vmatmul.mubr.bf16.gmra.mrb[0].mxu0 %v420
      %v526 = vpop.f32.mrb[0].mxu0
      %v527 = vadd.f32 %v390, %v526
      %v528 = vpop.f32.mrb[0].mxu0
      %v529 = vadd.f32 %v390, %v528
      %v530 = vpop.f32.mrb[0].mxu0
      %v531 = vadd.f32 %v395, %v530
      %v532 = vpop.f32.mrb[0].mxu0
      %v533 = vadd.f32 %v395, %v532
      %534 = vdwg.mxu0
      %v535 = vmul.f32 %v457, 0.5
      %v536 = vmul.f32 %v459, 0.5
      %v537 = vmul.f32 %v461, 0.5
      %v538 = vmul.f32 %v463, 0.5
      %v539 = vmul.f32 %v467, 0.5
      %v540 = vmul.f32 %v469, 0.5
      %v541 = vmul.f32 %v471, 0.5
      %v542 = vmul.f32 %v473, 0.5
      %v543 = vmul.f32 %v477, 0.5
      %v544 = vmul.f32 %v479, 0.5
      %v545 = vmul.f32 %v481, 0.5
      %v546 = vmul.f32 %v483, 0.5
      %v547 = vmul.f32 %v487, 0.5
      %v548 = vmul.f32 %v489, 0.5
      %v549 = vmul.f32 %v491, 0.5
      %v550 = vmul.f32 %v493, 0.5
      %v551 = vmul.f32 %v497, 0.5
      %v552 = vmul.f32 %v499, 0.5
      %v553 = vmul.f32 %v501, 0.5
      %v554 = vmul.f32 %v503, 0.5
      %v555 = vmul.f32 %v507, 0.5
      %v556 = vmul.f32 %v509, 0.5
      %v557 = vmul.f32 %v511, 0.5
      %v558 = vmul.f32 %v513, 0.5
      %v559 = vmul.f32 %v517, 0.5
      %v560 = vmul.f32 %v519, 0.5
      %v561 = vmul.f32 %v521, 0.5
      %v562 = vmul.f32 %v523, 0.5
      %v563 = vmul.f32 %v527, 0.5
      %v564 = vmul.f32 %v529, 0.5
      %v565 = vmul.f32 %v531, 0.5
      %v566 = vmul.f32 %v533, 0.5
      %v567 = vmul.f32 %v457, 0.044715
      %v568 = vmul.f32 %v459, 0.044715
      %v569 = vmul.f32 %v461, 0.044715
      %v570 = vmul.f32 %v463, 0.044715
      %v571 = vmul.f32 %v467, 0.044715
      %v572 = vmul.f32 %v469, 0.044715
      %v573 = vmul.f32 %v471, 0.044715
      %v574 = vmul.f32 %v473, 0.044715
      %v575 = vmul.f32 %v477, 0.044715
      %v576 = vmul.f32 %v479, 0.044715
      %v577 = vmul.f32 %v481, 0.044715
      %v578 = vmul.f32 %v483, 0.044715
      %v579 = vmul.f32 %v487, 0.044715
      %v580 = vmul.f32 %v489, 0.044715
      %v581 = vmul.f32 %v491, 0.044715
      %v582 = vmul.f32 %v493, 0.044715
      %v583 = vmul.f32 %v497, 0.044715
      %v584 = vmul.f32 %v499, 0.044715
      %v585 = vmul.f32 %v501, 0.044715
      %v586 = vmul.f32 %v503, 0.044715
      %v587 = vmul.f32 %v507, 0.044715
      %v588 = vmul.f32 %v509, 0.044715
      %v589 = vmul.f32 %v511, 0.044715
      %v590 = vmul.f32 %v513, 0.044715
      %v591 = vmul.f32 %v517, 0.044715
      %v592 = vmul.f32 %v519, 0.044715
      %v593 = vmul.f32 %v521, 0.044715
      %v594 = vmul.f32 %v523, 0.044715
      %v595 = vmul.f32 %v527, 0.044715
      %v596 = vmul.f32 %v529, 0.044715
      %v597 = vmul.f32 %v531, 0.044715
      %v598 = vmul.f32 %v533, 0.044715
      %v599 = vmul.f32 %v567, %v457
      %v600 = vmul.f32 %v568, %v459
      %v601 = vmul.f32 %v569, %v461
      %v602 = vmul.f32 %v570, %v463
      %v603 = vmul.f32 %v571, %v467
      %v604 = vmul.f32 %v572, %v469
      %v605 = vmul.f32 %v573, %v471
      %v606 = vmul.f32 %v574, %v473
      %v607 = vmul.f32 %v575, %v477
      %v608 = vmul.f32 %v576, %v479
      %v609 = vmul.f32 %v577, %v481
      %v610 = vmul.f32 %v578, %v483
      %v611 = vmul.f32 %v579, %v487
      %v612 = vmul.f32 %v580, %v489
      %v613 = vmul.f32 %v581, %v491
      %v614 = vmul.f32 %v582, %v493
      %v615 = vmul.f32 %v583, %v497
      %v616 = vmul.f32 %v584, %v499
      %v617 = vmul.f32 %v585, %v501
      %v618 = vmul.f32 %v586, %v503
      %v619 = vmul.f32 %v587, %v507
      %v620 = vmul.f32 %v588, %v509
      %v621 = vmul.f32 %v589, %v511
      %v622 = vmul.f32 %v590, %v513
      %v623 = vmul.f32 %v591, %v517
      %v624 = vmul.f32 %v592, %v519
      %v625 = vmul.f32 %v593, %v521
      %v626 = vmul.f32 %v594, %v523
      %v627 = vmul.f32 %v595, %v527
      %v628 = vmul.f32 %v596, %v529
      %v629 = vmul.f32 %v597, %v531
      %v630 = vmul.f32 %v598, %v533
      %v631 = vmul.f32 %v599, %v457
      %v632 = vmul.f32 %v600, %v459
      %v633 = vmul.f32 %v601, %v461
      %v634 = vmul.f32 %v602, %v463
      %v635 = vmul.f32 %v603, %v467
      %v636 = vmul.f32 %v604, %v469
      %v637 = vmul.f32 %v605, %v471
      %v638 = vmul.f32 %v606, %v473
      %v639 = vmul.f32 %v607, %v477
      %v640 = vmul.f32 %v608, %v479
      %v641 = vmul.f32 %v609, %v481
      %v642 = vmul.f32 %v610, %v483
      %v643 = vmul.f32 %v611, %v487
      %v644 = vmul.f32 %v612, %v489
      %v645 = vmul.f32 %v613, %v491
      %v646 = vmul.f32 %v614, %v493
      %v647 = vmul.f32 %v615, %v497
      %v648 = vmul.f32 %v616, %v499
      %v649 = vmul.f32 %v617, %v501
      %v650 = vmul.f32 %v618, %v503
      %v651 = vmul.f32 %v619, %v507
      %v652 = vmul.f32 %v620, %v509
      %v653 = vmul.f32 %v621, %v511
      %v654 = vmul.f32 %v622, %v513
      %v655 = vmul.f32 %v623, %v517
      %v656 = vmul.f32 %v624, %v519
      %v657 = vmul.f32 %v625, %v521
      %v658 = vmul.f32 %v626, %v523
      %v659 = vmul.f32 %v627, %v527
      %v660 = vmul.f32 %v628, %v529
      %v661 = vmul.f32 %v629, %v531
      %v662 = vmul.f32 %v630, %v533
      %v663 = vadd.f32 %v457, %v631
      %v664 = vadd.f32 %v459, %v632
      %v665 = vadd.f32 %v461, %v633
      %v666 = vadd.f32 %v463, %v634
      %v667 = vadd.f32 %v467, %v635
      %v668 = vadd.f32 %v469, %v636
      %v669 = vadd.f32 %v471, %v637
      %v670 = vadd.f32 %v473, %v638
      %v671 = vadd.f32 %v477, %v639
      %v672 = vadd.f32 %v479, %v640
      %v673 = vadd.f32 %v481, %v641
      %v674 = vadd.f32 %v483, %v642
      %v675 = vadd.f32 %v487, %v643
      %v676 = vadd.f32 %v489, %v644
      %v677 = vadd.f32 %v491, %v645
      %v678 = vadd.f32 %v493, %v646
      %v679 = vadd.f32 %v497, %v647
      %v680 = vadd.f32 %v499, %v648
      %v681 = vadd.f32 %v501, %v649
      %v682 = vadd.f32 %v503, %v650
      %v683 = vadd.f32 %v507, %v651
      %v684 = vadd.f32 %v509, %v652
      %v685 = vadd.f32 %v511, %v653
      %v686 = vadd.f32 %v513, %v654
      %v687 = vadd.f32 %v517, %v655
      %v688 = vadd.f32 %v519, %v656
      %v689 = vadd.f32 %v521, %v657
      %v690 = vadd.f32 %v523, %v658
      %v691 = vadd.f32 %v527, %v659
      %v692 = vadd.f32 %v529, %v660
      %v693 = vadd.f32 %v531, %v661
      %v694 = vadd.f32 %v533, %v662
      %v695 = vmul.f32 %v663, 0.7978846
      %v696 = vmul.f32 %v664, 0.7978846
      %v697 = vmul.f32 %v665, 0.7978846
      %v698 = vmul.f32 %v666, 0.7978846
      %v699 = vmul.f32 %v667, 0.7978846
      %v700 = vmul.f32 %v668, 0.7978846
      %v701 = vmul.f32 %v669, 0.7978846
      %v702 = vmul.f32 %v670, 0.7978846
      %v703 = vmul.f32 %v671, 0.7978846
      %v704 = vmul.f32 %v672, 0.7978846
      %v705 = vmul.f32 %v673, 0.7978846
      %v706 = vmul.f32 %v674, 0.7978846
      %v707 = vmul.f32 %v675, 0.7978846
      %v708 = vmul.f32 %v676, 0.7978846
      %v709 = vmul.f32 %v677, 0.7978846
      %v710 = vmul.f32 %v678, 0.7978846
      %v711 = vmul.f32 %v679, 0.7978846
      %v712 = vmul.f32 %v680, 0.7978846
      %v713 = vmul.f32 %v681, 0.7978846
      %v714 = vmul.f32 %v682, 0.7978846
      %v715 = vmul.f32 %v683, 0.7978846
      %v716 = vmul.f32 %v684, 0.7978846
      %v717 = vmul.f32 %v685, 0.7978846
      %v718 = vmul.f32 %v686, 0.7978846
      %v719 = vmul.f32 %v687, 0.7978846
      %v720 = vmul.f32 %v688, 0.7978846
      %v721 = vmul.f32 %v689, 0.7978846
      %v722 = vmul.f32 %v690, 0.7978846
      %v723 = vmul.f32 %v691, 0.7978846
      %v724 = vmul.f32 %v692, 0.7978846
      %v725 = vmul.f32 %v693, 0.7978846
      %v726 = vmul.f32 %v694, 0.7978846
      %v727 = vtanh.pop %v695
      %v728 = vtanh.pop %v696
      %v729 = vtanh.pop %v697
      %v730 = vtanh.pop %v698
      %v731 = vtanh.pop %v699
      %v732 = vtanh.pop %v700
      %v733 = vtanh.pop %v701
      %v734 = vtanh.pop %v702
      %v735 = vtanh.pop %v703
      %v736 = vtanh.pop %v704
      %v737 = vtanh.pop %v705
      %v738 = vtanh.pop %v706
      %v739 = vtanh.pop %v707
      %v740 = vtanh.pop %v708
      %v741 = vtanh.pop %v709
      %v742 = vtanh.pop %v710
      %v743 = vtanh.pop %v711
      %v744 = vtanh.pop %v712
      %v745 = vtanh.pop %v713
      %v746 = vtanh.pop %v714
      %v747 = vtanh.pop %v715
      %v748 = vtanh.pop %v716
      %v749 = vtanh.pop %v717
      %v750 = vtanh.pop %v718
      %v751 = vtanh.pop %v719
      %v752 = vtanh.pop %v720
      %v753 = vtanh.pop %v721
      %v754 = vtanh.pop %v722
      %v755 = vtanh.pop %v723
      %v756 = vtanh.pop %v724
      %v757 = vtanh.pop %v725
      %v758 = vtanh.pop %v726
      %v759 = vadd.f32 %v727, 1.0
      %v760 = vadd.f32 %v728, 1.0
      %v761 = vadd.f32 %v729, 1.0
      %v762 = vadd.f32 %v730, 1.0
      %v763 = vadd.f32 %v731, 1.0
      %v764 = vadd.f32 %v732, 1.0
      %v765 = vadd.f32 %v733, 1.0
      %v766 = vadd.f32 %v734, 1.0
      %v767 = vadd.f32 %v735, 1.0
      %v768 = vadd.f32 %v736, 1.0
      %v769 = vadd.f32 %v737, 1.0
      %v770 = vadd.f32 %v738, 1.0
      %v771 = vadd.f32 %v739, 1.0
      %v772 = vadd.f32 %v740, 1.0
      %v773 = vadd.f32 %v741, 1.0
      %v774 = vadd.f32 %v742, 1.0
      %v775 = vadd.f32 %v743, 1.0
      %v776 = vadd.f32 %v744, 1.0
      %v777 = vadd.f32 %v745, 1.0
      %v778 = vadd.f32 %v746, 1.0
      %v779 = vadd.f32 %v747, 1.0
      %v780 = vadd.f32 %v748, 1.0
      %v781 = vadd.f32 %v749, 1.0
      %v782 = vadd.f32 %v750, 1.0
      %v783 = vadd.f32 %v751, 1.0
      %v784 = vadd.f32 %v752, 1.0
      %v785 = vadd.f32 %v753, 1.0
      %v786 = vadd.f32 %v754, 1.0
      %v787 = vadd.f32 %v755, 1.0
      %v788 = vadd.f32 %v756, 1.0
      %v789 = vadd.f32 %v757, 1.0
      %v790 = vadd.f32 %v758, 1.0
      %v791 = vmul.f32 %v535, %v759
      %v792 = vmul.f32 %v536, %v760
      %v793 = vmul.f32 %v537, %v761
      %v794 = vmul.f32 %v538, %v762
      %v795 = vmul.f32 %v539, %v763
      %v796 = vmul.f32 %v540, %v764
      %v797 = vmul.f32 %v541, %v765
      %v798 = vmul.f32 %v542, %v766
      %v799 = vmul.f32 %v543, %v767
      %v800 = vmul.f32 %v544, %v768
      %v801 = vmul.f32 %v545, %v769
      %v802 = vmul.f32 %v546, %v770
      %v803 = vmul.f32 %v547, %v771
      %v804 = vmul.f32 %v548, %v772
      %v805 = vmul.f32 %v549, %v773
      %v806 = vmul.f32 %v550, %v774
      %v807 = vmul.f32 %v551, %v775
      %v808 = vmul.f32 %v552, %v776
      %v809 = vmul.f32 %v553, %v777
      %v810 = vmul.f32 %v554, %v778
      %v811 = vmul.f32 %v555, %v779
      %v812 = vmul.f32 %v556, %v780
      %v813 = vmul.f32 %v557, %v781
      %v814 = vmul.f32 %v558, %v782
      %v815 = vmul.f32 %v559, %v783
      %v816 = vmul.f32 %v560, %v784
      %v817 = vmul.f32 %v561, %v785
      %v818 = vmul.f32 %v562, %v786
      %v819 = vmul.f32 %v563, %v787
      %v820 = vmul.f32 %v564, %v788
      %v821 = vmul.f32 %v565, %v789
      %v822 = vmul.f32 %v566, %v790
      %v823 = vld [vmem:[%s3] sm:$0xff]
      %v824 = vld [vmem:[%s3 + $0x8] sm:$0xff]
      %v825 = vld [vmem:[%s3 + $0x10] sm:$0xff]
      %v826 = vld [vmem:[%s3 + $0x18] sm:$0xff]
      %v827 = vld [vmem:[%s3 + $0x20] sm:$0xff]
      %v828 = vld [vmem:[%s3 + $0x28] sm:$0xff]
      %v829 = vld [vmem:[%s3 + $0x30] sm:$0xff]
      %v830 = vld [vmem:[%s3 + $0x38] sm:$0xff]
      %v831 = vld [vmem:[%s3 + $0x40] sm:$0xff]
      %v832 = vld [vmem:[%s3 + $0x48] sm:$0xff]
      %v833 = vld [vmem:[%s3 + $0x50] sm:$0xff]
      %v834 = vld [vmem:[%s3 + $0x58] sm:$0xff]
      %v835 = vld [vmem:[%s3 + $0x60] sm:$0xff]
      %v836 = vld [vmem:[%s3 + $0x68] sm:$0xff]
      %v837 = vld [vmem:[%s3 + $0x70] sm:$0xff]
      %v838 = vld [vmem:[%s3 + $0x78] sm:$0xff]
      %840 = vset.pattern.permute.xlu0 0
      %841 = vperm.xlu0 %840, %v823
      %v842 = vpop.permute.xlu0 %841
      %845 = vset.pattern.permute.xlu0 0
      %846 = vperm.xlu0 %845, %v824
      %v847 = vpop.permute.xlu0 %846
      %850 = vset.pattern.permute.xlu0 0
      %851 = vperm.xlu0 %850, %v825
      %v852 = vpop.permute.xlu0 %851
      %855 = vset.pattern.permute.xlu0 0
      %856 = vperm.xlu0 %855, %v826
      %v857 = vpop.permute.xlu0 %856
      %860 = vset.pattern.permute.xlu0 0
      %861 = vperm.xlu0 %860, %v827
      %v862 = vpop.permute.xlu0 %861
      %865 = vset.pattern.permute.xlu0 0
      %866 = vperm.xlu0 %865, %v828
      %v867 = vpop.permute.xlu0 %866
      %870 = vset.pattern.permute.xlu0 0
      %871 = vperm.xlu0 %870, %v829
      %v872 = vpop.permute.xlu0 %871
      %875 = vset.pattern.permute.xlu0 0
      %876 = vperm.xlu0 %875, %v830
      %v877 = vpop.permute.xlu0 %876
      %880 = vset.pattern.permute.xlu0 0
      %881 = vperm.xlu0 %880, %v831
      %v882 = vpop.permute.xlu0 %881
      %885 = vset.pattern.permute.xlu0 0
      %886 = vperm.xlu0 %885, %v832
      %v887 = vpop.permute.xlu0 %886
      %890 = vset.pattern.permute.xlu0 0
      %891 = vperm.xlu0 %890, %v833
      %v892 = vpop.permute.xlu0 %891
      %895 = vset.pattern.permute.xlu0 0
      %896 = vperm.xlu0 %895, %v834
      %v897 = vpop.permute.xlu0 %896
      %900 = vset.pattern.permute.xlu0 0
      %901 = vperm.xlu0 %900, %v835
      %v902 = vpop.permute.xlu0 %901
      %905 = vset.pattern.permute.xlu0 0
      %906 = vperm.xlu0 %905, %v836
      %v907 = vpop.permute.xlu0 %906
      %910 = vset.pattern.permute.xlu0 0
      %911 = vperm.xlu0 %910, %v837
      %v912 = vpop.permute.xlu0 %911
      %915 = vset.pattern.permute.xlu0 0
      %916 = vperm.xlu0 %915, %v838
      %v917 = vpop.permute.xlu0 %916
      %v919 = vmul.f32 %v791, %v842
      %v920 = vmul.f32 %v792, %v842
      %v921 = vmul.f32 %v793, %v847
      %v922 = vmul.f32 %v794, %v847
      %v923 = vmul.f32 %v795, %v852
      %v924 = vmul.f32 %v796, %v852
      %v925 = vmul.f32 %v797, %v857
      %v926 = vmul.f32 %v798, %v857
      %v927 = vmul.f32 %v799, %v862
      %v928 = vmul.f32 %v800, %v862
      %v929 = vmul.f32 %v801, %v867
      %v930 = vmul.f32 %v802, %v867
      %v931 = vmul.f32 %v803, %v872
      %v932 = vmul.f32 %v804, %v872
      %v933 = vmul.f32 %v805, %v877
      %v934 = vmul.f32 %v806, %v877
      %v935 = vmul.f32 %v807, %v882
      %v936 = vmul.f32 %v808, %v882
      %v937 = vmul.f32 %v809, %v887
      %v938 = vmul.f32 %v810, %v887
      %v939 = vmul.f32 %v811, %v892
      %v940 = vmul.f32 %v812, %v892
      %v941 = vmul.f32 %v813, %v897
      %v942 = vmul.f32 %v814, %v897
      %v943 = vmul.f32 %v815, %v902
      %v944 = vmul.f32 %v816, %v902
      %v945 = vmul.f32 %v817, %v907
      %v946 = vmul.f32 %v818, %v907
      %v947 = vmul.f32 %v819, %v912
      %v948 = vmul.f32 %v820, %v912
      %v949 = vmul.f32 %v821, %v917
      %v950 = vmul.f32 %v822, %v917
      %v951 = vadd.f32 %v919, %v921
      %v952 = vadd.f32 %v951, %v923
      %v953 = vadd.f32 %v952, %v925
      %v954 = vadd.f32 %v953, %v927
      %v955 = vadd.f32 %v954, %v929
      %v956 = vadd.f32 %v955, %v931
      %v957 = vadd.f32 %v956, %v933
      %v958 = vadd.f32 %v957, %v935
      %v959 = vadd.f32 %v958, %v937
      %v960 = vadd.f32 %v959, %v939
      %v961 = vadd.f32 %v960, %v941
      %v962 = vadd.f32 %v961, %v943
      %v963 = vadd.f32 %v962, %v945
      %v964 = vadd.f32 %v963, %v947
      %v965 = vadd.f32 %v964, %v949
      %v966 = vrot.slane %v965, 4
      %v967 = vadd.f32 %v965, %v966
      %v968 = vrot.slane %v967, 2
      %v969 = vadd.f32 %v967, %v968
      %v970 = vrot.slane %v969, 1
      %v971 = vadd.f32 %v969, %v970
      %v972 = vadd.f32 %v920, %v922
      %v973 = vadd.f32 %v972, %v924
      %v974 = vadd.f32 %v973, %v926
      %v975 = vadd.f32 %v974, %v928
      %v976 = vadd.f32 %v975, %v930
      %v977 = vadd.f32 %v976, %v932
      %v978 = vadd.f32 %v977, %v934
      %v979 = vadd.f32 %v978, %v936
      %v980 = vadd.f32 %v979, %v938
      %v981 = vadd.f32 %v980, %v940
      %v982 = vadd.f32 %v981, %v942
      %v983 = vadd.f32 %v982, %v944
      %v984 = vadd.f32 %v983, %v946
      %v985 = vadd.f32 %v984, %v948
      %v986 = vadd.f32 %v985, %v950
      %v987 = vrot.slane %v986, 4
      %v988 = vadd.f32 %v986, %v987
      %v989 = vrot.slane %v988, 2
      %v990 = vadd.f32 %v988, %v989
      %v991 = vrot.slane %v990, 1
      %v992 = vadd.f32 %v990, %v991
      %v993 = vld [vmem:[#allocation2] sm:$0x1]
      %995 = vset.pattern.permute.xlu0 0
      %996 = vperm.xlu0 %995, %v993
      %v997 = vpop.permute.xlu0 %996
      %v999 = vlaneseq
      %v1000 = vshrl.u32 %v999, 7
      %v1001 = vsub.s32 0, %v1000
      %v1002 = vrot.slane %v997, %v1001
      %v1003 = vadd.f32 %v971, %v1002
      %v1004 = vadd.f32 %v992, %v1002
      %v1007 = vcombine.low %v1003, %v1004
      %v1009 = vunpack.c.l.s4 1966171168
      %v1010 = vunpack.c.0.s8 %v1009
      %v1011 = vlaneseq
      %v1012 = vshrl.u32 %v1011, 7
      %v1013 = vsub.s32 %v1010, %v1012
      %v1014 = vrot.slane %v1007, %v1013
      %v1016 = vunpack.c.l.s4 1966171168
      %v1017 = vunpack.c.0.s8 %v1016
      %v1018 = vlaneseq
      %v1019 = vshrl.u32 %v1018, 7
      %v1020 = vsub.s32 %v1017, %v1019
      %v1021 = vrot.slane %v1014, %v1020
      %v1023 = vlaneseq
      %vm1024 = vcmp.ge.s32.totalorder %v1023, 0
      %vm1025 = vcmp.lt.s32.totalorder %v1023, 256
      %vm1026 = vmand %vm1024, %vm1025
      %1027 = vst.msk [vmem:[%s262] sm:$0x3] %vm1026, %v1021
      %s1028 = smul.u32 2, %s22
      %p1029 = scmp.lt.s32.totalorder %s23, 1
      %s1030 = scalar_select %p1029, %s23, 1
      %p1031 = scmp.lt.s32.totalorder %s1028, 1
      %s1032 = scalar_select %p1031, %s1028, 1
      %s1033 = smul.addr %s1030, 2
      %s1034 = sadd.s32 %s1032, %s1033
      %s1035 = scalar_lea.vmem %s5, %s1034
      // Predicated region
      $region41: #{wno2d_forward.19} parent=39 // pred_check
        %p1036 = pneg %p162
      $region42: #{wno2d_forward.19} parent=39 // pred_check_branch
        %1038 = sbr.rel (%p1036) target = $region44
      $region43: #{wno2d_forward.19} parent=39 // pred_region
        %s1039 = smul.u32 2, %s22
      $region44: #{wno2d_forward.19} parent=39 // pred_fallthru
        _
    $region40: #{wno2d_forward.19} parent=5 // pred_fallthru
      _
    %p1040 = scmp.le.s32.totalorder 2, %s13
    // Predicated region
    $region45: #{wno2d_forward.19} parent=5 // pred_check
      %p1041 = pneg %p1040
    $region46: #{wno2d_forward.19} parent=5 // pred_check_branch
      %1043 = sbr.rel (%p1041) target = $region48
    $region47: #{wno2d_forward.19} parent=5 // pred_region
      %s1044 = ssub.s32 %s13, 2
      // Predicated region
      $region49: #{wno2d_forward.19} parent=47 // pred_check
        %p1045 = pneg %p168
      $region50: #{wno2d_forward.19} parent=47 // pred_check_branch
        %1047 = sbr.rel (%p1045) target = $region52
      $region51: #{wno2d_forward.19} parent=47 // pred_region
        %s1048 = smul.u32 2, %s24
        %p1049 = scmp.lt.s32.totalorder %s25, 1
        %s1050 = scalar_select %p1049, %s25, 1
        %p1051 = scmp.lt.s32.totalorder %s1048, 1
        %s1052 = scalar_select %p1051, %s1048, 1
        %s1053 = smul.addr %s1050, 2
        %s1054 = sadd.s32 %s1052, %s1053
        %s1055 = scalar_lea.vmem %s5, %s1054
      $region52: #{wno2d_forward.19} parent=47 // pred_fallthru
        _
    $region48: #{wno2d_forward.19} parent=5 // pred_fallthru
      _
  $region6: #{wno2d_forward.19} parent=0 // loop_footer
    %s17 = sadd.s32 1, %s13
  $region7: #{wno2d_forward.19} parent=0 // loop_footer_branch
    %12 = sbr.rel target = $region3
  $region8: #{wno2d_forward.19} parent=0 // loop_exit
    _

</llo_original>
